<compile_context>
chip_gen: v6e
topology: v6e:2x2x1
jax: 0.10.0
libtpu: 0.0.40
codegen_flags: <defaults>
</compile_context>

<pallas_src>
import jax
import jax.numpy as jnp
import numpy as np
from jax.experimental import pallas as pl
from jax.experimental.pallas import tpu as pltpu


def _banded_weight(w_hwio, Wo):
    """Conv weight (KH, KW, Ci, Co) -> banded matmul weight (KH, Wp*Ci, Wo*Co).

    T[kh, wi*Ci + ci, wo*Co + co] = w[kh, wi - wo, ci, co]  if 0 <= wi - wo < KW
    so that  out[h, wo*Co + co] = sum_kh  slab_kh[h, :] @ T[kh]
    reproduces a stride-1 "valid" conv over a width-padded, lane-merged input.
    """
    KH, KW, Ci, Co = w_hwio.shape
    Wp = Wo + KW - 1
    cols = []
    for wo in range(Wo):
        blk = jnp.zeros((KH, Wp, Ci, Co), w_hwio.dtype)
        blk = blk.at[:, wo:wo + KW].set(w_hwio)
        cols.append(blk.reshape(KH, Wp * Ci, Co))
    return jnp.concatenate(cols, axis=-1).astype(jnp.bfloat16)


def down_forward(x_nchw, params):
    """NCHW in, NCHW out; the whole `Down` block runs in one fused Pallas kernel."""
    x = jnp.transpose(x_nchw, (0, 2, 3, 1))                       # NHWC
    N, H, W, Cin = x.shape
    (w0, b0), (w1, b1), (w2, b2), (w3, b3), (w4, b4) = params
    C1 = w1.shape[-1]                                             # out_channels
    Ho, Wo = H // 2, W // 2
    Hs, Ws = Ho + 1, Wo + 1
    C4 = 4 * Cin

    # --- one-time layout prep of the only streamed input (bf16, lane-merged) ---
    # pad=1 + space-to-depth(2): the stride-2 k=4 conv becomes a 2x2 "valid" conv.
    xp = jnp.pad(x.astype(jnp.bfloat16), ((0, 0), (1, 1), (1, 1), (0, 0)))
    x_s2d = (xp.reshape(N, Hs, 2, Ws, 2, Cin)
               .transpose(0, 1, 3, 2, 4, 5)                       # (n, a, b, p, q, ci)
               .reshape(N, Hs, Ws * C4))                          # lanes = (b, p, q, ci)

    # --- weights -> banded (Toeplitz) matmul form, bf16; biases tiled over w ---
    # stride-2 weight re-expressed for the space-to-depth input:
    #   w0_eff[kh, kw, (p, q, ci), co] = w0[2*kh + p, 2*kw + q, ci, co]
    w0_eff = (w0.reshape(2, 2, 2, 2, Cin, Cin).transpose(0, 2, 1, 3, 4, 5)
                .reshape(2, 2, C4, Cin))
    t0 = _banded_weight(w0_eff, Wo)            # (2, Ws*C4,       Wo*Cin)
    t1 = _banded_weight(w1, Wo)                # (3, (Wo+2)*Cin,  Wo*C1)
    t2 = _banded_weight(w2, Wo)                # (3, (Wo+2)*C1,   Wo*2C1)
    t3 = _banded_weight(w3, Wo)                # (3, (Wo+2)*2C1,  Wo*4C1)
    t4 = _banded_weight(w4, Wo)                # (3, (Wo+2)*4C1,  Wo*Cin)
    b0t, b1t, b2t, b3t, b4t = (jnp.tile(b, Wo).reshape(1, -1).astype(jnp.float32)
                               for b in (b0, b1, b2, b3, b4))

    operands = (x_s2d, t0, b0t, t1, b1t, t2, b2t, t3, b3t, t4, b4t)

    def kernel(x_ref, t0r, b0r, t1r, b1r, t2r, b2r, t3r, b3r, t4r, b4r,
               o_ref, pad1, pad2, pad3, pad4):
        def conv_banded(load_slab, t_ref, b_ref):
            # sum_kh slab_kh(Ho, Wp*Ci) @ T_kh(Wp*Ci, Wo*Co); f32 acc; bias+ReLU.
            acc = jnp.dot(load_slab(0), t_ref[0],
                          preferred_element_type=jnp.float32)
            for kh in range(1, t_ref.shape[0]):
                acc += jnp.dot(load_slab(kh), t_ref[kh],
                               preferred_element_type=jnp.float32)
            return jnp.maximum(acc + b_ref[...], 0.0)             # (Ho, Wo*Co) f32

        def store_interior(act_f32, pad_ref, c):
            # Output lanes are already (w, c)-merged -> direct interior store.
            pad_ref[1:Ho + 1, c:(Wo + 1) * c] = act_f32.astype(jnp.bfloat16)

        # Zero pad scratch once; only the 1-px halo ever stays zero (interiors
        # are fully overwritten for every image / layer below).
        for p in (pad1, pad2, pad3, pad4):
            p[...] = jnp.zeros(p.shape, p.dtype)

        for n in range(N):                      # static unroll; batch is tiny
            # layer 0: Conv2d(Cin,Cin,k=4,s=2,p=1) as 2 banded matmuls over s2d rows
            a = conv_banded(lambda kh: x_ref[n, kh:kh + Ho, :], t0r, b0r)
            store_interior(a, pad1, Cin)
            # DoubleConv: four 3x3 pad-1 convs, all VMEM-resident.
            a = conv_banded(lambda kh: pad1[kh:kh + Ho, :], t1r, b1r)
            store_interior(a, pad2, C1)
            a = conv_banded(lambda kh: pad2[kh:kh + Ho, :], t2r, b2r)
            store_interior(a, pad3, 2 * C1)
            a = conv_banded(lambda kh: pad3[kh:kh + Ho, :], t3r, b3r)
            store_interior(a, pad4, 4 * C1)
            a = conv_banded(lambda kh: pad4[kh:kh + Ho, :], t4r, b4r)
            o_ref[n, :, :] = a                                    # (Ho, Wo*Cin) f32

    def full_spec(arr):
        nd = arr.ndim
        return pl.BlockSpec(arr.shape, lambda i, _nd=nd: (0,) * _nd)

    flops = 2 * N * Ho * Wo * (16 * Cin * Cin + 9 * Cin * C1 + 18 * C1 * C1
                               + 72 * C1 * C1 + 36 * C1 * Cin)
    bytes_accessed = int(sum(a.size * a.dtype.itemsize for a in operands)
                         + N * Ho * Wo * Cin * 4)

    out = pl.pallas_call(
        kernel,
        out_shape=jax.ShapeDtypeStruct((N, Ho, Wo * Cin), jnp.float32),
        grid_spec=pltpu.PrefetchScalarGridSpec(
            num_scalar_prefetch=0,
            grid=(1,),
            in_specs=[full_spec(a) for a in operands],
            out_specs=pl.BlockSpec((N, Ho, Wo * Cin), lambda i: (0, 0, 0)),
            scratch_shapes=[
                pltpu.VMEM((Ho + 2, (Wo + 2) * c), jnp.bfloat16)
                for c in (Cin, C1, 2 * C1, 4 * C1)
            ],
        ),
        compiler_params=pltpu.CompilerParams(
            dimension_semantics=("arbitrary",)),
        cost_estimate=pl.CostEstimate(flops=flops, transcendentals=0,
                                      bytes_accessed=bytes_accessed),
    )(*operands)

    y = out.reshape(N, Ho, Wo, Cin)
    return jnp.transpose(y, (0, 3, 1, 2))                         # NCHW


def init_down_params(key, in_channels, out_channels):
    """Deterministic init mirroring the Conv2d shapes of `Down.__init__` (HWIO)."""
    specs = [
        (4, in_channels, in_channels),              # down: Conv2d(Cin, Cin, 4, 2, 1)
        (3, in_channels, out_channels),             # DoubleConv conv1
        (3, out_channels, out_channels * 2),        # DoubleConv conv2
        (3, out_channels * 2, out_channels * 4),    # DoubleConv conv3
        (3, out_channels * 4, in_channels),         # DoubleConv conv4
    ]
    params = []
    for i, (k, cin, cout) in enumerate(specs):
        wk, bk = jax.random.split(jax.random.fold_in(key, i))
        bound = 1.0 / np.sqrt(cin * k * k)
        w = jax.random.uniform(wk, (k, k, cin, cout), jnp.float32, -bound, bound)
        b = jax.random.uniform(bk, (cout,), jnp.float32, -bound, bound)
        params.append((w, b))
    return params


def down_reference(x_nchw, params):
    """lax.conv reference at matching precision (bf16 operands, f32 accumulation)."""
    x = jnp.transpose(x_nchw, (0, 2, 3, 1)).astype(jnp.float32)

    def conv(x, w, b, stride, pad):
        y = jax.lax.conv_general_dilated(
            x.astype(jnp.bfloat16), w.astype(jnp.bfloat16),
            (stride, stride), ((pad, pad), (pad, pad)),
            dimension_numbers=("NHWC", "HWIO", "NHWC"),
            preferred_element_type=jnp.float32)
        return jax.nn.relu(y + b)

    (w0, b0), *rest = params
    y = conv(x, w0, b0, 2, 1)
    for (w, b) in rest:
        y = conv(y, w, b, 1, 1)
    return jnp.transpose(y, (0, 3, 1, 2))


if __name__ == "__main__":
    key = jax.random.PRNGKey(0)
    xk, pk = jax.random.split(key)
    in_channels, out_channels = 4, 8
    # PyTorch conv inputs are NCHW.
    x = jax.random.normal(xk, (2, in_channels, 16, 16), jnp.float32)
    params = init_down_params(pk, in_channels, out_channels)

    out = jax.block_until_ready(down_forward(x, params))
    ref = jax.block_until_ready(down_reference(x, params))

    assert out.shape == (2, in_channels, 8, 8), out.shape
    err = float(np.max(np.abs(np.asarray(out) - np.asarray(ref))))
    assert np.allclose(np.asarray(out), np.asarray(ref), atol=2e-2, rtol=2e-2), err
    print("KERNEL_OK")
</pallas_src>

<mosaic_0001>
module attributes {stable_mosaic.version = 11 : i64} {
  func.func @kernel(%arg0: i32, %arg1: memref<2x9x144xbf16, #tpu.memory_space<vmem>>, %arg2: memref<2x144x32xbf16, #tpu.memory_space<vmem>>, %arg3: memref<1x32xf32, #tpu.memory_space<vmem>>, %arg4: memref<3x40x64xbf16, #tpu.memory_space<vmem>>, %arg5: memref<1x64xf32, #tpu.memory_space<vmem>>, %arg6: memref<3x80x128xbf16, #tpu.memory_space<vmem>>, %arg7: memref<1x128xf32, #tpu.memory_space<vmem>>, %arg8: memref<3x160x256xbf16, #tpu.memory_space<vmem>>, %arg9: memref<1x256xf32, #tpu.memory_space<vmem>>, %arg10: memref<3x320x32xbf16, #tpu.memory_space<vmem>>, %arg11: memref<1x32xf32, #tpu.memory_space<vmem>>, %arg12: memref<2x8x32xf32, #tpu.memory_space<vmem>>, %arg13: memref<10x40xbf16, #tpu.memory_space<vmem>>, %arg14: memref<10x80xbf16, #tpu.memory_space<vmem>>, %arg15: memref<10x160xbf16, #tpu.memory_space<vmem>>, %arg16: memref<10x320xbf16, #tpu.memory_space<vmem>>) attributes {dimension_semantics = [#tpu.dimension_semantics<arbitrary>], iteration_bounds = array<i64: 1>, scalar_prefetch = 0 : i64, scratch_operands = 4 : i64, tpu.core_type = #tpu.core_type<tc>, window_params = [{pipeline_mode = #tpu.pipeline_mode<synchronous>, transform_indices = @transform_0, window_bounds = array<i64: 2, 9, 144>}, {pipeline_mode = #tpu.pipeline_mode<synchronous>, transform_indices = @transform_1, window_bounds = array<i64: 2, 144, 32>}, {pipeline_mode = #tpu.pipeline_mode<synchronous>, transform_indices = @transform_2, window_bounds = array<i64: 1, 32>}, {pipeline_mode = #tpu.pipeline_mode<synchronous>, transform_indices = @transform_3, window_bounds = array<i64: 3, 40, 64>}, {pipeline_mode = #tpu.pipeline_mode<synchronous>, transform_indices = @transform_4, window_bounds = array<i64: 1, 64>}, {pipeline_mode = #tpu.pipeline_mode<synchronous>, transform_indices = @transform_5, window_bounds = array<i64: 3, 80, 128>}, {pipeline_mode = #tpu.pipeline_mode<synchronous>, transform_indices = @transform_6, window_bounds = array<i64: 1, 128>}, {pipeline_mode = #tpu.pipeline_mode<synchronous>, transform_indices = @transform_7, window_bounds = array<i64: 3, 160, 256>}, {pipeline_mode = #tpu.pipeline_mode<synchronous>, transform_indices = @transform_8, window_bounds = array<i64: 1, 256>}, {pipeline_mode = #tpu.pipeline_mode<synchronous>, transform_indices = @transform_9, window_bounds = array<i64: 3, 320, 32>}, {pipeline_mode = #tpu.pipeline_mode<synchronous>, transform_indices = @transform_10, window_bounds = array<i64: 1, 32>}, {pipeline_mode = #tpu.pipeline_mode<synchronous>, transform_indices = @transform_11, window_bounds = array<i64: 2, 8, 32>}]} {
    %cst = arith.constant 0.000000e+00 : bf16
    %0 = vector.broadcast %cst : bf16 to vector<10x40xbf16>
    %c0 = arith.constant 0 : index
    %c0_0 = arith.constant 0 : index
    %1 = vector.load %arg13[%c0, %c0_0] : memref<10x40xbf16, #tpu.memory_space<vmem>>, vector<10x40xbf16>
    tpu.vector_store %arg13[%c0, %c0_0], %0 {strides = array<i32>} : memref<10x40xbf16, #tpu.memory_space<vmem>>, vector<10x40xbf16>,
    %cst_1 = arith.constant 0.000000e+00 : bf16
    %2 = vector.broadcast %cst_1 : bf16 to vector<10x80xbf16>
    %c0_2 = arith.constant 0 : index
    %c0_3 = arith.constant 0 : index
    %3 = vector.load %arg14[%c0_2, %c0_3] : memref<10x80xbf16, #tpu.memory_space<vmem>>, vector<10x80xbf16>
    tpu.vector_store %arg14[%c0_2, %c0_3], %2 {strides = array<i32>} : memref<10x80xbf16, #tpu.memory_space<vmem>>, vector<10x80xbf16>,
    %cst_4 = arith.constant 0.000000e+00 : bf16
    %4 = vector.broadcast %cst_4 : bf16 to vector<10x160xbf16>
    %c0_5 = arith.constant 0 : index
    %c0_6 = arith.constant 0 : index
    %5 = vector.load %arg15[%c0_5, %c0_6] : memref<10x160xbf16, #tpu.memory_space<vmem>>, vector<10x160xbf16>
    tpu.vector_store %arg15[%c0_5, %c0_6], %4 {strides = array<i32>} : memref<10x160xbf16, #tpu.memory_space<vmem>>, vector<10x160xbf16>,
    %cst_7 = arith.constant 0.000000e+00 : bf16
    %6 = vector.broadcast %cst_7 : bf16 to vector<10x320xbf16>
    %c0_8 = arith.constant 0 : index
    %c0_9 = arith.constant 0 : index
    %7 = vector.load %arg16[%c0_8, %c0_9] : memref<10x320xbf16, #tpu.memory_space<vmem>>, vector<10x320xbf16>
    tpu.vector_store %arg16[%c0_8, %c0_9], %6 {strides = array<i32>} : memref<10x320xbf16, #tpu.memory_space<vmem>>, vector<10x320xbf16>,
    %c0_10 = arith.constant 0 : index
    %c0_11 = arith.constant 0 : index
    %c0_12 = arith.constant 0 : index
    %8 = vector.load %arg1[%c0_10, %c0_11, %c0_12] : memref<2x9x144xbf16, #tpu.memory_space<vmem>>, vector<1x8x144xbf16>
    %9 = vector.shape_cast %8 : vector<1x8x144xbf16> to vector<8x144xbf16>
    %c0_13 = arith.constant 0 : index
    %c0_14 = arith.constant 0 : index
    %c0_15 = arith.constant 0 : index
    %10 = vector.load %arg2[%c0_13, %c0_14, %c0_15] : memref<2x144x32xbf16, #tpu.memory_space<vmem>>, vector<1x144x32xbf16>
    %11 = vector.shape_cast %10 : vector<1x144x32xbf16> to vector<144x32xbf16>
    %cst_16 = arith.constant dense<0.000000e+00> : vector<8x32xf32>
    %12 = tpu.matmul %9, %11, %cst_16 {dimension_numbers = #tpu.dot_dimension_numbers<[1], [0], [0], [1], [0, 0, 1, 1], [], []>} : vector<8x144xbf16>, vector<144x32xbf16>, vector<8x32xf32> -> vector<8x32xf32>
    %c0_17 = arith.constant 0 : index
    %c1 = arith.constant 1 : index
    %c0_18 = arith.constant 0 : index
    %13 = vector.load %arg1[%c0_17, %c1, %c0_18] : memref<2x9x144xbf16, #tpu.memory_space<vmem>>, vector<1x8x144xbf16>
    %14 = vector.shape_cast %13 : vector<1x8x144xbf16> to vector<8x144xbf16>
    %c1_19 = arith.constant 1 : index
    %c0_20 = arith.constant 0 : index
    %c0_21 = arith.constant 0 : index
    %15 = vector.load %arg2[%c1_19, %c0_20, %c0_21] : memref<2x144x32xbf16, #tpu.memory_space<vmem>>, vector<1x144x32xbf16>
    %16 = vector.shape_cast %15 : vector<1x144x32xbf16> to vector<144x32xbf16>
    %cst_22 = arith.constant dense<0.000000e+00> : vector<8x32xf32>
    %17 = tpu.matmul %14, %16, %cst_22 {dimension_numbers = #tpu.dot_dimension_numbers<[1], [0], [0], [1], [0, 0, 1, 1], [], []>} : vector<8x144xbf16>, vector<144x32xbf16>, vector<8x32xf32> -> vector<8x32xf32>
    %18 = arith.addf %12, %17 : vector<8x32xf32>
    %c0_23 = arith.constant 0 : index
    %c0_24 = arith.constant 0 : index
    %19 = vector.load %arg3[%c0_23, %c0_24] : memref<1x32xf32, #tpu.memory_space<vmem>>, vector<1x32xf32>
    %20 = vector.broadcast %19 : vector<1x32xf32> to vector<8x32xf32>
    %21 = arith.addf %18, %20 : vector<8x32xf32>
    %cst_25 = arith.constant 0.000000e+00 : f32
    %22 = vector.broadcast %cst_25 : f32 to vector<8x32xf32>
    %23 = arith.maximumf %21, %22 : vector<8x32xf32>
    %24 = arith.truncf %23 : vector<8x32xf32> to vector<8x32xbf16>
    %c1_26 = arith.constant 1 : index
    %c4 = arith.constant 4 : index
    %25 = vector.load %arg13[%c1_26, %c4] : memref<10x40xbf16, #tpu.memory_space<vmem>>, vector<8x32xbf16>
    tpu.vector_store %arg13[%c1_26, %c4], %24 {strides = array<i32>} : memref<10x40xbf16, #tpu.memory_space<vmem>>, vector<8x32xbf16>,
    %c0_27 = arith.constant 0 : index
    %c0_28 = arith.constant 0 : index
    %26 = vector.load %arg13[%c0_27, %c0_28] : memref<10x40xbf16, #tpu.memory_space<vmem>>, vector<8x40xbf16>
    %c0_29 = arith.constant 0 : index
    %c0_30 = arith.constant 0 : index
    %c0_31 = arith.constant 0 : index
    %27 = vector.load %arg4[%c0_29, %c0_30, %c0_31] : memref<3x40x64xbf16, #tpu.memory_space<vmem>>, vector<1x40x64xbf16>
    %28 = vector.shape_cast %27 : vector<1x40x64xbf16> to vector<40x64xbf16>
    %cst_32 = arith.constant dense<0.000000e+00> : vector<8x64xf32>
    %29 = tpu.matmul %26, %28, %cst_32 {dimension_numbers = #tpu.dot_dimension_numbers<[1], [0], [0], [1], [0, 0, 1, 1], [], []>} : vector<8x40xbf16>, vector<40x64xbf16>, vector<8x64xf32> -> vector<8x64xf32>
    %c1_33 = arith.constant 1 : index
    %c0_34 = arith.constant 0 : index
    %30 = vector.load %arg13[%c1_33, %c0_34] : memref<10x40xbf16, #tpu.memory_space<vmem>>, vector<8x40xbf16>
    %c1_35 = arith.constant 1 : index
    %c0_36 = arith.constant 0 : index
    %c0_37 = arith.constant 0 : index
    %31 = vector.load %arg4[%c1_35, %c0_36, %c0_37] : memref<3x40x64xbf16, #tpu.memory_space<vmem>>, vector<1x40x64xbf16>
    %32 = vector.shape_cast %31 : vector<1x40x64xbf16> to vector<40x64xbf16>
    %cst_38 = arith.constant dense<0.000000e+00> : vector<8x64xf32>
    %33 = tpu.matmul %30, %32, %cst_38 {dimension_numbers = #tpu.dot_dimension_numbers<[1], [0], [0], [1], [0, 0, 1, 1], [], []>} : vector<8x40xbf16>, vector<40x64xbf16>, vector<8x64xf32> -> vector<8x64xf32>
    %34 = arith.addf %29, %33 : vector<8x64xf32>
    %c2 = arith.constant 2 : index
    %c0_39 = arith.constant 0 : index
    %35 = vector.load %arg13[%c2, %c0_39] : memref<10x40xbf16, #tpu.memory_space<vmem>>, vector<8x40xbf16>
    %c2_40 = arith.constant 2 : index
    %c0_41 = arith.constant 0 : index
    %c0_42 = arith.constant 0 : index
    %36 = vector.load %arg4[%c2_40, %c0_41, %c0_42] : memref<3x40x64xbf16, #tpu.memory_space<vmem>>, vector<1x40x64xbf16>
    %37 = vector.shape_cast %36 : vector<1x40x64xbf16> to vector<40x64xbf16>
    %cst_43 = arith.constant dense<0.000000e+00> : vector<8x64xf32>
    %38 = tpu.matmul %35, %37, %cst_43 {dimension_numbers = #tpu.dot_dimension_numbers<[1], [0], [0], [1], [0, 0, 1, 1], [], []>} : vector<8x40xbf16>, vector<40x64xbf16>, vector<8x64xf32> -> vector<8x64xf32>
    %39 = arith.addf %34, %38 : vector<8x64xf32>
    %c0_44 = arith.constant 0 : index
    %c0_45 = arith.constant 0 : index
    %40 = vector.load %arg5[%c0_44, %c0_45] : memref<1x64xf32, #tpu.memory_space<vmem>>, vector<1x64xf32>
    %41 = vector.broadcast %40 : vector<1x64xf32> to vector<8x64xf32>
    %42 = arith.addf %39, %41 : vector<8x64xf32>
    %cst_46 = arith.constant 0.000000e+00 : f32
    %43 = vector.broadcast %cst_46 : f32 to vector<8x64xf32>
    %44 = arith.maximumf %42, %43 : vector<8x64xf32>
    %45 = arith.truncf %44 : vector<8x64xf32> to vector<8x64xbf16>
    %c1_47 = arith.constant 1 : index
    %c8 = arith.constant 8 : index
    %46 = vector.load %arg14[%c1_47, %c8] : memref<10x80xbf16, #tpu.memory_space<vmem>>, vector<8x64xbf16>
    tpu.vector_store %arg14[%c1_47, %c8], %45 {strides = array<i32>} : memref<10x80xbf16, #tpu.memory_space<vmem>>, vector<8x64xbf16>,
    %c0_48 = arith.constant 0 : index
    %c0_49 = arith.constant 0 : index
    %47 = vector.load %arg14[%c0_48, %c0_49] : memref<10x80xbf16, #tpu.memory_space<vmem>>, vector<8x80xbf16>
    %c0_50 = arith.constant 0 : index
    %c0_51 = arith.constant 0 : index
    %c0_52 = arith.constant 0 : index
    %48 = vector.load %arg6[%c0_50, %c0_51, %c0_52] : memref<3x80x128xbf16, #tpu.memory_space<vmem>>, vector<1x80x128xbf16>
    %49 = vector.shape_cast %48 : vector<1x80x128xbf16> to vector<80x128xbf16>
    %cst_53 = arith.constant dense<0.000000e+00> : vector<8x128xf32>
    %50 = tpu.matmul %47, %49, %cst_53 {dimension_numbers = #tpu.dot_dimension_numbers<[1], [0], [0], [1], [0, 0, 1, 1], [], []>} : vector<8x80xbf16>, vector<80x128xbf16>, vector<8x128xf32> -> vector<8x128xf32>
    %c1_54 = arith.constant 1 : index
    %c0_55 = arith.constant 0 : index
    %51 = vector.load %arg14[%c1_54, %c0_55] : memref<10x80xbf16, #tpu.memory_space<vmem>>, vector<8x80xbf16>
    %c1_56 = arith.constant 1 : index
    %c0_57 = arith.constant 0 : index
    %c0_58 = arith.constant 0 : index
    %52 = vector.load %arg6[%c1_56, %c0_57, %c0_58] : memref<3x80x128xbf16, #tpu.memory_space<vmem>>, vector<1x80x128xbf16>
    %53 = vector.shape_cast %52 : vector<1x80x128xbf16> to vector<80x128xbf16>
    %cst_59 = arith.constant dense<0.000000e+00> : vector<8x128xf32>
    %54 = tpu.matmul %51, %53, %cst_59 {dimension_numbers = #tpu.dot_dimension_numbers<[1], [0], [0], [1], [0, 0, 1, 1], [], []>} : vector<8x80xbf16>, vector<80x128xbf16>, vector<8x128xf32> -> vector<8x128xf32>
    %55 = arith.addf %50, %54 : vector<8x128xf32>
    %c2_60 = arith.constant 2 : index
    %c0_61 = arith.constant 0 : index
    %56 = vector.load %arg14[%c2_60, %c0_61] : memref<10x80xbf16, #tpu.memory_space<vmem>>, vector<8x80xbf16>
    %c2_62 = arith.constant 2 : index
    %c0_63 = arith.constant 0 : index
    %c0_64 = arith.constant 0 : index
    %57 = vector.load %arg6[%c2_62, %c0_63, %c0_64] : memref<3x80x128xbf16, #tpu.memory_space<vmem>>, vector<1x80x128xbf16>
    %58 = vector.shape_cast %57 : vector<1x80x128xbf16> to vector<80x128xbf16>
    %cst_65 = arith.constant dense<0.000000e+00> : vector<8x128xf32>
    %59 = tpu.matmul %56, %58, %cst_65 {dimension_numbers = #tpu.dot_dimension_numbers<[1], [0], [0], [1], [0, 0, 1, 1], [], []>} : vector<8x80xbf16>, vector<80x128xbf16>, vector<8x128xf32> -> vector<8x128xf32>
    %60 = arith.addf %55, %59 : vector<8x128xf32>
    %c0_66 = arith.constant 0 : index
    %c0_67 = arith.constant 0 : index
    %61 = vector.load %arg7[%c0_66, %c0_67] : memref<1x128xf32, #tpu.memory_space<vmem>>, vector<1x128xf32>
    %62 = vector.broadcast %61 : vector<1x128xf32> to vector<8x128xf32>
    %63 = arith.addf %60, %62 : vector<8x128xf32>
    %cst_68 = arith.constant 0.000000e+00 : f32
    %64 = vector.broadcast %cst_68 : f32 to vector<8x128xf32>
    %65 = arith.maximumf %63, %64 : vector<8x128xf32>
    %66 = arith.truncf %65 : vector<8x128xf32> to vector<8x128xbf16>
    %c1_69 = arith.constant 1 : index
    %c16 = arith.constant 16 : index
    %67 = vector.load %arg15[%c1_69, %c16] : memref<10x160xbf16, #tpu.memory_space<vmem>>, vector<8x128xbf16>
    tpu.vector_store %arg15[%c1_69, %c16], %66 {strides = array<i32>} : memref<10x160xbf16, #tpu.memory_space<vmem>>, vector<8x128xbf16>,
    %c0_70 = arith.constant 0 : index
    %c0_71 = arith.constant 0 : index
    %68 = vector.load %arg15[%c0_70, %c0_71] : memref<10x160xbf16, #tpu.memory_space<vmem>>, vector<8x160xbf16>
    %c0_72 = arith.constant 0 : index
    %c0_73 = arith.constant 0 : index
    %c0_74 = arith.constant 0 : index
    %69 = vector.load %arg8[%c0_72, %c0_73, %c0_74] : memref<3x160x256xbf16, #tpu.memory_space<vmem>>, vector<1x160x256xbf16>
    %70 = vector.shape_cast %69 : vector<1x160x256xbf16> to vector<160x256xbf16>
    %cst_75 = arith.constant dense<0.000000e+00> : vector<8x256xf32>
    %71 = tpu.matmul %68, %70, %cst_75 {dimension_numbers = #tpu.dot_dimension_numbers<[1], [0], [0], [1], [0, 0, 1, 1], [], []>} : vector<8x160xbf16>, vector<160x256xbf16>, vector<8x256xf32> -> vector<8x256xf32>
    %c1_76 = arith.constant 1 : index
    %c0_77 = arith.constant 0 : index
    %72 = vector.load %arg15[%c1_76, %c0_77] : memref<10x160xbf16, #tpu.memory_space<vmem>>, vector<8x160xbf16>
    %c1_78 = arith.constant 1 : index
    %c0_79 = arith.constant 0 : index
    %c0_80 = arith.constant 0 : index
    %73 = vector.load %arg8[%c1_78, %c0_79, %c0_80] : memref<3x160x256xbf16, #tpu.memory_space<vmem>>, vector<1x160x256xbf16>
    %74 = vector.shape_cast %73 : vector<1x160x256xbf16> to vector<160x256xbf16>
    %cst_81 = arith.constant dense<0.000000e+00> : vector<8x256xf32>
    %75 = tpu.matmul %72, %74, %cst_81 {dimension_numbers = #tpu.dot_dimension_numbers<[1], [0], [0], [1], [0, 0, 1, 1], [], []>} : vector<8x160xbf16>, vector<160x256xbf16>, vector<8x256xf32> -> vector<8x256xf32>
    %76 = arith.addf %71, %75 : vector<8x256xf32>
    %c2_82 = arith.constant 2 : index
    %c0_83 = arith.constant 0 : index
    %77 = vector.load %arg15[%c2_82, %c0_83] : memref<10x160xbf16, #tpu.memory_space<vmem>>, vector<8x160xbf16>
    %c2_84 = arith.constant 2 : index
    %c0_85 = arith.constant 0 : index
    %c0_86 = arith.constant 0 : index
    %78 = vector.load %arg8[%c2_84, %c0_85, %c0_86] : memref<3x160x256xbf16, #tpu.memory_space<vmem>>, vector<1x160x256xbf16>
    %79 = vector.shape_cast %78 : vector<1x160x256xbf16> to vector<160x256xbf16>
    %cst_87 = arith.constant dense<0.000000e+00> : vector<8x256xf32>
    %80 = tpu.matmul %77, %79, %cst_87 {dimension_numbers = #tpu.dot_dimension_numbers<[1], [0], [0], [1], [0, 0, 1, 1], [], []>} : vector<8x160xbf16>, vector<160x256xbf16>, vector<8x256xf32> -> vector<8x256xf32>
    %81 = arith.addf %76, %80 : vector<8x256xf32>
    %c0_88 = arith.constant 0 : index
    %c0_89 = arith.constant 0 : index
    %82 = vector.load %arg9[%c0_88, %c0_89] : memref<1x256xf32, #tpu.memory_space<vmem>>, vector<1x256xf32>
    %83 = vector.broadcast %82 : vector<1x256xf32> to vector<8x256xf32>
    %84 = arith.addf %81, %83 : vector<8x256xf32>
    %cst_90 = arith.constant 0.000000e+00 : f32
    %85 = vector.broadcast %cst_90 : f32 to vector<8x256xf32>
    %86 = arith.maximumf %84, %85 : vector<8x256xf32>
    %87 = arith.truncf %86 : vector<8x256xf32> to vector<8x256xbf16>
    %c1_91 = arith.constant 1 : index
    %c32 = arith.constant 32 : index
    %88 = vector.load %arg16[%c1_91, %c32] : memref<10x320xbf16, #tpu.memory_space<vmem>>, vector<8x256xbf16>
    tpu.vector_store %arg16[%c1_91, %c32], %87 {strides = array<i32>} : memref<10x320xbf16, #tpu.memory_space<vmem>>, vector<8x256xbf16>,
    %c0_92 = arith.constant 0 : index
    %c0_93 = arith.constant 0 : index
    %89 = vector.load %arg16[%c0_92, %c0_93] : memref<10x320xbf16, #tpu.memory_space<vmem>>, vector<8x320xbf16>
    %c0_94 = arith.constant 0 : index
    %c0_95 = arith.constant 0 : index
    %c0_96 = arith.constant 0 : index
    %90 = vector.load %arg10[%c0_94, %c0_95, %c0_96] : memref<3x320x32xbf16, #tpu.memory_space<vmem>>, vector<1x320x32xbf16>
    %91 = vector.shape_cast %90 : vector<1x320x32xbf16> to vector<320x32xbf16>
    %cst_97 = arith.constant dense<0.000000e+00> : vector<8x32xf32>
    %92 = tpu.matmul %89, %91, %cst_97 {dimension_numbers = #tpu.dot_dimension_numbers<[1], [0], [0], [1], [0, 0, 1, 1], [], []>} : vector<8x320xbf16>, vector<320x32xbf16>, vector<8x32xf32> -> vector<8x32xf32>
    %c1_98 = arith.constant 1 : index
    %c0_99 = arith.constant 0 : index
    %93 = vector.load %arg16[%c1_98, %c0_99] : memref<10x320xbf16, #tpu.memory_space<vmem>>, vector<8x320xbf16>
    %c1_100 = arith.constant 1 : index
    %c0_101 = arith.constant 0 : index
    %c0_102 = arith.constant 0 : index
    %94 = vector.load %arg10[%c1_100, %c0_101, %c0_102] : memref<3x320x32xbf16, #tpu.memory_space<vmem>>, vector<1x320x32xbf16>
    %95 = vector.shape_cast %94 : vector<1x320x32xbf16> to vector<320x32xbf16>
    %cst_103 = arith.constant dense<0.000000e+00> : vector<8x32xf32>
    %96 = tpu.matmul %93, %95, %cst_103 {dimension_numbers = #tpu.dot_dimension_numbers<[1], [0], [0], [1], [0, 0, 1, 1], [], []>} : vector<8x320xbf16>, vector<320x32xbf16>, vector<8x32xf32> -> vector<8x32xf32>
    %97 = arith.addf %92, %96 : vector<8x32xf32>
    %c2_104 = arith.constant 2 : index
    %c0_105 = arith.constant 0 : index
    %98 = vector.load %arg16[%c2_104, %c0_105] : memref<10x320xbf16, #tpu.memory_space<vmem>>, vector<8x320xbf16>
    %c2_106 = arith.constant 2 : index
    %c0_107 = arith.constant 0 : index
    %c0_108 = arith.constant 0 : index
    %99 = vector.load %arg10[%c2_106, %c0_107, %c0_108] : memref<3x320x32xbf16, #tpu.memory_space<vmem>>, vector<1x320x32xbf16>
    %100 = vector.shape_cast %99 : vector<1x320x32xbf16> to vector<320x32xbf16>
    %cst_109 = arith.constant dense<0.000000e+00> : vector<8x32xf32>
    %101 = tpu.matmul %98, %100, %cst_109 {dimension_numbers = #tpu.dot_dimension_numbers<[1], [0], [0], [1], [0, 0, 1, 1], [], []>} : vector<8x320xbf16>, vector<320x32xbf16>, vector<8x32xf32> -> vector<8x32xf32>
    %102 = arith.addf %97, %101 : vector<8x32xf32>
    %c0_110 = arith.constant 0 : index
    %c0_111 = arith.constant 0 : index
    %103 = vector.load %arg11[%c0_110, %c0_111] : memref<1x32xf32, #tpu.memory_space<vmem>>, vector<1x32xf32>
    %104 = vector.broadcast %103 : vector<1x32xf32> to vector<8x32xf32>
    %105 = arith.addf %102, %104 : vector<8x32xf32>
    %cst_112 = arith.constant 0.000000e+00 : f32
    %106 = vector.broadcast %cst_112 : f32 to vector<8x32xf32>
    %107 = arith.maximumf %105, %106 : vector<8x32xf32>
    %c0_113 = arith.constant 0 : index
    %c0_114 = arith.constant 0 : index
    %c0_115 = arith.constant 0 : index
    %108 = vector.load %arg12[%c0_113, %c0_114, %c0_115] : memref<2x8x32xf32, #tpu.memory_space<vmem>>, vector<1x8x32xf32>
    %109 = vector.shape_cast %108 : vector<1x8x32xf32> to vector<8x32xf32>
    %110 = vector.shape_cast %107 : vector<8x32xf32> to vector<1x8x32xf32>
    tpu.vector_store %arg12[%c0_113, %c0_114, %c0_115], %110 {strides = array<i32>} : memref<2x8x32xf32, #tpu.memory_space<vmem>>, vector<1x8x32xf32>,
    %c1_116 = arith.constant 1 : index
    %c0_117 = arith.constant 0 : index
    %c0_118 = arith.constant 0 : index
    %111 = vector.load %arg1[%c1_116, %c0_117, %c0_118] : memref<2x9x144xbf16, #tpu.memory_space<vmem>>, vector<1x8x144xbf16>
    %112 = vector.shape_cast %111 : vector<1x8x144xbf16> to vector<8x144xbf16>
    %c0_119 = arith.constant 0 : index
    %c0_120 = arith.constant 0 : index
    %c0_121 = arith.constant 0 : index
    %113 = vector.load %arg2[%c0_119, %c0_120, %c0_121] : memref<2x144x32xbf16, #tpu.memory_space<vmem>>, vector<1x144x32xbf16>
    %114 = vector.shape_cast %113 : vector<1x144x32xbf16> to vector<144x32xbf16>
    %cst_122 = arith.constant dense<0.000000e+00> : vector<8x32xf32>
    %115 = tpu.matmul %112, %114, %cst_122 {dimension_numbers = #tpu.dot_dimension_numbers<[1], [0], [0], [1], [0, 0, 1, 1], [], []>} : vector<8x144xbf16>, vector<144x32xbf16>, vector<8x32xf32> -> vector<8x32xf32>
    %c1_123 = arith.constant 1 : index
    %c1_124 = arith.constant 1 : index
    %c0_125 = arith.constant 0 : index
    %116 = vector.load %arg1[%c1_123, %c1_124, %c0_125] : memref<2x9x144xbf16, #tpu.memory_space<vmem>>, vector<1x8x144xbf16>
    %117 = vector.shape_cast %116 : vector<1x8x144xbf16> to vector<8x144xbf16>
    %c1_126 = arith.constant 1 : index
    %c0_127 = arith.constant 0 : index
    %c0_128 = arith.constant 0 : index
    %118 = vector.load %arg2[%c1_126, %c0_127, %c0_128] : memref<2x144x32xbf16, #tpu.memory_space<vmem>>, vector<1x144x32xbf16>
    %119 = vector.shape_cast %118 : vector<1x144x32xbf16> to vector<144x32xbf16>
    %cst_129 = arith.constant dense<0.000000e+00> : vector<8x32xf32>
    %120 = tpu.matmul %117, %119, %cst_129 {dimension_numbers = #tpu.dot_dimension_numbers<[1], [0], [0], [1], [0, 0, 1, 1], [], []>} : vector<8x144xbf16>, vector<144x32xbf16>, vector<8x32xf32> -> vector<8x32xf32>
    %121 = arith.addf %115, %120 : vector<8x32xf32>
    %c0_130 = arith.constant 0 : index
    %c0_131 = arith.constant 0 : index
    %122 = vector.load %arg3[%c0_130, %c0_131] : memref<1x32xf32, #tpu.memory_space<vmem>>, vector<1x32xf32>
    %123 = vector.broadcast %122 : vector<1x32xf32> to vector<8x32xf32>
    %124 = arith.addf %121, %123 : vector<8x32xf32>
    %cst_132 = arith.constant 0.000000e+00 : f32
    %125 = vector.broadcast %cst_132 : f32 to vector<8x32xf32>
    %126 = arith.maximumf %124, %125 : vector<8x32xf32>
    %127 = arith.truncf %126 : vector<8x32xf32> to vector<8x32xbf16>
    %c1_133 = arith.constant 1 : index
    %c4_134 = arith.constant 4 : index
    %128 = vector.load %arg13[%c1_133, %c4_134] : memref<10x40xbf16, #tpu.memory_space<vmem>>, vector<8x32xbf16>
    tpu.vector_store %arg13[%c1_133, %c4_134], %127 {strides = array<i32>} : memref<10x40xbf16, #tpu.memory_space<vmem>>, vector<8x32xbf16>,
    %c0_135 = arith.constant 0 : index
    %c0_136 = arith.constant 0 : index
    %129 = vector.load %arg13[%c0_135, %c0_136] : memref<10x40xbf16, #tpu.memory_space<vmem>>, vector<8x40xbf16>
    %c0_137 = arith.constant 0 : index
    %c0_138 = arith.constant 0 : index
    %c0_139 = arith.constant 0 : index
    %130 = vector.load %arg4[%c0_137, %c0_138, %c0_139] : memref<3x40x64xbf16, #tpu.memory_space<vmem>>, vector<1x40x64xbf16>
    %131 = vector.shape_cast %130 : vector<1x40x64xbf16> to vector<40x64xbf16>
    %cst_140 = arith.constant dense<0.000000e+00> : vector<8x64xf32>
    %132 = tpu.matmul %129, %131, %cst_140 {dimension_numbers = #tpu.dot_dimension_numbers<[1], [0], [0], [1], [0, 0, 1, 1], [], []>} : vector<8x40xbf16>, vector<40x64xbf16>, vector<8x64xf32> -> vector<8x64xf32>
    %c1_141 = arith.constant 1 : index
    %c0_142 = arith.constant 0 : index
    %133 = vector.load %arg13[%c1_141, %c0_142] : memref<10x40xbf16, #tpu.memory_space<vmem>>, vector<8x40xbf16>
    %c1_143 = arith.constant 1 : index
    %c0_144 = arith.constant 0 : index
    %c0_145 = arith.constant 0 : index
    %134 = vector.load %arg4[%c1_143, %c0_144, %c0_145] : memref<3x40x64xbf16, #tpu.memory_space<vmem>>, vector<1x40x64xbf16>
    %135 = vector.shape_cast %134 : vector<1x40x64xbf16> to vector<40x64xbf16>
    %cst_146 = arith.constant dense<0.000000e+00> : vector<8x64xf32>
    %136 = tpu.matmul %133, %135, %cst_146 {dimension_numbers = #tpu.dot_dimension_numbers<[1], [0], [0], [1], [0, 0, 1, 1], [], []>} : vector<8x40xbf16>, vector<40x64xbf16>, vector<8x64xf32> -> vector<8x64xf32>
    %137 = arith.addf %132, %136 : vector<8x64xf32>
    %c2_147 = arith.constant 2 : index
    %c0_148 = arith.constant 0 : index
    %138 = vector.load %arg13[%c2_147, %c0_148] : memref<10x40xbf16, #tpu.memory_space<vmem>>, vector<8x40xbf16>
    %c2_149 = arith.constant 2 : index
    %c0_150 = arith.constant 0 : index
    %c0_151 = arith.constant 0 : index
    %139 = vector.load %arg4[%c2_149, %c0_150, %c0_151] : memref<3x40x64xbf16, #tpu.memory_space<vmem>>, vector<1x40x64xbf16>
    %140 = vector.shape_cast %139 : vector<1x40x64xbf16> to vector<40x64xbf16>
    %cst_152 = arith.constant dense<0.000000e+00> : vector<8x64xf32>
    %141 = tpu.matmul %138, %140, %cst_152 {dimension_numbers = #tpu.dot_dimension_numbers<[1], [0], [0], [1], [0, 0, 1, 1], [], []>} : vector<8x40xbf16>, vector<40x64xbf16>, vector<8x64xf32> -> vector<8x64xf32>
    %142 = arith.addf %137, %141 : vector<8x64xf32>
    %c0_153 = arith.constant 0 : index
    %c0_154 = arith.constant 0 : index
    %143 = vector.load %arg5[%c0_153, %c0_154] : memref<1x64xf32, #tpu.memory_space<vmem>>, vector<1x64xf32>
    %144 = vector.broadcast %143 : vector<1x64xf32> to vector<8x64xf32>
    %145 = arith.addf %142, %144 : vector<8x64xf32>
    %cst_155 = arith.constant 0.000000e+00 : f32
    %146 = vector.broadcast %cst_155 : f32 to vector<8x64xf32>
    %147 = arith.maximumf %145, %146 : vector<8x64xf32>
    %148 = arith.truncf %147 : vector<8x64xf32> to vector<8x64xbf16>
    %c1_156 = arith.constant 1 : index
    %c8_157 = arith.constant 8 : index
    %149 = vector.load %arg14[%c1_156, %c8_157] : memref<10x80xbf16, #tpu.memory_space<vmem>>, vector<8x64xbf16>
    tpu.vector_store %arg14[%c1_156, %c8_157], %148 {strides = array<i32>} : memref<10x80xbf16, #tpu.memory_space<vmem>>, vector<8x64xbf16>,
    %c0_158 = arith.constant 0 : index
    %c0_159 = arith.constant 0 : index
    %150 = vector.load %arg14[%c0_158, %c0_159] : memref<10x80xbf16, #tpu.memory_space<vmem>>, vector<8x80xbf16>
    %c0_160 = arith.constant 0 : index
    %c0_161 = arith.constant 0 : index
    %c0_162 = arith.constant 0 : index
    %151 = vector.load %arg6[%c0_160, %c0_161, %c0_162] : memref<3x80x128xbf16, #tpu.memory_space<vmem>>, vector<1x80x128xbf16>
    %152 = vector.shape_cast %151 : vector<1x80x128xbf16> to vector<80x128xbf16>
    %cst_163 = arith.constant dense<0.000000e+00> : vector<8x128xf32>
    %153 = tpu.matmul %150, %152, %cst_163 {dimension_numbers = #tpu.dot_dimension_numbers<[1], [0], [0], [1], [0, 0, 1, 1], [], []>} : vector<8x80xbf16>, vector<80x128xbf16>, vector<8x128xf32> -> vector<8x128xf32>
    %c1_164 = arith.constant 1 : index
    %c0_165 = arith.constant 0 : index
    %154 = vector.load %arg14[%c1_164, %c0_165] : memref<10x80xbf16, #tpu.memory_space<vmem>>, vector<8x80xbf16>
    %c1_166 = arith.constant 1 : index
    %c0_167 = arith.constant 0 : index
    %c0_168 = arith.constant 0 : index
    %155 = vector.load %arg6[%c1_166, %c0_167, %c0_168] : memref<3x80x128xbf16, #tpu.memory_space<vmem>>, vector<1x80x128xbf16>
    %156 = vector.shape_cast %155 : vector<1x80x128xbf16> to vector<80x128xbf16>
    %cst_169 = arith.constant dense<0.000000e+00> : vector<8x128xf32>
    %157 = tpu.matmul %154, %156, %cst_169 {dimension_numbers = #tpu.dot_dimension_numbers<[1], [0], [0], [1], [0, 0, 1, 1], [], []>} : vector<8x80xbf16>, vector<80x128xbf16>, vector<8x128xf32> -> vector<8x128xf32>
    %158 = arith.addf %153, %157 : vector<8x128xf32>
    %c2_170 = arith.constant 2 : index
    %c0_171 = arith.constant 0 : index
    %159 = vector.load %arg14[%c2_170, %c0_171] : memref<10x80xbf16, #tpu.memory_space<vmem>>, vector<8x80xbf16>
    %c2_172 = arith.constant 2 : index
    %c0_173 = arith.constant 0 : index
    %c0_174 = arith.constant 0 : index
    %160 = vector.load %arg6[%c2_172, %c0_173, %c0_174] : memref<3x80x128xbf16, #tpu.memory_space<vmem>>, vector<1x80x128xbf16>
    %161 = vector.shape_cast %160 : vector<1x80x128xbf16> to vector<80x128xbf16>
    %cst_175 = arith.constant dense<0.000000e+00> : vector<8x128xf32>
    %162 = tpu.matmul %159, %161, %cst_175 {dimension_numbers = #tpu.dot_dimension_numbers<[1], [0], [0], [1], [0, 0, 1, 1], [], []>} : vector<8x80xbf16>, vector<80x128xbf16>, vector<8x128xf32> -> vector<8x128xf32>
    %163 = arith.addf %158, %162 : vector<8x128xf32>
    %c0_176 = arith.constant 0 : index
    %c0_177 = arith.constant 0 : index
    %164 = vector.load %arg7[%c0_176, %c0_177] : memref<1x128xf32, #tpu.memory_space<vmem>>, vector<1x128xf32>
    %165 = vector.broadcast %164 : vector<1x128xf32> to vector<8x128xf32>
    %166 = arith.addf %163, %165 : vector<8x128xf32>
    %cst_178 = arith.constant 0.000000e+00 : f32
    %167 = vector.broadcast %cst_178 : f32 to vector<8x128xf32>
    %168 = arith.maximumf %166, %167 : vector<8x128xf32>
    %169 = arith.truncf %168 : vector<8x128xf32> to vector<8x128xbf16>
    %c1_179 = arith.constant 1 : index
    %c16_180 = arith.constant 16 : index
    %170 = vector.load %arg15[%c1_179, %c16_180] : memref<10x160xbf16, #tpu.memory_space<vmem>>, vector<8x128xbf16>
    tpu.vector_store %arg15[%c1_179, %c16_180], %169 {strides = array<i32>} : memref<10x160xbf16, #tpu.memory_space<vmem>>, vector<8x128xbf16>,
    %c0_181 = arith.constant 0 : index
    %c0_182 = arith.constant 0 : index
    %171 = vector.load %arg15[%c0_181, %c0_182] : memref<10x160xbf16, #tpu.memory_space<vmem>>, vector<8x160xbf16>
    %c0_183 = arith.constant 0 : index
    %c0_184 = arith.constant 0 : index
    %c0_185 = arith.constant 0 : index
    %172 = vector.load %arg8[%c0_183, %c0_184, %c0_185] : memref<3x160x256xbf16, #tpu.memory_space<vmem>>, vector<1x160x256xbf16>
    %173 = vector.shape_cast %172 : vector<1x160x256xbf16> to vector<160x256xbf16>
    %cst_186 = arith.constant dense<0.000000e+00> : vector<8x256xf32>
    %174 = tpu.matmul %171, %173, %cst_186 {dimension_numbers = #tpu.dot_dimension_numbers<[1], [0], [0], [1], [0, 0, 1, 1], [], []>} : vector<8x160xbf16>, vector<160x256xbf16>, vector<8x256xf32> -> vector<8x256xf32>
    %c1_187 = arith.constant 1 : index
    %c0_188 = arith.constant 0 : index
    %175 = vector.load %arg15[%c1_187, %c0_188] : memref<10x160xbf16, #tpu.memory_space<vmem>>, vector<8x160xbf16>
    %c1_189 = arith.constant 1 : index
    %c0_190 = arith.constant 0 : index
    %c0_191 = arith.constant 0 : index
    %176 = vector.load %arg8[%c1_189, %c0_190, %c0_191] : memref<3x160x256xbf16, #tpu.memory_space<vmem>>, vector<1x160x256xbf16>
    %177 = vector.shape_cast %176 : vector<1x160x256xbf16> to vector<160x256xbf16>
    %cst_192 = arith.constant dense<0.000000e+00> : vector<8x256xf32>
    %178 = tpu.matmul %175, %177, %cst_192 {dimension_numbers = #tpu.dot_dimension_numbers<[1], [0], [0], [1], [0, 0, 1, 1], [], []>} : vector<8x160xbf16>, vector<160x256xbf16>, vector<8x256xf32> -> vector<8x256xf32>
    %179 = arith.addf %174, %178 : vector<8x256xf32>
    %c2_193 = arith.constant 2 : index
    %c0_194 = arith.constant 0 : index
    %180 = vector.load %arg15[%c2_193, %c0_194] : memref<10x160xbf16, #tpu.memory_space<vmem>>, vector<8x160xbf16>
    %c2_195 = arith.constant 2 : index
    %c0_196 = arith.constant 0 : index
    %c0_197 = arith.constant 0 : index
    %181 = vector.load %arg8[%c2_195, %c0_196, %c0_197] : memref<3x160x256xbf16, #tpu.memory_space<vmem>>, vector<1x160x256xbf16>
    %182 = vector.shape_cast %181 : vector<1x160x256xbf16> to vector<160x256xbf16>
    %cst_198 = arith.constant dense<0.000000e+00> : vector<8x256xf32>
    %183 = tpu.matmul %180, %182, %cst_198 {dimension_numbers = #tpu.dot_dimension_numbers<[1], [0], [0], [1], [0, 0, 1, 1], [], []>} : vector<8x160xbf16>, vector<160x256xbf16>, vector<8x256xf32> -> vector<8x256xf32>
    %184 = arith.addf %179, %183 : vector<8x256xf32>
    %c0_199 = arith.constant 0 : index
    %c0_200 = arith.constant 0 : index
    %185 = vector.load %arg9[%c0_199, %c0_200] : memref<1x256xf32, #tpu.memory_space<vmem>>, vector<1x256xf32>
    %186 = vector.broadcast %185 : vector<1x256xf32> to vector<8x256xf32>
    %187 = arith.addf %184, %186 : vector<8x256xf32>
    %cst_201 = arith.constant 0.000000e+00 : f32
    %188 = vector.broadcast %cst_201 : f32 to vector<8x256xf32>
    %189 = arith.maximumf %187, %188 : vector<8x256xf32>
    %190 = arith.truncf %189 : vector<8x256xf32> to vector<8x256xbf16>
    %c1_202 = arith.constant 1 : index
    %c32_203 = arith.constant 32 : index
    %191 = vector.load %arg16[%c1_202, %c32_203] : memref<10x320xbf16, #tpu.memory_space<vmem>>, vector<8x256xbf16>
    tpu.vector_store %arg16[%c1_202, %c32_203], %190 {strides = array<i32>} : memref<10x320xbf16, #tpu.memory_space<vmem>>, vector<8x256xbf16>,
    %c0_204 = arith.constant 0 : index
    %c0_205 = arith.constant 0 : index
    %192 = vector.load %arg16[%c0_204, %c0_205] : memref<10x320xbf16, #tpu.memory_space<vmem>>, vector<8x320xbf16>
    %c0_206 = arith.constant 0 : index
    %c0_207 = arith.constant 0 : index
    %c0_208 = arith.constant 0 : index
    %193 = vector.load %arg10[%c0_206, %c0_207, %c0_208] : memref<3x320x32xbf16, #tpu.memory_space<vmem>>, vector<1x320x32xbf16>
    %194 = vector.shape_cast %193 : vector<1x320x32xbf16> to vector<320x32xbf16>
    %cst_209 = arith.constant dense<0.000000e+00> : vector<8x32xf32>
    %195 = tpu.matmul %192, %194, %cst_209 {dimension_numbers = #tpu.dot_dimension_numbers<[1], [0], [0], [1], [0, 0, 1, 1], [], []>} : vector<8x320xbf16>, vector<320x32xbf16>, vector<8x32xf32> -> vector<8x32xf32>
    %c1_210 = arith.constant 1 : index
    %c0_211 = arith.constant 0 : index
    %196 = vector.load %arg16[%c1_210, %c0_211] : memref<10x320xbf16, #tpu.memory_space<vmem>>, vector<8x320xbf16>
    %c1_212 = arith.constant 1 : index
    %c0_213 = arith.constant 0 : index
    %c0_214 = arith.constant 0 : index
    %197 = vector.load %arg10[%c1_212, %c0_213, %c0_214] : memref<3x320x32xbf16, #tpu.memory_space<vmem>>, vector<1x320x32xbf16>
    %198 = vector.shape_cast %197 : vector<1x320x32xbf16> to vector<320x32xbf16>
    %cst_215 = arith.constant dense<0.000000e+00> : vector<8x32xf32>
    %199 = tpu.matmul %196, %198, %cst_215 {dimension_numbers = #tpu.dot_dimension_numbers<[1], [0], [0], [1], [0, 0, 1, 1], [], []>} : vector<8x320xbf16>, vector<320x32xbf16>, vector<8x32xf32> -> vector<8x32xf32>
    %200 = arith.addf %195, %199 : vector<8x32xf32>
    %c2_216 = arith.constant 2 : index
    %c0_217 = arith.constant 0 : index
    %201 = vector.load %arg16[%c2_216, %c0_217] : memref<10x320xbf16, #tpu.memory_space<vmem>>, vector<8x320xbf16>
    %c2_218 = arith.constant 2 : index
    %c0_219 = arith.constant 0 : index
    %c0_220 = arith.constant 0 : index
    %202 = vector.load %arg10[%c2_218, %c0_219, %c0_220] : memref<3x320x32xbf16, #tpu.memory_space<vmem>>, vector<1x320x32xbf16>
    %203 = vector.shape_cast %202 : vector<1x320x32xbf16> to vector<320x32xbf16>
    %cst_221 = arith.constant dense<0.000000e+00> : vector<8x32xf32>
    %204 = tpu.matmul %201, %203, %cst_221 {dimension_numbers = #tpu.dot_dimension_numbers<[1], [0], [0], [1], [0, 0, 1, 1], [], []>} : vector<8x320xbf16>, vector<320x32xbf16>, vector<8x32xf32> -> vector<8x32xf32>
    %205 = arith.addf %200, %204 : vector<8x32xf32>
    %c0_222 = arith.constant 0 : index
    %c0_223 = arith.constant 0 : index
    %206 = vector.load %arg11[%c0_222, %c0_223] : memref<1x32xf32, #tpu.memory_space<vmem>>, vector<1x32xf32>
    %207 = vector.broadcast %206 : vector<1x32xf32> to vector<8x32xf32>
    %208 = arith.addf %205, %207 : vector<8x32xf32>
    %cst_224 = arith.constant 0.000000e+00 : f32
    %209 = vector.broadcast %cst_224 : f32 to vector<8x32xf32>
    %210 = arith.maximumf %208, %209 : vector<8x32xf32>
    %c1_225 = arith.constant 1 : index
    %c0_226 = arith.constant 0 : index
    %c0_227 = arith.constant 0 : index
    %211 = vector.load %arg12[%c1_225, %c0_226, %c0_227] : memref<2x8x32xf32, #tpu.memory_space<vmem>>, vector<1x8x32xf32>
    %212 = vector.shape_cast %211 : vector<1x8x32xf32> to vector<8x32xf32>
    %213 = vector.shape_cast %210 : vector<8x32xf32> to vector<1x8x32xf32>
    tpu.vector_store %arg12[%c1_225, %c0_226, %c0_227], %213 {strides = array<i32>} : memref<2x8x32xf32, #tpu.memory_space<vmem>>, vector<1x8x32xf32>,
    return
  }
  func.func @transform_0(%arg0: i32) -> (i32, i32, i32) {
    %c0_i32 = arith.constant 0 : i32
    %c0_i32_0 = arith.constant 0 : i32
    %c0_i32_1 = arith.constant 0 : i32
    %c0_i32_2 = arith.constant 0 : i32
    return %c0_i32, %c0_i32_0, %c0_i32_1 : i32, i32, i32
  }
  func.func @transform_1(%arg0: i32) -> (i32, i32, i32) {
    %c0_i32 = arith.constant 0 : i32
    %c0_i32_0 = arith.constant 0 : i32
    %c0_i32_1 = arith.constant 0 : i32
    %c0_i32_2 = arith.constant 0 : i32
    return %c0_i32, %c0_i32_0, %c0_i32_1 : i32, i32, i32
  }
  func.func @transform_2(%arg0: i32) -> (i32, i32) {
    %c0_i32 = arith.constant 0 : i32
    %c0_i32_0 = arith.constant 0 : i32
    %c0_i32_1 = arith.constant 0 : i32
    return %c0_i32, %c0_i32_0 : i32, i32
  }
  func.func @transform_3(%arg0: i32) -> (i32, i32, i32) {
    %c0_i32 = arith.constant 0 : i32
    %c0_i32_0 = arith.constant 0 : i32
    %c0_i32_1 = arith.constant 0 : i32
    %c0_i32_2 = arith.constant 0 : i32
    return %c0_i32, %c0_i32_0, %c0_i32_1 : i32, i32, i32
  }
  func.func @transform_4(%arg0: i32) -> (i32, i32) {
    %c0_i32 = arith.constant 0 : i32
    %c0_i32_0 = arith.constant 0 : i32
    %c0_i32_1 = arith.constant 0 : i32
    return %c0_i32, %c0_i32_0 : i32, i32
  }
  func.func @transform_5(%arg0: i32) -> (i32, i32, i32) {
    %c0_i32 = arith.constant 0 : i32
    %c0_i32_0 = arith.constant 0 : i32
    %c0_i32_1 = arith.constant 0 : i32
    %c0_i32_2 = arith.constant 0 : i32
    return %c0_i32, %c0_i32_0, %c0_i32_1 : i32, i32, i32
  }
  func.func @transform_6(%arg0: i32) -> (i32, i32) {
    %c0_i32 = arith.constant 0 : i32
    %c0_i32_0 = arith.constant 0 : i32
    %c0_i32_1 = arith.constant 0 : i32
    return %c0_i32, %c0_i32_0 : i32, i32
  }
  func.func @transform_7(%arg0: i32) -> (i32, i32, i32) {
    %c0_i32 = arith.constant 0 : i32
    %c0_i32_0 = arith.constant 0 : i32
    %c0_i32_1 = arith.constant 0 : i32
    %c0_i32_2 = arith.constant 0 : i32
    return %c0_i32, %c0_i32_0, %c0_i32_1 : i32, i32, i32
  }
  func.func @transform_8(%arg0: i32) -> (i32, i32) {
    %c0_i32 = arith.constant 0 : i32
    %c0_i32_0 = arith.constant 0 : i32
    %c0_i32_1 = arith.constant 0 : i32
    return %c0_i32, %c0_i32_0 : i32, i32
  }
  func.func @transform_9(%arg0: i32) -> (i32, i32, i32) {
    %c0_i32 = arith.constant 0 : i32
    %c0_i32_0 = arith.constant 0 : i32
    %c0_i32_1 = arith.constant 0 : i32
    %c0_i32_2 = arith.constant 0 : i32
    return %c0_i32, %c0_i32_0, %c0_i32_1 : i32, i32, i32
  }
  func.func @transform_10(%arg0: i32) -> (i32, i32) {
    %c0_i32 = arith.constant 0 : i32
    %c0_i32_0 = arith.constant 0 : i32
    %c0_i32_1 = arith.constant 0 : i32
    return %c0_i32, %c0_i32_0 : i32, i32
  }
  func.func @transform_11(%arg0: i32) -> (i32, i32, i32) {
    %c0_i32 = arith.constant 0 : i32
    %c0_i32_0 = arith.constant 0 : i32
    %c0_i32_1 = arith.constant 0 : i32
    %c0_i32_2 = arith.constant 0 : i32
    return %c0_i32, %c0_i32_0, %c0_i32_1 : i32, i32, i32
  }
}

</mosaic_0001>

<llo_original>
// kernel: tpu_custom_call.1
$region0: #{tpu_custom_call.1}
  #allocation0 [shape = 'u32[]', space=smem, size = 0x4, offset = 0x4, fixed_abs, tag = 'smem constant byte address 0x4 - core index']
  #allocation1 [shape = 'u32[144,128]{1,0:T(1,128)}', space=vmem, size = 0x12000, scoped, tag = 'internal scratch']
  #allocation2 [shape = 'bf16[10,40]{1,0:T(8,128)(2,1)}', space=vmem, size = 0x1000, scoped, tag = 'scratch operand']
  #allocation3 [shape = 'bf16[10,80]{1,0:T(8,128)(2,1)}', space=vmem, size = 0x1000, scoped, tag = 'scratch operand']
  #allocation4 [shape = 'bf16[10,160]{1,0:T(8,128)(2,1)}', space=vmem, size = 0x2000, scoped, tag = 'scratch operand']
  #allocation5 [shape = 'bf16[10,320]{1,0:T(8,128)(2,1)}', space=vmem, size = 0x3000, scoped, tag = 'scratch operand']
  %s0 = inlined_call_operand.vmem [shape: bf16[2,9,144], index: 0, kind: input, shape index: {}]
  %s1 = inlined_call_operand.vmem [shape: bf16[2,144,32], index: 1, kind: input, shape index: {}]
  %s2 = inlined_call_operand.vmem [shape: f32[1,32], index: 2, kind: input, shape index: {}]
  %s3 = inlined_call_operand.vmem [shape: bf16[3,40,64], index: 3, kind: input, shape index: {}]
  %s4 = inlined_call_operand.vmem [shape: f32[1,64], index: 4, kind: input, shape index: {}]
  %s5 = inlined_call_operand.vmem [shape: bf16[3,80,128], index: 5, kind: input, shape index: {}]
  %s6 = inlined_call_operand.vmem [shape: f32[1,128], index: 6, kind: input, shape index: {}]
  %s7 = inlined_call_operand.vmem [shape: bf16[3,160,256], index: 7, kind: input, shape index: {}]
  %s8 = inlined_call_operand.vmem [shape: f32[1,256], index: 8, kind: input, shape index: {}]
  %s9 = inlined_call_operand.vmem [shape: bf16[3,320,32], index: 9, kind: input, shape index: {}]
  %s10 = inlined_call_operand.vmem [shape: f32[1,32], index: 10, kind: input, shape index: {}]
  %s11 = inlined_call_operand.hbm [shape: f32[2,8,32], index: 11, kind: output, shape index: {}]
  %s12 = sld [smem:[#allocation0]]
  $region54: #{tpu_custom_call.1} parent=0
    _
  %s14 = ssub.s32 1, %s12
  %s15 = scalar_select 0, %s14, %s12
  $region1: #{tpu_custom_call.1} parent=0
    #allocation6 [shape = 'u8[8192]{0}', space=vmem, size = 0x2000, scoped, tag = 'output window, operand 0, single buffered']
    #allocation7 [shape = 's32[1]{0}', space=sflag, size = 0x4, scoped, tag = 'scoped memory for tpu_custom_call.1']
    %16 = vsyncpa [#allocation7], 0
    // Predicated region
    $region2: #{tpu_custom_call.1} parent=1 // pred_check
      _
    $region3: #{tpu_custom_call.1} parent=1 // pred_check_branch
      %18 = sbr.rel (0) target = $region5
    $region4: #{tpu_custom_call.1} parent=1 // pred_region
      _
    $region5: #{tpu_custom_call.1} parent=1 // pred_fallthru
      _
    // Predicated region
    $region6: #{tpu_custom_call.1} parent=1 // pred_check
      _
    $region7: #{tpu_custom_call.1} parent=1 // pred_check_branch
      %20 = sbr.rel (0) target = $region9
    $region8: #{tpu_custom_call.1} parent=1 // pred_region
      _
    $region9: #{tpu_custom_call.1} parent=1 // pred_fallthru
      _
    // Predicated region
    $region10: #{tpu_custom_call.1} parent=1 // pred_check
      _
    $region11: #{tpu_custom_call.1} parent=1 // pred_check_branch
      %22 = sbr.rel (0) target = $region13
    $region12: #{tpu_custom_call.1} parent=1 // pred_region
      _
    $region13: #{tpu_custom_call.1} parent=1 // pred_fallthru
      _
    // Predicated region
    $region14: #{tpu_custom_call.1} parent=1 // pred_check
      _
    $region15: #{tpu_custom_call.1} parent=1 // pred_check_branch
      %24 = sbr.rel (0) target = $region17
    $region16: #{tpu_custom_call.1} parent=1 // pred_region
      _
    $region17: #{tpu_custom_call.1} parent=1 // pred_fallthru
      _
    // Predicated region
    $region18: #{tpu_custom_call.1} parent=1 // pred_check
      _
    $region19: #{tpu_custom_call.1} parent=1 // pred_check_branch
      %26 = sbr.rel (0) target = $region21
    $region20: #{tpu_custom_call.1} parent=1 // pred_region
      _
    $region21: #{tpu_custom_call.1} parent=1 // pred_fallthru
      _
    // Predicated region
    $region22: #{tpu_custom_call.1} parent=1 // pred_check
      _
    $region23: #{tpu_custom_call.1} parent=1 // pred_check_branch
      %28 = sbr.rel (0) target = $region25
    $region24: #{tpu_custom_call.1} parent=1 // pred_region
      _
    $region25: #{tpu_custom_call.1} parent=1 // pred_fallthru
      _
    // Predicated region
    $region26: #{tpu_custom_call.1} parent=1 // pred_check
      _
    $region27: #{tpu_custom_call.1} parent=1 // pred_check_branch
      %30 = sbr.rel (0) target = $region29
    $region28: #{tpu_custom_call.1} parent=1 // pred_region
      _
    $region29: #{tpu_custom_call.1} parent=1 // pred_fallthru
      _
    // Predicated region
    $region30: #{tpu_custom_call.1} parent=1 // pred_check
      _
    $region31: #{tpu_custom_call.1} parent=1 // pred_check_branch
      %32 = sbr.rel (0) target = $region33
    $region32: #{tpu_custom_call.1} parent=1 // pred_region
      _
    $region33: #{tpu_custom_call.1} parent=1 // pred_fallthru
      _
    // Predicated region
    $region34: #{tpu_custom_call.1} parent=1 // pred_check
      _
    $region35: #{tpu_custom_call.1} parent=1 // pred_check_branch
      %34 = sbr.rel (0) target = $region37
    $region36: #{tpu_custom_call.1} parent=1 // pred_region
      _
    $region37: #{tpu_custom_call.1} parent=1 // pred_fallthru
      _
    // Predicated region
    $region38: #{tpu_custom_call.1} parent=1 // pred_check
      _
    $region39: #{tpu_custom_call.1} parent=1 // pred_check_branch
      %36 = sbr.rel (0) target = $region41
    $region40: #{tpu_custom_call.1} parent=1 // pred_region
      _
    $region41: #{tpu_custom_call.1} parent=1 // pred_fallthru
      _
    // Predicated region
    $region42: #{tpu_custom_call.1} parent=1 // pred_check
      _
    $region43: #{tpu_custom_call.1} parent=1 // pred_check_branch
      %38 = sbr.rel (0) target = $region45
    $region44: #{tpu_custom_call.1} parent=1 // pred_region
      _
    $region45: #{tpu_custom_call.1} parent=1 // pred_fallthru
      _
    %vm40 = vcmask 322560
    %41 = vst.msk [vmem:[#allocation2] sm:$0xf] %vm40, 0
    %vm42 = vcmask 319488
    %43 = vst.msk [vmem:[#allocation2 + $0x4] sm:$0x1] %vm42, 0
    %vm44 = vcmask 650240
    %45 = vst.msk [vmem:[#allocation3] sm:$0xf] %vm44, 0
    %vm46 = vcmask 647168
    %47 = vst.msk [vmem:[#allocation3 + $0x4] sm:$0x1] %vm46, 0
    %vm48 = vcmask 1043456
    %vm49 = vcmask 261124
    %vm50 = vmor %vm49, %vm48
    %51 = vst.msk [vmem:[#allocation4] sm:$0xff] %vm50, 0
    %vm52 = vcmask 1040384
    %vm53 = vcmask 258052
    %vm54 = vmor %vm53, %vm52
    %55 = vst.msk [vmem:[#allocation4 + $0x8] sm:$0x11] %vm54, 0
    %56 = vst [vmem:[#allocation5] sm:$0xff] 0
    %vm57 = vcmask 519168
    %58 = vst.msk [vmem:[#allocation5 + $0x8] sm:$0xf] %vm57, 0
    %59 = vst [vmem:[#allocation5 + $0xc] sm:$0x11] 0
    %vm60 = vcmask 516096
    %61 = vst.msk [vmem:[#allocation5 + $0x14] sm:$0x1] %vm60, 0
    %v62 = vld [vmem:[%s0] sm:$0xff]
    %v63 = vld [vmem:[%s1] sm:$0xf]
    %v64 = vld [vmem:[%s1 + $0x4] sm:$0xf]
    %v65 = vld [vmem:[%s1 + $0x8] sm:$0xf]
    %v66 = vld [vmem:[%s1 + $0xc] sm:$0xf]
    %v67 = vld [vmem:[%s1 + $0x10] sm:$0xf]
    %v68 = vld [vmem:[%s1 + $0x14] sm:$0xf]
    %v69 = vld [vmem:[%s1 + $0x18] sm:$0xf]
    %v70 = vld [vmem:[%s1 + $0x1c] sm:$0xf]
    %v71 = vld [vmem:[%s1 + $0x20] sm:$0xf]
    %v72 = vld [vmem:[%s1 + $0x24] sm:$0xf]
    %v73 = vld [vmem:[%s1 + $0x28] sm:$0xf]
    %v74 = vld [vmem:[%s1 + $0x2c] sm:$0xf]
    %v75 = vld [vmem:[%s1 + $0x30] sm:$0xf]
    %v76 = vld [vmem:[%s1 + $0x34] sm:$0xf]
    %v77 = vld [vmem:[%s1 + $0x38] sm:$0xf]
    %v78 = vld [vmem:[%s1 + $0x3c] sm:$0xf]
    %v79 = vld [vmem:[%s1 + $0x40] sm:$0xf]
    %v80 = vld [vmem:[%s1 + $0x44] sm:$0xf]
    %v81 = vld [vmem:[%s0 + $0x8] sm:$0x11]
    %s82 = scalar_lea.vmem %s1, 72
    %v83 = vld [vmem:[%s82] sm:$0xf]
    %v84 = vld [vmem:[%s82 + $0x4] sm:$0xf]
    %v85 = vld [vmem:[%s82 + $0x8] sm:$0xf]
    %v86 = vld [vmem:[%s82 + $0xc] sm:$0xf]
    %v87 = vld [vmem:[%s82 + $0x10] sm:$0xf]
    %v88 = vld [vmem:[%s82 + $0x14] sm:$0xf]
    %v89 = vld [vmem:[%s82 + $0x18] sm:$0xf]
    %v90 = vld [vmem:[%s82 + $0x1c] sm:$0xf]
    %v91 = vld [vmem:[%s82 + $0x20] sm:$0xf]
    %v92 = vld [vmem:[%s82 + $0x24] sm:$0xf]
    %v93 = vld [vmem:[%s82 + $0x28] sm:$0xf]
    %v94 = vld [vmem:[%s82 + $0x2c] sm:$0xf]
    %v95 = vld [vmem:[%s82 + $0x30] sm:$0xf]
    %v96 = vld [vmem:[%s82 + $0x34] sm:$0xf]
    %v97 = vld [vmem:[%s82 + $0x38] sm:$0xf]
    %v98 = vld [vmem:[%s82 + $0x3c] sm:$0xf]
    %v99 = vld [vmem:[%s82 + $0x40] sm:$0xf]
    %v100 = vld [vmem:[%s82 + $0x44] sm:$0xf]
    %v103 = vunpack.c.l.b16 %v62
    %v104 = vunpack.c.h.b16 %v62
    %v105 = vunpack.c.l.b16 %v81
    %v106 = vunpack.c.h.b16 %v81
    %v107 = vpack.c.b16 %v105, %v103
    %v108 = vpack.c.b16 %v106, %v104
    %v110 = vshrl.u32 %v107, 16
    %v112 = vshll.u32 %v107, 16
    %v114 = vrot.slane %v112, 1
    %v115 = vor.u32 %v110, %v114
    %v117 = vshrl.u32 %v108, 16
    %v119 = vshll.u32 %v108, 16
    %v121 = vrot.slane %v119, 1
    %v122 = vor.u32 %v117, %v121
    %v142 = vunpack.c.l.b16 %v83
    %v143 = vunpack.c.l.b16 %v84
    %v144 = vunpack.c.l.b16 %v85
    %v145 = vunpack.c.l.b16 %v86
    %v146 = vunpack.c.l.b16 %v87
    %v147 = vunpack.c.l.b16 %v88
    %v148 = vunpack.c.l.b16 %v89
    %v149 = vunpack.c.l.b16 %v90
    %v150 = vunpack.c.l.b16 %v91
    %v151 = vunpack.c.l.b16 %v92
    %v152 = vunpack.c.l.b16 %v93
    %v153 = vunpack.c.l.b16 %v94
    %v154 = vunpack.c.l.b16 %v95
    %v155 = vunpack.c.l.b16 %v96
    %v156 = vunpack.c.l.b16 %v97
    %v157 = vunpack.c.l.b16 %v98
    %v158 = vunpack.c.l.b16 %v99
    %v159 = vunpack.c.l.b16 %v100
    %v160 = vpack.c.b16 %v143, %v142
    %v161 = vpack.c.b16 %v145, %v144
    %v162 = vpack.c.b16 %v147, %v146
    %v163 = vpack.c.b16 %v149, %v148
    %v164 = vpack.c.b16 %v151, %v150
    %v165 = vpack.c.b16 %v153, %v152
    %v166 = vpack.c.b16 %v155, %v154
    %v167 = vpack.c.b16 %v157, %v156
    %v168 = vpack.c.b16 %v159, %v158
    %vm178 = vcmask 130048
    %v180 = vsel %vm178, %v122, 0
    %182 = vmatprep.subr.bf16.mxu0 0
    %183 = vmatpush1.bf16.msra.mxu0 %v167
    %184 = vmatprep.subr.bf16.mxu0 0
    %185 = vmatpush1.bf16.msra.mxu0 %v166
    %186 = vmatprep.subr.bf16.mxu0 0
    %187 = vmatpush1.bf16.msra.mxu0 %v165
    %188 = vmatprep.subr.bf16.mxu0 0
    %189 = vmatpush1.bf16.msra.mxu0 %v164
    %190 = vmatprep.subr.bf16.mxu0 0
    %191 = vmatpush1.bf16.msra.mxu0 %v163
    %192 = vmatprep.subr.bf16.mxu0 0
    %193 = vmatpush1.bf16.msra.mxu0 %v162
    %194 = vmatprep.subr.bf16.mxu0 0
    %195 = vmatpush1.bf16.msra.mxu0 %v161
    %196 = vmatprep.subr.bf16.mxu0 0
    %197 = vmatpush1.bf16.msra.mxu0 %v160
    %198 = vmatprep.subr.bf16.mxu0 0
    %199 = vmatpush2.bf16.msra.mxu0 0
    %200 = vmatprep.subr.bf16.mxu0 0
    %201 = vmatpush2.bf16.msra.mxu0 0
    %202 = vmatprep.subr.bf16.mxu0 0
    %203 = vmatpush2.bf16.msra.mxu0 0
    %204 = vmatprep.subr.bf16.mxu0 0
    %205 = vmatpush2.bf16.msra.mxu0 0
    %206 = vmatprep.subr.bf16.mxu0 0
    %207 = vmatpush2.bf16.msra.mxu0 0
    %208 = vmatprep.subr.bf16.mxu0 0
    %209 = vmatpush2.bf16.msra.mxu0 0
    %210 = vmatprep.subr.bf16.mxu0 0
    %211 = vmatpush2.bf16.msra.mxu0 0
    %212 = vmatprep.subr.bf16.mxu0 0
    %213 = vmatpush2.bf16.msra.mxu0 %v168
    %214 = vmatprep.mubr.bf16.mxu0 %v180
    %215 = vmatmul.mubr.bf16.gmra.mxu0 %v115
    %v216 = vpop.f32.mrf.mxu0
    %v217 = vadd.f32 0.0, %v216
    %v218 = vpop.f32.mrf.mxu0
    %v219 = vpop.f32.mrf.mxu0
    %v220 = vpop.f32.mrf.mxu0
    %221 = vdwg.mxu0
    %v222 = vpack.c.b16 %v103, %v103
    %v223 = vpack.c.b16 %v104, %v104
    %v243 = vunpack.c.l.b16 %v63
    %v244 = vunpack.c.l.b16 %v64
    %v245 = vunpack.c.l.b16 %v65
    %v246 = vunpack.c.l.b16 %v66
    %v247 = vunpack.c.l.b16 %v67
    %v248 = vunpack.c.l.b16 %v68
    %v249 = vunpack.c.l.b16 %v69
    %v250 = vunpack.c.l.b16 %v70
    %v251 = vunpack.c.l.b16 %v71
    %v252 = vunpack.c.l.b16 %v72
    %v253 = vunpack.c.l.b16 %v73
    %v254 = vunpack.c.l.b16 %v74
    %v255 = vunpack.c.l.b16 %v75
    %v256 = vunpack.c.l.b16 %v76
    %v257 = vunpack.c.l.b16 %v77
    %v258 = vunpack.c.l.b16 %v78
    %v259 = vunpack.c.l.b16 %v79
    %v260 = vunpack.c.l.b16 %v80
    %v261 = vpack.c.b16 %v244, %v243
    %v262 = vpack.c.b16 %v246, %v245
    %v263 = vpack.c.b16 %v248, %v247
    %v264 = vpack.c.b16 %v250, %v249
    %v265 = vpack.c.b16 %v252, %v251
    %v266 = vpack.c.b16 %v254, %v253
    %v267 = vpack.c.b16 %v256, %v255
    %v268 = vpack.c.b16 %v258, %v257
    %v269 = vpack.c.b16 %v260, %v259
    %v280 = vsel %vm178, %v223, 0
    %282 = vmatprep.subr.bf16.mxu0 0
    %283 = vmatpush1.bf16.msra.mxu0 %v268
    %284 = vmatprep.subr.bf16.mxu0 0
    %285 = vmatpush1.bf16.msra.mxu0 %v267
    %286 = vmatprep.subr.bf16.mxu0 0
    %287 = vmatpush1.bf16.msra.mxu0 %v266
    %288 = vmatprep.subr.bf16.mxu0 0
    %289 = vmatpush1.bf16.msra.mxu0 %v265
    %290 = vmatprep.subr.bf16.mxu0 0
    %291 = vmatpush1.bf16.msra.mxu0 %v264
    %292 = vmatprep.subr.bf16.mxu0 0
    %293 = vmatpush1.bf16.msra.mxu0 %v263
    %294 = vmatprep.subr.bf16.mxu0 0
    %295 = vmatpush1.bf16.msra.mxu0 %v262
    %296 = vmatprep.subr.bf16.mxu0 0
    %297 = vmatpush1.bf16.msra.mxu0 %v261
    %298 = vmatprep.subr.bf16.mxu0 0
    %299 = vmatpush2.bf16.msra.mxu0 0
    %300 = vmatprep.subr.bf16.mxu0 0
    %301 = vmatpush2.bf16.msra.mxu0 0
    %302 = vmatprep.subr.bf16.mxu0 0
    %303 = vmatpush2.bf16.msra.mxu0 0
    %304 = vmatprep.subr.bf16.mxu0 0
    %305 = vmatpush2.bf16.msra.mxu0 0
    %306 = vmatprep.subr.bf16.mxu0 0
    %307 = vmatpush2.bf16.msra.mxu0 0
    %308 = vmatprep.subr.bf16.mxu0 0
    %309 = vmatpush2.bf16.msra.mxu0 0
    %310 = vmatprep.subr.bf16.mxu0 0
    %311 = vmatpush2.bf16.msra.mxu0 0
    %312 = vmatprep.subr.bf16.mxu0 0
    %313 = vmatpush2.bf16.msra.mxu0 %v269
    %314 = vmatprep.mubr.bf16.mxu0 %v280
    %315 = vmatmul.mubr.bf16.gmra.mxu0 %v222
    %v316 = vpop.f32.mrf.mxu0
    %v317 = vadd.f32 %v217, %v316
    %v318 = vpop.f32.mrf.mxu0
    %v319 = vpop.f32.mrf.mxu0
    %v320 = vpop.f32.mrf.mxu0
    %321 = vdwg.mxu0
    %v322 = vld [vmem:[%s2] sm:$0x1]
    %v324 = vlaneseq
    %v325 = vshrl.u32 %v324, 7
    %v326 = vsub.s32 0, %v325
    %v327 = vrot.slane %v322, %v326
    %v329 = vadd.f32 %v317, %v327
    %v330 = vmax.f32 %v329, 0.0
    %v331 = vpack.c.bf16 %v330, %v330
    %v333 = vunpack.c.l.b16 %v331
    %v334 = vpack.c.b16 %v333, %v333
    %v336 = vshrl.u32 %v334, 16
    %v338 = vrot.slane %v336, 7
    %v339 = vshll.u32 %v334, 16
    %v341 = vor.u32 %v338, %v339
    %v342 = vrot.slane %v338, 4
    %343 = vrot.lane.b32.xlu0 %v341, 4
    %v344 = vpop.permute.xlu0 %343
    %345 = vrot.lane.b32.xlu0 %v342, 4
    %v346 = vpop.permute.xlu0 %345
    %vm349 = vcmask 289824
    %vm350 = vsmask.f32 7938
    %vm351 = vmand %vm349, %vm350
    %v352 = vld [vmem:[#allocation2] sm:$0xf]
    %v353 = vsel %vm351, %v344, %v352
    %354 = vst [vmem:[#allocation2] sm:$0xf] %v353
    %vm355 = vcmask 286752
    %vm356 = vsmask.f32 256
    %vm357 = vmand %vm355, %vm356
    %v358 = vld [vmem:[#allocation2 + $0x4] sm:$0x1]
    %v359 = vsel %vm357, %v346, %v358
    %360 = vst [vmem:[#allocation2 + $0x4] sm:$0x1] %v359
    %v361 = vld [vmem:[#allocation2] sm:$0xf]
    %v362 = vld [vmem:[%s3] sm:$0xf]
    %v363 = vld [vmem:[%s3 + $0x4] sm:$0xf]
    %v364 = vld [vmem:[%s3 + $0x8] sm:$0xf]
    %v365 = vld [vmem:[%s3 + $0xc] sm:$0xf]
    %v366 = vld [vmem:[%s3 + $0x10] sm:$0xf]
    %v367 = vld [vmem:[#allocation2 + $0x4] sm:$0x1]
    %s368 = scalar_lea.vmem %s3, 20
    %v369 = vld [vmem:[%s368] sm:$0xf]
    %v370 = vld [vmem:[%s368 + $0x4] sm:$0xf]
    %v371 = vld [vmem:[%s368 + $0x8] sm:$0xf]
    %v372 = vld [vmem:[%s368 + $0xc] sm:$0xf]
    %v373 = vld [vmem:[%s368 + $0x10] sm:$0xf]
    %v376 = vunpack.c.l.b16 %v361
    %v377 = vunpack.c.l.b16 %v367
    %v378 = vpack.c.b16 %v377, %v376
    %v380 = vshrl.u32 %v378, 16
    %v382 = vshll.u32 %v378, 16
    %v384 = vrot.slane %v382, 1
    %v385 = vor.u32 %v380, %v384
    %v391 = vunpack.c.l.b16 %v369
    %v392 = vunpack.c.l.b16 %v370
    %v393 = vunpack.c.l.b16 %v371
    %v394 = vunpack.c.l.b16 %v372
    %v395 = vunpack.c.l.b16 %v373
    %v396 = vpack.c.b16 %v392, %v391
    %v397 = vpack.c.b16 %v394, %v393
    %v398 = vpack.c.b16 %v395, %v395
    %vm401 = vcmask 326656
    %v403 = vsel %vm401, %v385, 0
    %v406 = vsel %vm48, %v398, 0
    %408 = vmatprep.subr.bf16.mxu0 0
    %409 = vmatpush1.bf16.msra.mxu0 0
    %410 = vmatprep.subr.bf16.mxu0 0
    %411 = vmatpush1.bf16.msra.mxu0 0
    %412 = vmatprep.subr.bf16.mxu0 0
    %413 = vmatpush1.bf16.msra.mxu0 0
    %414 = vmatprep.subr.bf16.mxu0 0
    %415 = vmatpush1.bf16.msra.mxu0 0
    %416 = vmatprep.subr.bf16.mxu0 0
    %417 = vmatpush1.bf16.msra.mxu0 0
    %418 = vmatprep.subr.bf16.mxu0 0
    %419 = vmatpush1.bf16.msra.mxu0 %v406
    %420 = vmatprep.subr.bf16.mxu0 0
    %421 = vmatpush1.bf16.msra.mxu0 %v397
    %422 = vmatprep.subr.bf16.mxu0 0
    %423 = vmatpush1.bf16.msra.mxu0 %v396
    %424 = vmatprep.subr.bf16.mxu0 0
    %425 = vmatpush2.bf16.msra.mxu0 0
    %426 = vmatprep.subr.bf16.mxu0 0
    %427 = vmatpush2.bf16.msra.mxu0 0
    %428 = vmatprep.subr.bf16.mxu0 0
    %429 = vmatpush2.bf16.msra.mxu0 0
    %430 = vmatprep.subr.bf16.mxu0 0
    %431 = vmatpush2.bf16.msra.mxu0 0
    %432 = vmatprep.subr.bf16.mxu0 0
    %433 = vmatpush2.bf16.msra.mxu0 0
    %434 = vmatprep.subr.bf16.mxu0 0
    %435 = vmatpush2.bf16.msra.mxu0 0
    %436 = vmatprep.subr.bf16.mxu0 0
    %437 = vmatpush2.bf16.msra.mxu0 0
    %438 = vmatprep.subr.bf16.mxu0 0
    %439 = vmatpush2.bf16.msra.mxu0 0
    %440 = vmatprep.mubr.bf16.mxu0 0
    %441 = vmatmul.mubr.bf16.gmra.mxu0 %v403
    %v442 = vpop.f32.mrf.mxu0
    %v443 = vadd.f32 0.0, %v442
    %v444 = vpop.f32.mrf.mxu0
    %v445 = vpop.f32.mrf.mxu0
    %v446 = vpop.f32.mrf.mxu0
    %447 = vdwg.mxu0
    %v453 = vunpack.c.l.b16 %v362
    %v454 = vunpack.c.l.b16 %v363
    %v455 = vunpack.c.l.b16 %v364
    %v456 = vunpack.c.l.b16 %v365
    %v457 = vunpack.c.l.b16 %v366
    %v458 = vpack.c.b16 %v454, %v453
    %v459 = vpack.c.b16 %v456, %v455
    %v460 = vpack.c.b16 %v457, %v457
    %v464 = vsel %vm401, %v361, 0
    %v467 = vsel %vm48, %v460, 0
    %469 = vmatprep.subr.bf16.mxu0 0
    %470 = vmatpush1.bf16.msra.mxu0 0
    %471 = vmatprep.subr.bf16.mxu0 0
    %472 = vmatpush1.bf16.msra.mxu0 0
    %473 = vmatprep.subr.bf16.mxu0 0
    %474 = vmatpush1.bf16.msra.mxu0 0
    %475 = vmatprep.subr.bf16.mxu0 0
    %476 = vmatpush1.bf16.msra.mxu0 0
    %477 = vmatprep.subr.bf16.mxu0 0
    %478 = vmatpush1.bf16.msra.mxu0 0
    %479 = vmatprep.subr.bf16.mxu0 0
    %480 = vmatpush1.bf16.msra.mxu0 %v467
    %481 = vmatprep.subr.bf16.mxu0 0
    %482 = vmatpush1.bf16.msra.mxu0 %v459
    %483 = vmatprep.subr.bf16.mxu0 0
    %484 = vmatpush1.bf16.msra.mxu0 %v458
    %485 = vmatprep.subr.bf16.mxu0 0
    %486 = vmatpush2.bf16.msra.mxu0 0
    %487 = vmatprep.subr.bf16.mxu0 0
    %488 = vmatpush2.bf16.msra.mxu0 0
    %489 = vmatprep.subr.bf16.mxu0 0
    %490 = vmatpush2.bf16.msra.mxu0 0
    %491 = vmatprep.subr.bf16.mxu0 0
    %492 = vmatpush2.bf16.msra.mxu0 0
    %493 = vmatprep.subr.bf16.mxu0 0
    %494 = vmatpush2.bf16.msra.mxu0 0
    %495 = vmatprep.subr.bf16.mxu0 0
    %496 = vmatpush2.bf16.msra.mxu0 0
    %497 = vmatprep.subr.bf16.mxu0 0
    %498 = vmatpush2.bf16.msra.mxu0 0
    %499 = vmatprep.subr.bf16.mxu0 0
    %500 = vmatpush2.bf16.msra.mxu0 0
    %501 = vmatprep.mubr.bf16.mxu0 0
    %502 = vmatmul.mubr.bf16.gmra.mxu0 %v464
    %v503 = vpop.f32.mrf.mxu0
    %v504 = vadd.f32 %v443, %v503
    %v505 = vpop.f32.mrf.mxu0
    %v506 = vpop.f32.mrf.mxu0
    %v507 = vpop.f32.mrf.mxu0
    %508 = vdwg.mxu0
    %v509 = vld [vmem:[#allocation2] sm:$0xe]
    %s510 = scalar_lea.vmem %s3, 40
    %v511 = vld [vmem:[%s510] sm:$0xf]
    %v512 = vld [vmem:[%s510 + $0x4] sm:$0xf]
    %v513 = vld [vmem:[%s510 + $0x8] sm:$0xf]
    %v514 = vld [vmem:[%s510 + $0xc] sm:$0xf]
    %v515 = vld [vmem:[%s510 + $0x10] sm:$0xf]
    %v517 = vunpack.c.l.b16 %v509
    %v518 = vpack.c.b16 %v377, %v517
    %v519 = vrot.slane %v518, 1
    %v525 = vunpack.c.l.b16 %v511
    %v526 = vunpack.c.l.b16 %v512
    %v527 = vunpack.c.l.b16 %v513
    %v528 = vunpack.c.l.b16 %v514
    %v529 = vunpack.c.l.b16 %v515
    %v530 = vpack.c.b16 %v526, %v525
    %v531 = vpack.c.b16 %v528, %v527
    %v532 = vpack.c.b16 %v529, %v529
    %v536 = vsel %vm401, %v519, 0
    %v539 = vsel %vm48, %v532, 0
    %541 = vmatprep.subr.bf16.mxu0 0
    %542 = vmatpush1.bf16.msra.mxu0 0
    %543 = vmatprep.subr.bf16.mxu0 0
    %544 = vmatpush1.bf16.msra.mxu0 0
    %545 = vmatprep.subr.bf16.mxu0 0
    %546 = vmatpush1.bf16.msra.mxu0 0
    %547 = vmatprep.subr.bf16.mxu0 0
    %548 = vmatpush1.bf16.msra.mxu0 0
    %549 = vmatprep.subr.bf16.mxu0 0
    %550 = vmatpush1.bf16.msra.mxu0 0
    %551 = vmatprep.subr.bf16.mxu0 0
    %552 = vmatpush1.bf16.msra.mxu0 %v539
    %553 = vmatprep.subr.bf16.mxu0 0
    %554 = vmatpush1.bf16.msra.mxu0 %v531
    %555 = vmatprep.subr.bf16.mxu0 0
    %556 = vmatpush1.bf16.msra.mxu0 %v530
    %557 = vmatprep.subr.bf16.mxu0 0
    %558 = vmatpush2.bf16.msra.mxu0 0
    %559 = vmatprep.subr.bf16.mxu0 0
    %560 = vmatpush2.bf16.msra.mxu0 0
    %561 = vmatprep.subr.bf16.mxu0 0
    %562 = vmatpush2.bf16.msra.mxu0 0
    %563 = vmatprep.subr.bf16.mxu0 0
    %564 = vmatpush2.bf16.msra.mxu0 0
    %565 = vmatprep.subr.bf16.mxu0 0
    %566 = vmatpush2.bf16.msra.mxu0 0
    %567 = vmatprep.subr.bf16.mxu0 0
    %568 = vmatpush2.bf16.msra.mxu0 0
    %569 = vmatprep.subr.bf16.mxu0 0
    %570 = vmatpush2.bf16.msra.mxu0 0
    %571 = vmatprep.subr.bf16.mxu0 0
    %572 = vmatpush2.bf16.msra.mxu0 0
    %573 = vmatprep.mubr.bf16.mxu0 0
    %574 = vmatmul.mubr.bf16.gmra.mxu0 %v536
    %v575 = vpop.f32.mrf.mxu0
    %v576 = vadd.f32 0.0, %v575
    %v577 = vpop.f32.mrf.mxu0
    %v578 = vpop.f32.mrf.mxu0
    %v579 = vpop.f32.mrf.mxu0
    %580 = vdwg.mxu0
    %v581 = vadd.f32 %v504, %v576
    %v582 = vld [vmem:[%s4] sm:$0x1]
    %v584 = vlaneseq
    %v585 = vshrl.u32 %v584, 7
    %v586 = vsub.s32 0, %v585
    %v587 = vrot.slane %v582, %v586
    %v589 = vadd.f32 %v581, %v587
    %v590 = vmax.f32 %v589, 0.0
    %v591 = vpack.c.bf16 %v590, %v590
    %v593 = vunpack.c.l.b16 %v591
    %v594 = vpack.c.b16 %v593, %v593
    %v596 = vshrl.u32 %v594, 16
    %v598 = vrot.slane %v596, 7
    %v599 = vshll.u32 %v594, 16
    %v601 = vor.u32 %v598, %v599
    %v602 = vrot.slane %v598, 4
    %603 = vrot.lane.b32.xlu0 %v601, 8
    %v604 = vpop.permute.xlu0 %603
    %605 = vrot.lane.b32.xlu0 %v602, 8
    %v606 = vpop.permute.xlu0 %605
    %vm609 = vcmask 584768
    %vm610 = vmand %vm609, %vm350
    %v611 = vld [vmem:[#allocation3] sm:$0xf]
    %v612 = vsel %vm610, %v604, %v611
    %613 = vst [vmem:[#allocation3] sm:$0xf] %v612
    %vm614 = vcmask 581696
    %vm615 = vmand %vm614, %vm356
    %v616 = vld [vmem:[#allocation3 + $0x4] sm:$0x1]
    %v617 = vsel %vm615, %v606, %v616
    %618 = vst [vmem:[#allocation3 + $0x4] sm:$0x1] %v617
    %v619 = vld [vmem:[#allocation3] sm:$0xf]
    %v620 = vld [vmem:[%s5] sm:$0xf]
    %v621 = vld [vmem:[%s5 + $0x4] sm:$0xf]
    %v622 = vld [vmem:[%s5 + $0x8] sm:$0xf]
    %v623 = vld [vmem:[%s5 + $0xc] sm:$0xf]
    %v624 = vld [vmem:[%s5 + $0x10] sm:$0xf]
    %v625 = vld [vmem:[%s5 + $0x14] sm:$0xf]
    %v626 = vld [vmem:[%s5 + $0x18] sm:$0xf]
    %v627 = vld [vmem:[%s5 + $0x1c] sm:$0xf]
    %v628 = vld [vmem:[%s5 + $0x20] sm:$0xf]
    %v629 = vld [vmem:[%s5 + $0x24] sm:$0xf]
    %v630 = vld [vmem:[#allocation3 + $0x4] sm:$0x1]
    %s631 = scalar_lea.vmem %s5, 40
    %v632 = vld [vmem:[%s631] sm:$0xf]
    %v633 = vld [vmem:[%s631 + $0x4] sm:$0xf]
    %v634 = vld [vmem:[%s631 + $0x8] sm:$0xf]
    %v635 = vld [vmem:[%s631 + $0xc] sm:$0xf]
    %v636 = vld [vmem:[%s631 + $0x10] sm:$0xf]
    %v637 = vld [vmem:[%s631 + $0x14] sm:$0xf]
    %v638 = vld [vmem:[%s631 + $0x18] sm:$0xf]
    %v639 = vld [vmem:[%s631 + $0x1c] sm:$0xf]
    %v640 = vld [vmem:[%s631 + $0x20] sm:$0xf]
    %v641 = vld [vmem:[%s631 + $0x24] sm:$0xf]
    %v644 = vunpack.c.l.b16 %v619
    %v645 = vunpack.c.l.b16 %v630
    %v646 = vpack.c.b16 %v645, %v644
    %v648 = vshrl.u32 %v646, 16
    %v650 = vshll.u32 %v646, 16
    %v652 = vrot.slane %v650, 1
    %v653 = vor.u32 %v648, %v652
    %v664 = vunpack.c.l.b16 %v632
    %v665 = vunpack.c.l.b16 %v633
    %v666 = vunpack.c.l.b16 %v634
    %v667 = vunpack.c.l.b16 %v635
    %v668 = vunpack.c.l.b16 %v636
    %v669 = vunpack.c.l.b16 %v637
    %v670 = vunpack.c.l.b16 %v638
    %v671 = vunpack.c.l.b16 %v639
    %v672 = vunpack.c.l.b16 %v640
    %v673 = vunpack.c.l.b16 %v641
    %v674 = vpack.c.b16 %v665, %v664
    %v675 = vpack.c.b16 %v667, %v666
    %v676 = vpack.c.b16 %v669, %v668
    %v677 = vpack.c.b16 %v671, %v670
    %v678 = vpack.c.b16 %v673, %v672
    %vm684 = vcmask 654336
    %v686 = vsel %vm684, %v653, 0
    %688 = vmatprep.subr.bf16.mxu0 0
    %689 = vmatpush1.bf16.msra.mxu0 0
    %690 = vmatprep.subr.bf16.mxu0 0
    %691 = vmatpush1.bf16.msra.mxu0 0
    %692 = vmatprep.subr.bf16.mxu0 0
    %693 = vmatpush1.bf16.msra.mxu0 0
    %694 = vmatprep.subr.bf16.mxu0 0
    %695 = vmatpush1.bf16.msra.mxu0 %v678
    %696 = vmatprep.subr.bf16.mxu0 0
    %697 = vmatpush1.bf16.msra.mxu0 %v677
    %698 = vmatprep.subr.bf16.mxu0 0
    %699 = vmatpush1.bf16.msra.mxu0 %v676
    %700 = vmatprep.subr.bf16.mxu0 0
    %701 = vmatpush1.bf16.msra.mxu0 %v675
    %702 = vmatprep.subr.bf16.mxu0 0
    %703 = vmatpush1.bf16.msra.mxu0 %v674
    %704 = vmatprep.subr.bf16.mxu0 0
    %705 = vmatpush2.bf16.msra.mxu0 0
    %706 = vmatprep.subr.bf16.mxu0 0
    %707 = vmatpush2.bf16.msra.mxu0 0
    %708 = vmatprep.subr.bf16.mxu0 0
    %709 = vmatpush2.bf16.msra.mxu0 0
    %710 = vmatprep.subr.bf16.mxu0 0
    %711 = vmatpush2.bf16.msra.mxu0 0
    %712 = vmatprep.subr.bf16.mxu0 0
    %713 = vmatpush2.bf16.msra.mxu0 0
    %714 = vmatprep.subr.bf16.mxu0 0
    %715 = vmatpush2.bf16.msra.mxu0 0
    %716 = vmatprep.subr.bf16.mxu0 0
    %717 = vmatpush2.bf16.msra.mxu0 0
    %718 = vmatprep.subr.bf16.mxu0 0
    %719 = vmatpush2.bf16.msra.mxu0 0
    %720 = vmatprep.mubr.bf16.mxu0 0
    %721 = vmatmul.mubr.bf16.gmra.mxu0 %v686
    %v722 = vpop.f32.mrf.mxu0
    %v723 = vadd.f32 0.0, %v722
    %v724 = vpop.f32.mrf.mxu0
    %v725 = vpop.f32.mrf.mxu0
    %v726 = vpop.f32.mrf.mxu0
    %727 = vdwg.mxu0
    %v738 = vunpack.c.l.b16 %v620
    %v739 = vunpack.c.l.b16 %v621
    %v740 = vunpack.c.l.b16 %v622
    %v741 = vunpack.c.l.b16 %v623
    %v742 = vunpack.c.l.b16 %v624
    %v743 = vunpack.c.l.b16 %v625
    %v744 = vunpack.c.l.b16 %v626
    %v745 = vunpack.c.l.b16 %v627
    %v746 = vunpack.c.l.b16 %v628
    %v747 = vunpack.c.l.b16 %v629
    %v748 = vpack.c.b16 %v739, %v738
    %v749 = vpack.c.b16 %v741, %v740
    %v750 = vpack.c.b16 %v743, %v742
    %v751 = vpack.c.b16 %v745, %v744
    %v752 = vpack.c.b16 %v747, %v746
    %v759 = vsel %vm684, %v619, 0
    %761 = vmatprep.subr.bf16.mxu0 0
    %762 = vmatpush1.bf16.msra.mxu0 0
    %763 = vmatprep.subr.bf16.mxu0 0
    %764 = vmatpush1.bf16.msra.mxu0 0
    %765 = vmatprep.subr.bf16.mxu0 0
    %766 = vmatpush1.bf16.msra.mxu0 0
    %767 = vmatprep.subr.bf16.mxu0 0
    %768 = vmatpush1.bf16.msra.mxu0 %v752
    %769 = vmatprep.subr.bf16.mxu0 0
    %770 = vmatpush1.bf16.msra.mxu0 %v751
    %771 = vmatprep.subr.bf16.mxu0 0
    %772 = vmatpush1.bf16.msra.mxu0 %v750
    %773 = vmatprep.subr.bf16.mxu0 0
    %774 = vmatpush1.bf16.msra.mxu0 %v749
    %775 = vmatprep.subr.bf16.mxu0 0
    %776 = vmatpush1.bf16.msra.mxu0 %v748
    %777 = vmatprep.subr.bf16.mxu0 0
    %778 = vmatpush2.bf16.msra.mxu0 0
    %779 = vmatprep.subr.bf16.mxu0 0
    %780 = vmatpush2.bf16.msra.mxu0 0
    %781 = vmatprep.subr.bf16.mxu0 0
    %782 = vmatpush2.bf16.msra.mxu0 0
    %783 = vmatprep.subr.bf16.mxu0 0
    %784 = vmatpush2.bf16.msra.mxu0 0
    %785 = vmatprep.subr.bf16.mxu0 0
    %786 = vmatpush2.bf16.msra.mxu0 0
    %787 = vmatprep.subr.bf16.mxu0 0
    %788 = vmatpush2.bf16.msra.mxu0 0
    %789 = vmatprep.subr.bf16.mxu0 0
    %790 = vmatpush2.bf16.msra.mxu0 0
    %791 = vmatprep.subr.bf16.mxu0 0
    %792 = vmatpush2.bf16.msra.mxu0 0
    %793 = vmatprep.mubr.bf16.mxu0 0
    %794 = vmatmul.mubr.bf16.gmra.mxu0 %v759
    %v795 = vpop.f32.mrf.mxu0
    %v796 = vadd.f32 %v723, %v795
    %v797 = vpop.f32.mrf.mxu0
    %v798 = vpop.f32.mrf.mxu0
    %v799 = vpop.f32.mrf.mxu0
    %800 = vdwg.mxu0
    %v801 = vld [vmem:[#allocation3] sm:$0xe]
    %s802 = scalar_lea.vmem %s5, 80
    %v803 = vld [vmem:[%s802] sm:$0xf]
    %v804 = vld [vmem:[%s802 + $0x4] sm:$0xf]
    %v805 = vld [vmem:[%s802 + $0x8] sm:$0xf]
    %v806 = vld [vmem:[%s802 + $0xc] sm:$0xf]
    %v807 = vld [vmem:[%s802 + $0x10] sm:$0xf]
    %v808 = vld [vmem:[%s802 + $0x14] sm:$0xf]
    %v809 = vld [vmem:[%s802 + $0x18] sm:$0xf]
    %v810 = vld [vmem:[%s802 + $0x1c] sm:$0xf]
    %v811 = vld [vmem:[%s802 + $0x20] sm:$0xf]
    %v812 = vld [vmem:[%s802 + $0x24] sm:$0xf]
    %v814 = vunpack.c.l.b16 %v801
    %v815 = vpack.c.b16 %v645, %v814
    %v816 = vrot.slane %v815, 1
    %v827 = vunpack.c.l.b16 %v803
    %v828 = vunpack.c.l.b16 %v804
    %v829 = vunpack.c.l.b16 %v805
    %v830 = vunpack.c.l.b16 %v806
    %v831 = vunpack.c.l.b16 %v807
    %v832 = vunpack.c.l.b16 %v808
    %v833 = vunpack.c.l.b16 %v809
    %v834 = vunpack.c.l.b16 %v810
    %v835 = vunpack.c.l.b16 %v811
    %v836 = vunpack.c.l.b16 %v812
    %v837 = vpack.c.b16 %v828, %v827
    %v838 = vpack.c.b16 %v830, %v829
    %v839 = vpack.c.b16 %v832, %v831
    %v840 = vpack.c.b16 %v834, %v833
    %v841 = vpack.c.b16 %v836, %v835
    %v848 = vsel %vm684, %v816, 0
    %850 = vmatprep.subr.bf16.mxu0 0
    %851 = vmatpush1.bf16.msra.mxu0 0
    %852 = vmatprep.subr.bf16.mxu0 0
    %853 = vmatpush1.bf16.msra.mxu0 0
    %854 = vmatprep.subr.bf16.mxu0 0
    %855 = vmatpush1.bf16.msra.mxu0 0
    %856 = vmatprep.subr.bf16.mxu0 0
    %857 = vmatpush1.bf16.msra.mxu0 %v841
    %858 = vmatprep.subr.bf16.mxu0 0
    %859 = vmatpush1.bf16.msra.mxu0 %v840
    %860 = vmatprep.subr.bf16.mxu0 0
    %861 = vmatpush1.bf16.msra.mxu0 %v839
    %862 = vmatprep.subr.bf16.mxu0 0
    %863 = vmatpush1.bf16.msra.mxu0 %v838
    %864 = vmatprep.subr.bf16.mxu0 0
    %865 = vmatpush1.bf16.msra.mxu0 %v837
    %866 = vmatprep.subr.bf16.mxu0 0
    %867 = vmatpush2.bf16.msra.mxu0 0
    %868 = vmatprep.subr.bf16.mxu0 0
    %869 = vmatpush2.bf16.msra.mxu0 0
    %870 = vmatprep.subr.bf16.mxu0 0
    %871 = vmatpush2.bf16.msra.mxu0 0
    %872 = vmatprep.subr.bf16.mxu0 0
    %873 = vmatpush2.bf16.msra.mxu0 0
    %874 = vmatprep.subr.bf16.mxu0 0
    %875 = vmatpush2.bf16.msra.mxu0 0
    %876 = vmatprep.subr.bf16.mxu0 0
    %877 = vmatpush2.bf16.msra.mxu0 0
    %878 = vmatprep.subr.bf16.mxu0 0
    %879 = vmatpush2.bf16.msra.mxu0 0
    %880 = vmatprep.subr.bf16.mxu0 0
    %881 = vmatpush2.bf16.msra.mxu0 0
    %882 = vmatprep.mubr.bf16.mxu0 0
    %883 = vmatmul.mubr.bf16.gmra.mxu0 %v848
    %v884 = vpop.f32.mrf.mxu0
    %v885 = vadd.f32 0.0, %v884
    %v886 = vpop.f32.mrf.mxu0
    %v887 = vpop.f32.mrf.mxu0
    %v888 = vpop.f32.mrf.mxu0
    %889 = vdwg.mxu0
    %v890 = vadd.f32 %v796, %v885
    %v891 = vld [vmem:[%s6] sm:$0x1]
    %v893 = vlaneseq
    %v894 = vshrl.u32 %v893, 7
    %v895 = vsub.s32 0, %v894
    %v896 = vrot.slane %v891, %v895
    %v898 = vadd.f32 %v890, %v896
    %v899 = vmax.f32 %v898, 0.0
    %v900 = vpack.c.bf16 %v899, %v899
    %v902 = vunpack.c.l.b16 %v900
    %v903 = vpack.c.b16 %v902, %v902
    %v905 = vshrl.u32 %v903, 16
    %v907 = vrot.slane %v905, 7
    %v908 = vshll.u32 %v903, 16
    %v910 = vor.u32 %v907, %v908
    %v911 = vrot.slane %v907, 4
    %912 = vrot.lane.b32.xlu0 %v910, 16
    %v913 = vpop.permute.xlu0 %912
    %914 = vrot.lane.b32.xlu0 %v911, 16
    %v915 = vpop.permute.xlu0 %914
    %v916 = vrot.slane %v913, 4
    %v917 = vrot.slane %v915, 4
    %vm918 = vcmask 130048
    %v919 = vsel %vm918, %v916, %v913
    %v920 = vsel %vm918, %v917, %v915
    %vm923 = vcmask 1043584
    %vm924 = vmand %vm923, %vm350
    %vm925 = vcmask 130052
    %vm926 = vsmask.f32 7954
    %vm927 = vmand %vm925, %vm926
    %vm928 = vmor %vm927, %vm924
    %v929 = vld [vmem:[#allocation4] sm:$0xff]
    %v930 = vsel %vm928, %v919, %v929
    %931 = vst [vmem:[#allocation4] sm:$0xff] %v930
    %vm932 = vcmask 1040512
    %vm933 = vmand %vm932, %vm356
    %vm934 = vcmask 126980
    %vm935 = vsmask.f32 4352
    %vm936 = vmand %vm934, %vm935
    %vm937 = vmor %vm936, %vm933
    %v938 = vld [vmem:[#allocation4 + $0x8] sm:$0x11]
    %v939 = vsel %vm937, %v920, %v938
    %940 = vst [vmem:[#allocation4 + $0x8] sm:$0x11] %v939
    %v941 = vld [vmem:[#allocation4] sm:$0xff]
    %v942 = vld [vmem:[%s7] sm:$0xff]
    %v943 = vld [vmem:[%s7 + $0x8] sm:$0xff]
    %v944 = vld [vmem:[%s7 + $0x10] sm:$0xff]
    %v945 = vld [vmem:[%s7 + $0x18] sm:$0xff]
    %v946 = vld [vmem:[%s7 + $0x20] sm:$0xff]
    %v947 = vld [vmem:[%s7 + $0x28] sm:$0xff]
    %v948 = vld [vmem:[%s7 + $0x30] sm:$0xff]
    %v949 = vld [vmem:[%s7 + $0x38] sm:$0xff]
    %v950 = vld [vmem:[%s7 + $0x40] sm:$0xff]
    %v951 = vld [vmem:[%s7 + $0x48] sm:$0xff]
    %v952 = vld [vmem:[%s7 + $0x50] sm:$0xff]
    %v953 = vld [vmem:[%s7 + $0x58] sm:$0xff]
    %v954 = vld [vmem:[%s7 + $0x60] sm:$0xff]
    %v955 = vld [vmem:[%s7 + $0x68] sm:$0xff]
    %v956 = vld [vmem:[%s7 + $0x70] sm:$0xff]
    %v957 = vld [vmem:[%s7 + $0x78] sm:$0xff]
    %v958 = vld [vmem:[%s7 + $0x80] sm:$0xff]
    %v959 = vld [vmem:[%s7 + $0x88] sm:$0xff]
    %v960 = vld [vmem:[%s7 + $0x90] sm:$0xff]
    %v961 = vld [vmem:[%s7 + $0x98] sm:$0xff]
    %v962 = vld [vmem:[#allocation4 + $0x8] sm:$0x11]
    %s963 = scalar_lea.vmem %s7, 160
    %v964 = vld [vmem:[%s963] sm:$0xff]
    %v965 = vld [vmem:[%s963 + $0x8] sm:$0xff]
    %v966 = vld [vmem:[%s963 + $0x10] sm:$0xff]
    %v967 = vld [vmem:[%s963 + $0x18] sm:$0xff]
    %v968 = vld [vmem:[%s963 + $0x20] sm:$0xff]
    %v969 = vld [vmem:[%s963 + $0x28] sm:$0xff]
    %v970 = vld [vmem:[%s963 + $0x30] sm:$0xff]
    %v971 = vld [vmem:[%s963 + $0x38] sm:$0xff]
    %v972 = vld [vmem:[%s963 + $0x40] sm:$0xff]
    %v973 = vld [vmem:[%s963 + $0x48] sm:$0xff]
    %v974 = vld [vmem:[%s963 + $0x50] sm:$0xff]
    %v975 = vld [vmem:[%s963 + $0x58] sm:$0xff]
    %v976 = vld [vmem:[%s963 + $0x60] sm:$0xff]
    %v977 = vld [vmem:[%s963 + $0x68] sm:$0xff]
    %v978 = vld [vmem:[%s963 + $0x70] sm:$0xff]
    %v979 = vld [vmem:[%s963 + $0x78] sm:$0xff]
    %v980 = vld [vmem:[%s963 + $0x80] sm:$0xff]
    %v981 = vld [vmem:[%s963 + $0x88] sm:$0xff]
    %v982 = vld [vmem:[%s963 + $0x90] sm:$0xff]
    %v983 = vld [vmem:[%s963 + $0x98] sm:$0xff]
    %v986 = vunpack.c.l.b16 %v941
    %v987 = vunpack.c.h.b16 %v941
    %v988 = vunpack.c.l.b16 %v962
    %v989 = vunpack.c.h.b16 %v962
    %v990 = vpack.c.b16 %v988, %v986
    %v991 = vpack.c.b16 %v989, %v987
    %v993 = vshrl.u32 %v990, 16
    %v995 = vshll.u32 %v990, 16
    %v997 = vrot.slane %v995, 1
    %v998 = vor.u32 %v993, %v997
    %v1000 = vshrl.u32 %v991, 16
    %v1002 = vshll.u32 %v991, 16
    %v1004 = vrot.slane %v1002, 1
    %v1005 = vor.u32 %v1000, %v1004
    %v1027 = vunpack.c.l.b16 %v964
    %v1028 = vunpack.c.h.b16 %v964
    %v1029 = vunpack.c.l.b16 %v965
    %v1030 = vunpack.c.h.b16 %v965
    %v1031 = vunpack.c.l.b16 %v966
    %v1032 = vunpack.c.h.b16 %v966
    %v1033 = vunpack.c.l.b16 %v967
    %v1034 = vunpack.c.h.b16 %v967
    %v1035 = vunpack.c.l.b16 %v968
    %v1036 = vunpack.c.h.b16 %v968
    %v1037 = vunpack.c.l.b16 %v969
    %v1038 = vunpack.c.h.b16 %v969
    %v1039 = vunpack.c.l.b16 %v970
    %v1040 = vunpack.c.h.b16 %v970
    %v1041 = vunpack.c.l.b16 %v971
    %v1042 = vunpack.c.h.b16 %v971
    %v1043 = vunpack.c.l.b16 %v972
    %v1044 = vunpack.c.h.b16 %v972
    %v1045 = vunpack.c.l.b16 %v973
    %v1046 = vunpack.c.h.b16 %v973
    %v1047 = vunpack.c.l.b16 %v974
    %v1048 = vunpack.c.h.b16 %v974
    %v1049 = vunpack.c.l.b16 %v975
    %v1050 = vunpack.c.h.b16 %v975
    %v1051 = vunpack.c.l.b16 %v976
    %v1052 = vunpack.c.h.b16 %v976
    %v1053 = vunpack.c.l.b16 %v977
    %v1054 = vunpack.c.h.b16 %v977
    %v1055 = vunpack.c.l.b16 %v978
    %v1056 = vunpack.c.h.b16 %v978
    %v1057 = vunpack.c.l.b16 %v979
    %v1058 = vunpack.c.h.b16 %v979
    %v1059 = vunpack.c.l.b16 %v980
    %v1060 = vunpack.c.h.b16 %v980
    %v1061 = vunpack.c.l.b16 %v981
    %v1062 = vunpack.c.h.b16 %v981
    %v1063 = vunpack.c.l.b16 %v982
    %v1064 = vunpack.c.h.b16 %v982
    %v1065 = vunpack.c.l.b16 %v983
    %v1066 = vunpack.c.h.b16 %v983
    %v1067 = vpack.c.b16 %v1029, %v1027
    %v1068 = vpack.c.b16 %v1030, %v1028
    %v1069 = vpack.c.b16 %v1033, %v1031
    %v1070 = vpack.c.b16 %v1034, %v1032
    %v1071 = vpack.c.b16 %v1037, %v1035
    %v1072 = vpack.c.b16 %v1038, %v1036
    %v1073 = vpack.c.b16 %v1041, %v1039
    %v1074 = vpack.c.b16 %v1042, %v1040
    %v1075 = vpack.c.b16 %v1045, %v1043
    %v1076 = vpack.c.b16 %v1046, %v1044
    %v1077 = vpack.c.b16 %v1049, %v1047
    %v1078 = vpack.c.b16 %v1050, %v1048
    %v1079 = vpack.c.b16 %v1053, %v1051
    %v1080 = vpack.c.b16 %v1054, %v1052
    %v1081 = vpack.c.b16 %v1057, %v1055
    %v1082 = vpack.c.b16 %v1058, %v1056
    %v1083 = vpack.c.b16 %v1061, %v1059
    %v1084 = vpack.c.b16 %v1062, %v1060
    %v1085 = vpack.c.b16 %v1065, %v1063
    %v1086 = vpack.c.b16 %v1066, %v1064
    %vm1107 = vcmask 261120
    %v1109 = vsel %vm1107, %v1005, 0
    %1111 = vmatprep.subr.bf16.mxu0 %v1082
    %1112 = vmatpush1.bf16.msra.mxu0 %v1081
    %1113 = vmatprep.subr.bf16.mxu0 %v1080
    %1114 = vmatpush1.bf16.msra.mxu0 %v1079
    %1115 = vmatprep.subr.bf16.mxu0 %v1078
    %1116 = vmatpush1.bf16.msra.mxu0 %v1077
    %1117 = vmatprep.subr.bf16.mxu0 %v1076
    %1118 = vmatpush1.bf16.msra.mxu0 %v1075
    %1119 = vmatprep.subr.bf16.mxu0 %v1074
    %1120 = vmatpush1.bf16.msra.mxu0 %v1073
    %1121 = vmatprep.subr.bf16.mxu0 %v1072
    %1122 = vmatpush1.bf16.msra.mxu0 %v1071
    %1123 = vmatprep.subr.bf16.mxu0 %v1070
    %1124 = vmatpush1.bf16.msra.mxu0 %v1069
    %1125 = vmatprep.subr.bf16.mxu0 %v1068
    %1126 = vmatpush1.bf16.msra.mxu0 %v1067
    %1127 = vmatprep.subr.bf16.mxu0 0
    %1128 = vmatpush2.bf16.msra.mxu0 0
    %1129 = vmatprep.subr.bf16.mxu0 0
    %1130 = vmatpush2.bf16.msra.mxu0 0
    %1131 = vmatprep.subr.bf16.mxu0 0
    %1132 = vmatpush2.bf16.msra.mxu0 0
    %1133 = vmatprep.subr.bf16.mxu0 0
    %1134 = vmatpush2.bf16.msra.mxu0 0
    %1135 = vmatprep.subr.bf16.mxu0 0
    %1136 = vmatpush2.bf16.msra.mxu0 0
    %1137 = vmatprep.subr.bf16.mxu0 0
    %1138 = vmatpush2.bf16.msra.mxu0 0
    %1139 = vmatprep.subr.bf16.mxu0 %v1086
    %1140 = vmatpush2.bf16.msra.mxu0 %v1085
    %1141 = vmatprep.subr.bf16.mxu0 %v1084
    %1142 = vmatpush2.bf16.msra.mxu0 %v1083
    %1143 = vmatprep.mubr.bf16.mxu0 %v1109
    %1144 = vmatmul.mubr.bf16.gmra.mxu0 %v998
    %v1145 = vpop.f32.mrf.mxu0
    %v1146 = vadd.f32 0.0, %v1145
    %v1147 = vpop.f32.mrf.mxu0
    %v1148 = vadd.f32 0.0, %v1147
    %v1149 = vpop.f32.mrf.mxu0
    %v1150 = vpop.f32.mrf.mxu0
    %1151 = vdwg.mxu0
    %v1152 = vpack.c.b16 %v986, %v986
    %v1153 = vpack.c.b16 %v987, %v987
    %v1175 = vunpack.c.l.b16 %v942
    %v1176 = vunpack.c.h.b16 %v942
    %v1177 = vunpack.c.l.b16 %v943
    %v1178 = vunpack.c.h.b16 %v943
    %v1179 = vunpack.c.l.b16 %v944
    %v1180 = vunpack.c.h.b16 %v944
    %v1181 = vunpack.c.l.b16 %v945
    %v1182 = vunpack.c.h.b16 %v945
    %v1183 = vunpack.c.l.b16 %v946
    %v1184 = vunpack.c.h.b16 %v946
    %v1185 = vunpack.c.l.b16 %v947
    %v1186 = vunpack.c.h.b16 %v947
    %v1187 = vunpack.c.l.b16 %v948
    %v1188 = vunpack.c.h.b16 %v948
    %v1189 = vunpack.c.l.b16 %v949
    %v1190 = vunpack.c.h.b16 %v949
    %v1191 = vunpack.c.l.b16 %v950
    %v1192 = vunpack.c.h.b16 %v950
    %v1193 = vunpack.c.l.b16 %v951
    %v1194 = vunpack.c.h.b16 %v951
    %v1195 = vunpack.c.l.b16 %v952
    %v1196 = vunpack.c.h.b16 %v952
    %v1197 = vunpack.c.l.b16 %v953
    %v1198 = vunpack.c.h.b16 %v953
    %v1199 = vunpack.c.l.b16 %v954
    %v1200 = vunpack.c.h.b16 %v954
    %v1201 = vunpack.c.l.b16 %v955
    %v1202 = vunpack.c.h.b16 %v955
    %v1203 = vunpack.c.l.b16 %v956
    %v1204 = vunpack.c.h.b16 %v956
    %v1205 = vunpack.c.l.b16 %v957
    %v1206 = vunpack.c.h.b16 %v957
    %v1207 = vunpack.c.l.b16 %v958
    %v1208 = vunpack.c.h.b16 %v958
    %v1209 = vunpack.c.l.b16 %v959
    %v1210 = vunpack.c.h.b16 %v959
    %v1211 = vunpack.c.l.b16 %v960
    %v1212 = vunpack.c.h.b16 %v960
    %v1213 = vunpack.c.l.b16 %v961
    %v1214 = vunpack.c.h.b16 %v961
    %v1215 = vpack.c.b16 %v1177, %v1175
    %v1216 = vpack.c.b16 %v1178, %v1176
    %v1217 = vpack.c.b16 %v1181, %v1179
    %v1218 = vpack.c.b16 %v1182, %v1180
    %v1219 = vpack.c.b16 %v1185, %v1183
    %v1220 = vpack.c.b16 %v1186, %v1184
    %v1221 = vpack.c.b16 %v1189, %v1187
    %v1222 = vpack.c.b16 %v1190, %v1188
    %v1223 = vpack.c.b16 %v1193, %v1191
    %v1224 = vpack.c.b16 %v1194, %v1192
    %v1225 = vpack.c.b16 %v1197, %v1195
    %v1226 = vpack.c.b16 %v1198, %v1196
    %v1227 = vpack.c.b16 %v1201, %v1199
    %v1228 = vpack.c.b16 %v1202, %v1200
    %v1229 = vpack.c.b16 %v1205, %v1203
    %v1230 = vpack.c.b16 %v1206, %v1204
    %v1231 = vpack.c.b16 %v1209, %v1207
    %v1232 = vpack.c.b16 %v1210, %v1208
    %v1233 = vpack.c.b16 %v1213, %v1211
    %v1234 = vpack.c.b16 %v1214, %v1212
    %v1256 = vsel %vm1107, %v1153, 0
    %1258 = vmatprep.subr.bf16.mxu0 %v1230
    %1259 = vmatpush1.bf16.msra.mxu0 %v1229
    %1260 = vmatprep.subr.bf16.mxu0 %v1228
    %1261 = vmatpush1.bf16.msra.mxu0 %v1227
    %1262 = vmatprep.subr.bf16.mxu0 %v1226
    %1263 = vmatpush1.bf16.msra.mxu0 %v1225
    %1264 = vmatprep.subr.bf16.mxu0 %v1224
    %1265 = vmatpush1.bf16.msra.mxu0 %v1223
    %1266 = vmatprep.subr.bf16.mxu0 %v1222
    %1267 = vmatpush1.bf16.msra.mxu0 %v1221
    %1268 = vmatprep.subr.bf16.mxu0 %v1220
    %1269 = vmatpush1.bf16.msra.mxu0 %v1219
    %1270 = vmatprep.subr.bf16.mxu0 %v1218
    %1271 = vmatpush1.bf16.msra.mxu0 %v1217
    %1272 = vmatprep.subr.bf16.mxu0 %v1216
    %1273 = vmatpush1.bf16.msra.mxu0 %v1215
    %1274 = vmatprep.subr.bf16.mxu0 0
    %1275 = vmatpush2.bf16.msra.mxu0 0
    %1276 = vmatprep.subr.bf16.mxu0 0
    %1277 = vmatpush2.bf16.msra.mxu0 0
    %1278 = vmatprep.subr.bf16.mxu0 0
    %1279 = vmatpush2.bf16.msra.mxu0 0
    %1280 = vmatprep.subr.bf16.mxu0 0
    %1281 = vmatpush2.bf16.msra.mxu0 0
    %1282 = vmatprep.subr.bf16.mxu0 0
    %1283 = vmatpush2.bf16.msra.mxu0 0
    %1284 = vmatprep.subr.bf16.mxu0 0
    %1285 = vmatpush2.bf16.msra.mxu0 0
    %1286 = vmatprep.subr.bf16.mxu0 %v1234
    %1287 = vmatpush2.bf16.msra.mxu0 %v1233
    %1288 = vmatprep.subr.bf16.mxu0 %v1232
    %1289 = vmatpush2.bf16.msra.mxu0 %v1231
    %1290 = vmatprep.mubr.bf16.mxu0 %v1256
    %1291 = vmatmul.mubr.bf16.gmra.mxu0 %v1152
    %v1292 = vpop.f32.mrf.mxu0
    %v1293 = vadd.f32 %v1146, %v1292
    %v1294 = vpop.f32.mrf.mxu0
    %v1295 = vadd.f32 %v1148, %v1294
    %v1296 = vpop.f32.mrf.mxu0
    %v1297 = vpop.f32.mrf.mxu0
    %1298 = vdwg.mxu0
    %v1299 = vld [vmem:[#allocation4] sm:$0xee]
    %s1300 = scalar_lea.vmem %s7, 320
    %v1301 = vld [vmem:[%s1300] sm:$0xff]
    %v1302 = vld [vmem:[%s1300 + $0x8] sm:$0xff]
    %v1303 = vld [vmem:[%s1300 + $0x10] sm:$0xff]
    %v1304 = vld [vmem:[%s1300 + $0x18] sm:$0xff]
    %v1305 = vld [vmem:[%s1300 + $0x20] sm:$0xff]
    %v1306 = vld [vmem:[%s1300 + $0x28] sm:$0xff]
    %v1307 = vld [vmem:[%s1300 + $0x30] sm:$0xff]
    %v1308 = vld [vmem:[%s1300 + $0x38] sm:$0xff]
    %v1309 = vld [vmem:[%s1300 + $0x40] sm:$0xff]
    %v1310 = vld [vmem:[%s1300 + $0x48] sm:$0xff]
    %v1311 = vld [vmem:[%s1300 + $0x50] sm:$0xff]
    %v1312 = vld [vmem:[%s1300 + $0x58] sm:$0xff]
    %v1313 = vld [vmem:[%s1300 + $0x60] sm:$0xff]
    %v1314 = vld [vmem:[%s1300 + $0x68] sm:$0xff]
    %v1315 = vld [vmem:[%s1300 + $0x70] sm:$0xff]
    %v1316 = vld [vmem:[%s1300 + $0x78] sm:$0xff]
    %v1317 = vld [vmem:[%s1300 + $0x80] sm:$0xff]
    %v1318 = vld [vmem:[%s1300 + $0x88] sm:$0xff]
    %v1319 = vld [vmem:[%s1300 + $0x90] sm:$0xff]
    %v1320 = vld [vmem:[%s1300 + $0x98] sm:$0xff]
    %v1322 = vunpack.c.l.b16 %v1299
    %v1323 = vunpack.c.h.b16 %v1299
    %v1324 = vpack.c.b16 %v988, %v1322
    %v1325 = vpack.c.b16 %v989, %v1323
    %v1326 = vrot.slane %v1324, 1
    %v1327 = vrot.slane %v1325, 1
    %v1349 = vunpack.c.l.b16 %v1301
    %v1350 = vunpack.c.h.b16 %v1301
    %v1351 = vunpack.c.l.b16 %v1302
    %v1352 = vunpack.c.h.b16 %v1302
    %v1353 = vunpack.c.l.b16 %v1303
    %v1354 = vunpack.c.h.b16 %v1303
    %v1355 = vunpack.c.l.b16 %v1304
    %v1356 = vunpack.c.h.b16 %v1304
    %v1357 = vunpack.c.l.b16 %v1305
    %v1358 = vunpack.c.h.b16 %v1305
    %v1359 = vunpack.c.l.b16 %v1306
    %v1360 = vunpack.c.h.b16 %v1306
    %v1361 = vunpack.c.l.b16 %v1307
    %v1362 = vunpack.c.h.b16 %v1307
    %v1363 = vunpack.c.l.b16 %v1308
    %v1364 = vunpack.c.h.b16 %v1308
    %v1365 = vunpack.c.l.b16 %v1309
    %v1366 = vunpack.c.h.b16 %v1309
    %v1367 = vunpack.c.l.b16 %v1310
    %v1368 = vunpack.c.h.b16 %v1310
    %v1369 = vunpack.c.l.b16 %v1311
    %v1370 = vunpack.c.h.b16 %v1311
    %v1371 = vunpack.c.l.b16 %v1312
    %v1372 = vunpack.c.h.b16 %v1312
    %v1373 = vunpack.c.l.b16 %v1313
    %v1374 = vunpack.c.h.b16 %v1313
    %v1375 = vunpack.c.l.b16 %v1314
    %v1376 = vunpack.c.h.b16 %v1314
    %v1377 = vunpack.c.l.b16 %v1315
    %v1378 = vunpack.c.h.b16 %v1315
    %v1379 = vunpack.c.l.b16 %v1316
    %v1380 = vunpack.c.h.b16 %v1316
    %v1381 = vunpack.c.l.b16 %v1317
    %v1382 = vunpack.c.h.b16 %v1317
    %v1383 = vunpack.c.l.b16 %v1318
    %v1384 = vunpack.c.h.b16 %v1318
    %v1385 = vunpack.c.l.b16 %v1319
    %v1386 = vunpack.c.h.b16 %v1319
    %v1387 = vunpack.c.l.b16 %v1320
    %v1388 = vunpack.c.h.b16 %v1320
    %v1389 = vpack.c.b16 %v1351, %v1349
    %v1390 = vpack.c.b16 %v1352, %v1350
    %v1391 = vpack.c.b16 %v1355, %v1353
    %v1392 = vpack.c.b16 %v1356, %v1354
    %v1393 = vpack.c.b16 %v1359, %v1357
    %v1394 = vpack.c.b16 %v1360, %v1358
    %v1395 = vpack.c.b16 %v1363, %v1361
    %v1396 = vpack.c.b16 %v1364, %v1362
    %v1397 = vpack.c.b16 %v1367, %v1365
    %v1398 = vpack.c.b16 %v1368, %v1366
    %v1399 = vpack.c.b16 %v1371, %v1369
    %v1400 = vpack.c.b16 %v1372, %v1370
    %v1401 = vpack.c.b16 %v1375, %v1373
    %v1402 = vpack.c.b16 %v1376, %v1374
    %v1403 = vpack.c.b16 %v1379, %v1377
    %v1404 = vpack.c.b16 %v1380, %v1378
    %v1405 = vpack.c.b16 %v1383, %v1381
    %v1406 = vpack.c.b16 %v1384, %v1382
    %v1407 = vpack.c.b16 %v1387, %v1385
    %v1408 = vpack.c.b16 %v1388, %v1386
    %v1430 = vsel %vm1107, %v1327, 0
    %1432 = vmatprep.subr.bf16.mxu0 %v1404
    %1433 = vmatpush1.bf16.msra.mxu0 %v1403
    %1434 = vmatprep.subr.bf16.mxu0 %v1402
    %1435 = vmatpush1.bf16.msra.mxu0 %v1401
    %1436 = vmatprep.subr.bf16.mxu0 %v1400
    %1437 = vmatpush1.bf16.msra.mxu0 %v1399
    %1438 = vmatprep.subr.bf16.mxu0 %v1398
    %1439 = vmatpush1.bf16.msra.mxu0 %v1397
    %1440 = vmatprep.subr.bf16.mxu0 %v1396
    %1441 = vmatpush1.bf16.msra.mxu0 %v1395
    %1442 = vmatprep.subr.bf16.mxu0 %v1394
    %1443 = vmatpush1.bf16.msra.mxu0 %v1393
    %1444 = vmatprep.subr.bf16.mxu0 %v1392
    %1445 = vmatpush1.bf16.msra.mxu0 %v1391
    %1446 = vmatprep.subr.bf16.mxu0 %v1390
    %1447 = vmatpush1.bf16.msra.mxu0 %v1389
    %1448 = vmatprep.subr.bf16.mxu0 0
    %1449 = vmatpush2.bf16.msra.mxu0 0
    %1450 = vmatprep.subr.bf16.mxu0 0
    %1451 = vmatpush2.bf16.msra.mxu0 0
    %1452 = vmatprep.subr.bf16.mxu0 0
    %1453 = vmatpush2.bf16.msra.mxu0 0
    %1454 = vmatprep.subr.bf16.mxu0 0
    %1455 = vmatpush2.bf16.msra.mxu0 0
    %1456 = vmatprep.subr.bf16.mxu0 0
    %1457 = vmatpush2.bf16.msra.mxu0 0
    %1458 = vmatprep.subr.bf16.mxu0 0
    %1459 = vmatpush2.bf16.msra.mxu0 0
    %1460 = vmatprep.subr.bf16.mxu0 %v1408
    %1461 = vmatpush2.bf16.msra.mxu0 %v1407
    %1462 = vmatprep.subr.bf16.mxu0 %v1406
    %1463 = vmatpush2.bf16.msra.mxu0 %v1405
    %1464 = vmatprep.mubr.bf16.mxu0 %v1430
    %1465 = vmatmul.mubr.bf16.gmra.mxu0 %v1326
    %v1466 = vpop.f32.mrf.mxu0
    %v1467 = vadd.f32 0.0, %v1466
    %v1468 = vpop.f32.mrf.mxu0
    %v1469 = vadd.f32 0.0, %v1468
    %v1470 = vpop.f32.mrf.mxu0
    %v1471 = vpop.f32.mrf.mxu0
    %1472 = vdwg.mxu0
    %v1473 = vadd.f32 %v1293, %v1467
    %v1474 = vadd.f32 %v1295, %v1469
    %v1475 = vld [vmem:[%s8] sm:$0x3]
    %v1477 = vlaneseq
    %v1478 = vshrl.u32 %v1477, 7
    %v1479 = vsub.s32 0, %v1478
    %v1480 = vrot.slane %v1475, %v1479
    %v1481 = vlaneseq
    %v1482 = vshrl.u32 %v1481, 7
    %v1483 = vsub.s32 1, %v1482
    %v1484 = vrot.slane %v1475, %v1483
    %v1487 = vadd.f32 %v1473, %v1480
    %v1488 = vadd.f32 %v1474, %v1484
    %v1489 = vmax.f32 %v1487, 0.0
    %v1490 = vmax.f32 %v1488, 0.0
    %v1491 = vpack.c.bf16 %v1489, %v1489
    %v1492 = vpack.c.bf16 %v1490, %v1490
    %v1495 = vunpack.c.l.b16 %v1491
    %v1496 = vunpack.c.l.b16 %v1492
    %v1497 = vpack.c.b16 %v1496, %v1495
    %v1499 = vshrl.u32 %v1497, 16
    %v1501 = vrot.slane %v1499, 7
    %v1502 = vshll.u32 %v1497, 16
    %v1504 = vor.u32 %v1501, %v1502
    %v1505 = vrot.slane %v1501, 4
    %1506 = vrot.lane.b32.xlu0 %v1504, 32
    %v1507 = vpop.permute.xlu0 %1506
    %1508 = vrot.lane.b32.xlu0 %v1505, 32
    %v1509 = vpop.permute.xlu0 %1508
    %v1510 = vrot.slane %v1507, 4
    %v1511 = vrot.slane %v1509, 4
    %vm1512 = vcmask 261120
    %v1513 = vsel %vm1512, %v1510, %v1507
    %v1514 = vsel %vm1512, %v1511, %v1509
    %vm1519 = vcmask 1043712
    %vm1520 = vmand %vm1519, %vm350
    %vm1521 = vcmask 1047556
    %vm1522 = vmand %vm1521, %vm926
    %vm1523 = vmor %vm1522, %vm1520
    %v1524 = vld [vmem:[#allocation5] sm:$0xff]
    %v1525 = vsel %vm1523, %v1513, %v1524
    %1526 = vst [vmem:[#allocation5] sm:$0xff] %v1525
    %vm1527 = vcmask 257024
    %vm1528 = vmand %vm1527, %vm350
    %v1529 = vld [vmem:[#allocation5 + $0x8] sm:$0xf]
    %v1530 = vsel %vm1528, %v1510, %v1529
    %1531 = vst [vmem:[#allocation5 + $0x8] sm:$0xf] %v1530
    %vm1532 = vcmask 1040640
    %vm1533 = vmand %vm1532, %vm356
    %vm1534 = vcmask 1044484
    %vm1535 = vmand %vm1534, %vm935
    %vm1536 = vmor %vm1535, %vm1533
    %v1537 = vld [vmem:[#allocation5 + $0xc] sm:$0x11]
    %v1538 = vsel %vm1536, %v1514, %v1537
    %1539 = vst [vmem:[#allocation5 + $0xc] sm:$0x11] %v1538
    %vm1540 = vcmask 253952
    %vm1541 = vmand %vm1540, %vm356
    %v1542 = vld [vmem:[#allocation5 + $0x14] sm:$0x1]
    %v1543 = vsel %vm1541, %v1511, %v1542
    %1544 = vst [vmem:[#allocation5 + $0x14] sm:$0x1] %v1543
    %v1545 = vld [vmem:[#allocation5] sm:$0xff]
    %v1546 = vld [vmem:[#allocation5 + $0x8] sm:$0xf]
    %v1547 = vld [vmem:[%s9] sm:$0xf]
    %v1548 = vld [vmem:[%s9 + $0x4] sm:$0xf]
    %v1549 = vld [vmem:[%s9 + $0x8] sm:$0xf]
    %v1550 = vld [vmem:[%s9 + $0xc] sm:$0xf]
    %v1551 = vld [vmem:[%s9 + $0x10] sm:$0xf]
    %v1552 = vld [vmem:[%s9 + $0x14] sm:$0xf]
    %v1553 = vld [vmem:[%s9 + $0x18] sm:$0xf]
    %v1554 = vld [vmem:[%s9 + $0x1c] sm:$0xf]
    %v1555 = vld [vmem:[%s9 + $0x20] sm:$0xf]
    %v1556 = vld [vmem:[%s9 + $0x24] sm:$0xf]
    %v1557 = vld [vmem:[%s9 + $0x28] sm:$0xf]
    %v1558 = vld [vmem:[%s9 + $0x2c] sm:$0xf]
    %v1559 = vld [vmem:[%s9 + $0x30] sm:$0xf]
    %v1560 = vld [vmem:[%s9 + $0x34] sm:$0xf]
    %v1561 = vld [vmem:[%s9 + $0x38] sm:$0xf]
    %v1562 = vld [vmem:[%s9 + $0x3c] sm:$0xf]
    %v1563 = vld [vmem:[%s9 + $0x40] sm:$0xf]
    %v1564 = vld [vmem:[%s9 + $0x44] sm:$0xf]
    %v1565 = vld [vmem:[%s9 + $0x48] sm:$0xf]
    %v1566 = vld [vmem:[%s9 + $0x4c] sm:$0xf]
    %v1567 = vld [vmem:[%s9 + $0x50] sm:$0xf]
    %v1568 = vld [vmem:[%s9 + $0x54] sm:$0xf]
    %v1569 = vld [vmem:[%s9 + $0x58] sm:$0xf]
    %v1570 = vld [vmem:[%s9 + $0x5c] sm:$0xf]
    %v1571 = vld [vmem:[%s9 + $0x60] sm:$0xf]
    %v1572 = vld [vmem:[%s9 + $0x64] sm:$0xf]
    %v1573 = vld [vmem:[%s9 + $0x68] sm:$0xf]
    %v1574 = vld [vmem:[%s9 + $0x6c] sm:$0xf]
    %v1575 = vld [vmem:[%s9 + $0x70] sm:$0xf]
    %v1576 = vld [vmem:[%s9 + $0x74] sm:$0xf]
    %v1577 = vld [vmem:[%s9 + $0x78] sm:$0xf]
    %v1578 = vld [vmem:[%s9 + $0x7c] sm:$0xf]
    %v1579 = vld [vmem:[%s9 + $0x80] sm:$0xf]
    %v1580 = vld [vmem:[%s9 + $0x84] sm:$0xf]
    %v1581 = vld [vmem:[%s9 + $0x88] sm:$0xf]
    %v1582 = vld [vmem:[%s9 + $0x8c] sm:$0xf]
    %v1583 = vld [vmem:[%s9 + $0x90] sm:$0xf]
    %v1584 = vld [vmem:[%s9 + $0x94] sm:$0xf]
    %v1585 = vld [vmem:[%s9 + $0x98] sm:$0xf]
    %v1586 = vld [vmem:[%s9 + $0x9c] sm:$0xf]
    %v1587 = vld [vmem:[#allocation5 + $0xc] sm:$0x11]
    %v1588 = vld [vmem:[#allocation5 + $0x14] sm:$0x1]
    %s1589 = scalar_lea.vmem %s9, 160
    %v1590 = vld [vmem:[%s1589] sm:$0xf]
    %v1591 = vld [vmem:[%s1589 + $0x4] sm:$0xf]
    %v1592 = vld [vmem:[%s1589 + $0x8] sm:$0xf]
    %v1593 = vld [vmem:[%s1589 + $0xc] sm:$0xf]
    %v1594 = vld [vmem:[%s1589 + $0x10] sm:$0xf]
    %v1595 = vld [vmem:[%s1589 + $0x14] sm:$0xf]
    %v1596 = vld [vmem:[%s1589 + $0x18] sm:$0xf]
    %v1597 = vld [vmem:[%s1589 + $0x1c] sm:$0xf]
    %v1598 = vld [vmem:[%s1589 + $0x20] sm:$0xf]
    %v1599 = vld [vmem:[%s1589 + $0x24] sm:$0xf]
    %v1600 = vld [vmem:[%s1589 + $0x28] sm:$0xf]
    %v1601 = vld [vmem:[%s1589 + $0x2c] sm:$0xf]
    %v1602 = vld [vmem:[%s1589 + $0x30] sm:$0xf]
    %v1603 = vld [vmem:[%s1589 + $0x34] sm:$0xf]
    %v1604 = vld [vmem:[%s1589 + $0x38] sm:$0xf]
    %v1605 = vld [vmem:[%s1589 + $0x3c] sm:$0xf]
    %v1606 = vld [vmem:[%s1589 + $0x40] sm:$0xf]
    %v1607 = vld [vmem:[%s1589 + $0x44] sm:$0xf]
    %v1608 = vld [vmem:[%s1589 + $0x48] sm:$0xf]
    %v1609 = vld [vmem:[%s1589 + $0x4c] sm:$0xf]
    %v1610 = vld [vmem:[%s1589 + $0x50] sm:$0xf]
    %v1611 = vld [vmem:[%s1589 + $0x54] sm:$0xf]
    %v1612 = vld [vmem:[%s1589 + $0x58] sm:$0xf]
    %v1613 = vld [vmem:[%s1589 + $0x5c] sm:$0xf]
    %v1614 = vld [vmem:[%s1589 + $0x60] sm:$0xf]
    %v1615 = vld [vmem:[%s1589 + $0x64] sm:$0xf]
    %v1616 = vld [vmem:[%s1589 + $0x68] sm:$0xf]
    %v1617 = vld [vmem:[%s1589 + $0x6c] sm:$0xf]
    %v1618 = vld [vmem:[%s1589 + $0x70] sm:$0xf]
    %v1619 = vld [vmem:[%s1589 + $0x74] sm:$0xf]
    %v1620 = vld [vmem:[%s1589 + $0x78] sm:$0xf]
    %v1621 = vld [vmem:[%s1589 + $0x7c] sm:$0xf]
    %v1622 = vld [vmem:[%s1589 + $0x80] sm:$0xf]
    %v1623 = vld [vmem:[%s1589 + $0x84] sm:$0xf]
    %v1624 = vld [vmem:[%s1589 + $0x88] sm:$0xf]
    %v1625 = vld [vmem:[%s1589 + $0x8c] sm:$0xf]
    %v1626 = vld [vmem:[%s1589 + $0x90] sm:$0xf]
    %v1627 = vld [vmem:[%s1589 + $0x94] sm:$0xf]
    %v1628 = vld [vmem:[%s1589 + $0x98] sm:$0xf]
    %v1629 = vld [vmem:[%s1589 + $0x9c] sm:$0xf]
    %v1634 = vunpack.c.l.b16 %v1545
    %v1635 = vunpack.c.h.b16 %v1545
    %v1636 = vunpack.c.l.b16 %v1546
    %v1637 = vunpack.c.l.b16 %v1587
    %v1638 = vunpack.c.h.b16 %v1587
    %v1639 = vunpack.c.l.b16 %v1588
    %v1640 = vpack.c.b16 %v1637, %v1634
    %v1641 = vpack.c.b16 %v1638, %v1635
    %v1642 = vpack.c.b16 %v1639, %v1636
    %v1644 = vshrl.u32 %v1640, 16
    %v1646 = vshll.u32 %v1640, 16
    %v1648 = vrot.slane %v1646, 1
    %v1649 = vor.u32 %v1644, %v1648
    %v1651 = vshrl.u32 %v1641, 16
    %v1653 = vshll.u32 %v1641, 16
    %v1655 = vrot.slane %v1653, 1
    %v1656 = vor.u32 %v1651, %v1655
    %v1658 = vshrl.u32 %v1642, 16
    %v1660 = vshll.u32 %v1642, 16
    %v1662 = vrot.slane %v1660, 1
    %v1663 = vor.u32 %v1658, %v1662
    %v1706 = vunpack.c.l.b16 %v1590
    %v1707 = vunpack.c.l.b16 %v1591
    %v1708 = vunpack.c.l.b16 %v1592
    %v1709 = vunpack.c.l.b16 %v1593
    %v1710 = vunpack.c.l.b16 %v1594
    %v1711 = vunpack.c.l.b16 %v1595
    %v1712 = vunpack.c.l.b16 %v1596
    %v1713 = vunpack.c.l.b16 %v1597
    %v1714 = vunpack.c.l.b16 %v1598
    %v1715 = vunpack.c.l.b16 %v1599
    %v1716 = vunpack.c.l.b16 %v1600
    %v1717 = vunpack.c.l.b16 %v1601
    %v1718 = vunpack.c.l.b16 %v1602
    %v1719 = vunpack.c.l.b16 %v1603
    %v1720 = vunpack.c.l.b16 %v1604
    %v1721 = vunpack.c.l.b16 %v1605
    %v1722 = vunpack.c.l.b16 %v1606
    %v1723 = vunpack.c.l.b16 %v1607
    %v1724 = vunpack.c.l.b16 %v1608
    %v1725 = vunpack.c.l.b16 %v1609
    %v1726 = vunpack.c.l.b16 %v1610
    %v1727 = vunpack.c.l.b16 %v1611
    %v1728 = vunpack.c.l.b16 %v1612
    %v1729 = vunpack.c.l.b16 %v1613
    %v1730 = vunpack.c.l.b16 %v1614
    %v1731 = vunpack.c.l.b16 %v1615
    %v1732 = vunpack.c.l.b16 %v1616
    %v1733 = vunpack.c.l.b16 %v1617
    %v1734 = vunpack.c.l.b16 %v1618
    %v1735 = vunpack.c.l.b16 %v1619
    %v1736 = vunpack.c.l.b16 %v1620
    %v1737 = vunpack.c.l.b16 %v1621
    %v1738 = vunpack.c.l.b16 %v1622
    %v1739 = vunpack.c.l.b16 %v1623
    %v1740 = vunpack.c.l.b16 %v1624
    %v1741 = vunpack.c.l.b16 %v1625
    %v1742 = vunpack.c.l.b16 %v1626
    %v1743 = vunpack.c.l.b16 %v1627
    %v1744 = vunpack.c.l.b16 %v1628
    %v1745 = vunpack.c.l.b16 %v1629
    %v1746 = vpack.c.b16 %v1707, %v1706
    %v1747 = vpack.c.b16 %v1709, %v1708
    %v1748 = vpack.c.b16 %v1711, %v1710
    %v1749 = vpack.c.b16 %v1713, %v1712
    %v1750 = vpack.c.b16 %v1715, %v1714
    %v1751 = vpack.c.b16 %v1717, %v1716
    %v1752 = vpack.c.b16 %v1719, %v1718
    %v1753 = vpack.c.b16 %v1721, %v1720
    %v1754 = vpack.c.b16 %v1723, %v1722
    %v1755 = vpack.c.b16 %v1725, %v1724
    %v1756 = vpack.c.b16 %v1727, %v1726
    %v1757 = vpack.c.b16 %v1729, %v1728
    %v1758 = vpack.c.b16 %v1731, %v1730
    %v1759 = vpack.c.b16 %v1733, %v1732
    %v1760 = vpack.c.b16 %v1735, %v1734
    %v1761 = vpack.c.b16 %v1737, %v1736
    %v1762 = vpack.c.b16 %v1739, %v1738
    %v1763 = vpack.c.b16 %v1741, %v1740
    %v1764 = vpack.c.b16 %v1743, %v1742
    %v1765 = vpack.c.b16 %v1745, %v1744
    %vm1786 = vcmask 523264
    %v1788 = vsel %vm1786, %v1663, 0
    %1790 = vmatprep.subr.bf16.mxu0 0
    %1791 = vmatpush1.bf16.msra.mxu0 %v1753
    %1792 = vmatprep.subr.bf16.mxu0 0
    %1793 = vmatpush1.bf16.msra.mxu0 %v1752
    %1794 = vmatprep.subr.bf16.mxu0 0
    %1795 = vmatpush1.bf16.msra.mxu0 %v1751
    %1796 = vmatprep.subr.bf16.mxu0 0
    %1797 = vmatpush1.bf16.msra.mxu0 %v1750
    %1798 = vmatprep.subr.bf16.mxu0 0
    %1799 = vmatpush1.bf16.msra.mxu0 %v1749
    %1800 = vmatprep.subr.bf16.mxu0 0
    %1801 = vmatpush1.bf16.msra.mxu0 %v1748
    %1802 = vmatprep.subr.bf16.mxu0 0
    %1803 = vmatpush1.bf16.msra.mxu0 %v1747
    %1804 = vmatprep.subr.bf16.mxu0 0
    %1805 = vmatpush1.bf16.msra.mxu0 %v1746
    %1806 = vmatprep.subr.bf16.mxu0 0
    %1807 = vmatpush2.bf16.msra.mxu0 %v1761
    %1808 = vmatprep.subr.bf16.mxu0 0
    %1809 = vmatpush2.bf16.msra.mxu0 %v1760
    %1810 = vmatprep.subr.bf16.mxu0 0
    %1811 = vmatpush2.bf16.msra.mxu0 %v1759
    %1812 = vmatprep.subr.bf16.mxu0 0
    %1813 = vmatpush2.bf16.msra.mxu0 %v1758
    %1814 = vmatprep.subr.bf16.mxu0 0
    %1815 = vmatpush2.bf16.msra.mxu0 %v1757
    %1816 = vmatprep.subr.bf16.mxu0 0
    %1817 = vmatpush2.bf16.msra.mxu0 %v1756
    %1818 = vmatprep.subr.bf16.mxu0 0
    %1819 = vmatpush2.bf16.msra.mxu0 %v1755
    %1820 = vmatprep.subr.bf16.mxu0 0
    %1821 = vmatpush2.bf16.msra.mxu0 %v1754
    %1822 = vmatprep.mubr.bf16.mxu0 %v1656
    %1823 = vmatmul.mubr.bf16.gmra.mxu0 %v1649
    %v1824 = vpop.f32.mrf.mxu0
    %v1825 = vadd.f32 0.0, %v1824
    %v1826 = vpop.f32.mrf.mxu0
    %v1827 = vpop.f32.mrf.mxu0
    %v1828 = vpop.f32.mrf.mxu0
    %1829 = vdwg.mxu0
    %1830 = vmatprep.subr.bf16.mxu0 0
    %1831 = vmatpush1.bf16.msra.mxu0 0
    %1832 = vmatprep.subr.bf16.mxu0 0
    %1833 = vmatpush1.bf16.msra.mxu0 0
    %1834 = vmatprep.subr.bf16.mxu0 0
    %1835 = vmatpush1.bf16.msra.mxu0 0
    %1836 = vmatprep.subr.bf16.mxu0 0
    %1837 = vmatpush1.bf16.msra.mxu0 0
    %1838 = vmatprep.subr.bf16.mxu0 0
    %1839 = vmatpush1.bf16.msra.mxu0 %v1765
    %1840 = vmatprep.subr.bf16.mxu0 0
    %1841 = vmatpush1.bf16.msra.mxu0 %v1764
    %1842 = vmatprep.subr.bf16.mxu0 0
    %1843 = vmatpush1.bf16.msra.mxu0 %v1763
    %1844 = vmatprep.subr.bf16.mxu0 0
    %1845 = vmatpush1.bf16.msra.mxu0 %v1762
    %1846 = vmatprep.subr.bf16.mxu0 0
    %1847 = vmatpush2.bf16.msra.mxu0 0
    %1848 = vmatprep.subr.bf16.mxu0 0
    %1849 = vmatpush2.bf16.msra.mxu0 0
    %1850 = vmatprep.subr.bf16.mxu0 0
    %1851 = vmatpush2.bf16.msra.mxu0 0
    %1852 = vmatprep.subr.bf16.mxu0 0
    %1853 = vmatpush2.bf16.msra.mxu0 0
    %1854 = vmatprep.subr.bf16.mxu0 0
    %1855 = vmatpush2.bf16.msra.mxu0 0
    %1856 = vmatprep.subr.bf16.mxu0 0
    %1857 = vmatpush2.bf16.msra.mxu0 0
    %1858 = vmatprep.subr.bf16.mxu0 0
    %1859 = vmatpush2.bf16.msra.mxu0 0
    %1860 = vmatprep.subr.bf16.mxu0 0
    %1861 = vmatpush2.bf16.msra.mxu0 0
    %1862 = vmatprep.mubr.bf16.mxu0 0
    %1863 = vmatmul.mubr.bf16.gmra.mxu0 %v1788
    %v1864 = vpop.f32.mrf.mxu0
    %v1865 = vadd.f32 %v1825, %v1864
    %v1866 = vpop.f32.mrf.mxu0
    %v1867 = vpop.f32.mrf.mxu0
    %v1868 = vpop.f32.mrf.mxu0
    %1869 = vdwg.mxu0
    %v1870 = vpack.c.b16 %v1634, %v1634
    %v1871 = vpack.c.b16 %v1635, %v1635
    %v1872 = vpack.c.b16 %v1636, %v1636
    %v1915 = vunpack.c.l.b16 %v1547
    %v1916 = vunpack.c.l.b16 %v1548
    %v1917 = vunpack.c.l.b16 %v1549
    %v1918 = vunpack.c.l.b16 %v1550
    %v1919 = vunpack.c.l.b16 %v1551
    %v1920 = vunpack.c.l.b16 %v1552
    %v1921 = vunpack.c.l.b16 %v1553
    %v1922 = vunpack.c.l.b16 %v1554
    %v1923 = vunpack.c.l.b16 %v1555
    %v1924 = vunpack.c.l.b16 %v1556
    %v1925 = vunpack.c.l.b16 %v1557
    %v1926 = vunpack.c.l.b16 %v1558
    %v1927 = vunpack.c.l.b16 %v1559
    %v1928 = vunpack.c.l.b16 %v1560
    %v1929 = vunpack.c.l.b16 %v1561
    %v1930 = vunpack.c.l.b16 %v1562
    %v1931 = vunpack.c.l.b16 %v1563
    %v1932 = vunpack.c.l.b16 %v1564
    %v1933 = vunpack.c.l.b16 %v1565
    %v1934 = vunpack.c.l.b16 %v1566
    %v1935 = vunpack.c.l.b16 %v1567
    %v1936 = vunpack.c.l.b16 %v1568
    %v1937 = vunpack.c.l.b16 %v1569
    %v1938 = vunpack.c.l.b16 %v1570
    %v1939 = vunpack.c.l.b16 %v1571
    %v1940 = vunpack.c.l.b16 %v1572
    %v1941 = vunpack.c.l.b16 %v1573
    %v1942 = vunpack.c.l.b16 %v1574
    %v1943 = vunpack.c.l.b16 %v1575
    %v1944 = vunpack.c.l.b16 %v1576
    %v1945 = vunpack.c.l.b16 %v1577
    %v1946 = vunpack.c.l.b16 %v1578
    %v1947 = vunpack.c.l.b16 %v1579
    %v1948 = vunpack.c.l.b16 %v1580
    %v1949 = vunpack.c.l.b16 %v1581
    %v1950 = vunpack.c.l.b16 %v1582
    %v1951 = vunpack.c.l.b16 %v1583
    %v1952 = vunpack.c.l.b16 %v1584
    %v1953 = vunpack.c.l.b16 %v1585
    %v1954 = vunpack.c.l.b16 %v1586
    %v1955 = vpack.c.b16 %v1916, %v1915
    %v1956 = vpack.c.b16 %v1918, %v1917
    %v1957 = vpack.c.b16 %v1920, %v1919
    %v1958 = vpack.c.b16 %v1922, %v1921
    %v1959 = vpack.c.b16 %v1924, %v1923
    %v1960 = vpack.c.b16 %v1926, %v1925
    %v1961 = vpack.c.b16 %v1928, %v1927
    %v1962 = vpack.c.b16 %v1930, %v1929
    %v1963 = vpack.c.b16 %v1932, %v1931
    %v1964 = vpack.c.b16 %v1934, %v1933
    %v1965 = vpack.c.b16 %v1936, %v1935
    %v1966 = vpack.c.b16 %v1938, %v1937
    %v1967 = vpack.c.b16 %v1940, %v1939
    %v1968 = vpack.c.b16 %v1942, %v1941
    %v1969 = vpack.c.b16 %v1944, %v1943
    %v1970 = vpack.c.b16 %v1946, %v1945
    %v1971 = vpack.c.b16 %v1948, %v1947
    %v1972 = vpack.c.b16 %v1950, %v1949
    %v1973 = vpack.c.b16 %v1952, %v1951
    %v1974 = vpack.c.b16 %v1954, %v1953
    %v1996 = vsel %vm1786, %v1872, 0
    %1998 = vmatprep.subr.bf16.mxu0 0
    %1999 = vmatpush1.bf16.msra.mxu0 %v1962
    %2000 = vmatprep.subr.bf16.mxu0 0
    %2001 = vmatpush1.bf16.msra.mxu0 %v1961
    %2002 = vmatprep.subr.bf16.mxu0 0
    %2003 = vmatpush1.bf16.msra.mxu0 %v1960
    %2004 = vmatprep.subr.bf16.mxu0 0
    %2005 = vmatpush1.bf16.msra.mxu0 %v1959
    %2006 = vmatprep.subr.bf16.mxu0 0
    %2007 = vmatpush1.bf16.msra.mxu0 %v1958
    %2008 = vmatprep.subr.bf16.mxu0 0
    %2009 = vmatpush1.bf16.msra.mxu0 %v1957
    %2010 = vmatprep.subr.bf16.mxu0 0
    %2011 = vmatpush1.bf16.msra.mxu0 %v1956
    %2012 = vmatprep.subr.bf16.mxu0 0
    %2013 = vmatpush1.bf16.msra.mxu0 %v1955
    %2014 = vmatprep.subr.bf16.mxu0 0
    %2015 = vmatpush2.bf16.msra.mxu0 %v1970
    %2016 = vmatprep.subr.bf16.mxu0 0
    %2017 = vmatpush2.bf16.msra.mxu0 %v1969
    %2018 = vmatprep.subr.bf16.mxu0 0
    %2019 = vmatpush2.bf16.msra.mxu0 %v1968
    %2020 = vmatprep.subr.bf16.mxu0 0
    %2021 = vmatpush2.bf16.msra.mxu0 %v1967
    %2022 = vmatprep.subr.bf16.mxu0 0
    %2023 = vmatpush2.bf16.msra.mxu0 %v1966
    %2024 = vmatprep.subr.bf16.mxu0 0
    %2025 = vmatpush2.bf16.msra.mxu0 %v1965
    %2026 = vmatprep.subr.bf16.mxu0 0
    %2027 = vmatpush2.bf16.msra.mxu0 %v1964
    %2028 = vmatprep.subr.bf16.mxu0 0
    %2029 = vmatpush2.bf16.msra.mxu0 %v1963
    %2030 = vmatprep.mubr.bf16.mxu0 %v1871
    %2031 = vmatmul.mubr.bf16.gmra.mxu0 %v1870
    %v2032 = vpop.f32.mrf.mxu0
    %v2033 = vadd.f32 %v1865, %v2032
    %v2034 = vpop.f32.mrf.mxu0
    %v2035 = vpop.f32.mrf.mxu0
    %v2036 = vpop.f32.mrf.mxu0
    %2037 = vdwg.mxu0
    %2038 = vmatprep.subr.bf16.mxu0 0
    %2039 = vmatpush1.bf16.msra.mxu0 0
    %2040 = vmatprep.subr.bf16.mxu0 0
    %2041 = vmatpush1.bf16.msra.mxu0 0
    %2042 = vmatprep.subr.bf16.mxu0 0
    %2043 = vmatpush1.bf16.msra.mxu0 0
    %2044 = vmatprep.subr.bf16.mxu0 0
    %2045 = vmatpush1.bf16.msra.mxu0 0
    %2046 = vmatprep.subr.bf16.mxu0 0
    %2047 = vmatpush1.bf16.msra.mxu0 %v1974
    %2048 = vmatprep.subr.bf16.mxu0 0
    %2049 = vmatpush1.bf16.msra.mxu0 %v1973
    %2050 = vmatprep.subr.bf16.mxu0 0
    %2051 = vmatpush1.bf16.msra.mxu0 %v1972
    %2052 = vmatprep.subr.bf16.mxu0 0
    %2053 = vmatpush1.bf16.msra.mxu0 %v1971
    %2054 = vmatprep.subr.bf16.mxu0 0
    %2055 = vmatpush2.bf16.msra.mxu0 0
    %2056 = vmatprep.subr.bf16.mxu0 0
    %2057 = vmatpush2.bf16.msra.mxu0 0
    %2058 = vmatprep.subr.bf16.mxu0 0
    %2059 = vmatpush2.bf16.msra.mxu0 0
    %2060 = vmatprep.subr.bf16.mxu0 0
    %2061 = vmatpush2.bf16.msra.mxu0 0
    %2062 = vmatprep.subr.bf16.mxu0 0
    %2063 = vmatpush2.bf16.msra.mxu0 0
    %2064 = vmatprep.subr.bf16.mxu0 0
    %2065 = vmatpush2.bf16.msra.mxu0 0
    %2066 = vmatprep.subr.bf16.mxu0 0
    %2067 = vmatpush2.bf16.msra.mxu0 0
    %2068 = vmatprep.subr.bf16.mxu0 0
    %2069 = vmatpush2.bf16.msra.mxu0 0
    %2070 = vmatprep.mubr.bf16.mxu0 0
    %2071 = vmatmul.mubr.bf16.gmra.mxu0 %v1996
    %v2072 = vpop.f32.mrf.mxu0
    %v2073 = vadd.f32 %v2033, %v2072
    %v2074 = vpop.f32.mrf.mxu0
    %v2075 = vpop.f32.mrf.mxu0
    %v2076 = vpop.f32.mrf.mxu0
    %2077 = vdwg.mxu0
    %v2078 = vld [vmem:[#allocation5] sm:$0xee]
    %v2079 = vld [vmem:[#allocation5 + $0x8] sm:$0xe]
    %s2080 = scalar_lea.vmem %s9, 320
    %v2081 = vld [vmem:[%s2080] sm:$0xf]
    %v2082 = vld [vmem:[%s2080 + $0x4] sm:$0xf]
    %v2083 = vld [vmem:[%s2080 + $0x8] sm:$0xf]
    %v2084 = vld [vmem:[%s2080 + $0xc] sm:$0xf]
    %v2085 = vld [vmem:[%s2080 + $0x10] sm:$0xf]
    %v2086 = vld [vmem:[%s2080 + $0x14] sm:$0xf]
    %v2087 = vld [vmem:[%s2080 + $0x18] sm:$0xf]
    %v2088 = vld [vmem:[%s2080 + $0x1c] sm:$0xf]
    %v2089 = vld [vmem:[%s2080 + $0x20] sm:$0xf]
    %v2090 = vld [vmem:[%s2080 + $0x24] sm:$0xf]
    %v2091 = vld [vmem:[%s2080 + $0x28] sm:$0xf]
    %v2092 = vld [vmem:[%s2080 + $0x2c] sm:$0xf]
    %v2093 = vld [vmem:[%s2080 + $0x30] sm:$0xf]
    %v2094 = vld [vmem:[%s2080 + $0x34] sm:$0xf]
    %v2095 = vld [vmem:[%s2080 + $0x38] sm:$0xf]
    %v2096 = vld [vmem:[%s2080 + $0x3c] sm:$0xf]
    %v2097 = vld [vmem:[%s2080 + $0x40] sm:$0xf]
    %v2098 = vld [vmem:[%s2080 + $0x44] sm:$0xf]
    %v2099 = vld [vmem:[%s2080 + $0x48] sm:$0xf]
    %v2100 = vld [vmem:[%s2080 + $0x4c] sm:$0xf]
    %v2101 = vld [vmem:[%s2080 + $0x50] sm:$0xf]
    %v2102 = vld [vmem:[%s2080 + $0x54] sm:$0xf]
    %v2103 = vld [vmem:[%s2080 + $0x58] sm:$0xf]
    %v2104 = vld [vmem:[%s2080 + $0x5c] sm:$0xf]
    %v2105 = vld [vmem:[%s2080 + $0x60] sm:$0xf]
    %v2106 = vld [vmem:[%s2080 + $0x64] sm:$0xf]
    %v2107 = vld [vmem:[%s2080 + $0x68] sm:$0xf]
    %v2108 = vld [vmem:[%s2080 + $0x6c] sm:$0xf]
    %v2109 = vld [vmem:[%s2080 + $0x70] sm:$0xf]
    %v2110 = vld [vmem:[%s2080 + $0x74] sm:$0xf]
    %v2111 = vld [vmem:[%s2080 + $0x78] sm:$0xf]
    %v2112 = vld [vmem:[%s2080 + $0x7c] sm:$0xf]
    %v2113 = vld [vmem:[%s2080 + $0x80] sm:$0xf]
    %v2114 = vld [vmem:[%s2080 + $0x84] sm:$0xf]
    %v2115 = vld [vmem:[%s2080 + $0x88] sm:$0xf]
    %v2116 = vld [vmem:[%s2080 + $0x8c] sm:$0xf]
    %v2117 = vld [vmem:[%s2080 + $0x90] sm:$0xf]
    %v2118 = vld [vmem:[%s2080 + $0x94] sm:$0xf]
    %v2119 = vld [vmem:[%s2080 + $0x98] sm:$0xf]
    %v2120 = vld [vmem:[%s2080 + $0x9c] sm:$0xf]
    %v2123 = vunpack.c.l.b16 %v2078
    %v2124 = vunpack.c.h.b16 %v2078
    %v2125 = vunpack.c.l.b16 %v2079
    %v2126 = vpack.c.b16 %v1637, %v2123
    %v2127 = vpack.c.b16 %v1638, %v2124
    %v2128 = vpack.c.b16 %v1639, %v2125
    %v2129 = vrot.slane %v2126, 1
    %v2130 = vrot.slane %v2127, 1
    %v2131 = vrot.slane %v2128, 1
    %v2174 = vunpack.c.l.b16 %v2081
    %v2175 = vunpack.c.l.b16 %v2082
    %v2176 = vunpack.c.l.b16 %v2083
    %v2177 = vunpack.c.l.b16 %v2084
    %v2178 = vunpack.c.l.b16 %v2085
    %v2179 = vunpack.c.l.b16 %v2086
    %v2180 = vunpack.c.l.b16 %v2087
    %v2181 = vunpack.c.l.b16 %v2088
    %v2182 = vunpack.c.l.b16 %v2089
    %v2183 = vunpack.c.l.b16 %v2090
    %v2184 = vunpack.c.l.b16 %v2091
    %v2185 = vunpack.c.l.b16 %v2092
    %v2186 = vunpack.c.l.b16 %v2093
    %v2187 = vunpack.c.l.b16 %v2094
    %v2188 = vunpack.c.l.b16 %v2095
    %v2189 = vunpack.c.l.b16 %v2096
    %v2190 = vunpack.c.l.b16 %v2097
    %v2191 = vunpack.c.l.b16 %v2098
    %v2192 = vunpack.c.l.b16 %v2099
    %v2193 = vunpack.c.l.b16 %v2100
    %v2194 = vunpack.c.l.b16 %v2101
    %v2195 = vunpack.c.l.b16 %v2102
    %v2196 = vunpack.c.l.b16 %v2103
    %v2197 = vunpack.c.l.b16 %v2104
    %v2198 = vunpack.c.l.b16 %v2105
    %v2199 = vunpack.c.l.b16 %v2106
    %v2200 = vunpack.c.l.b16 %v2107
    %v2201 = vunpack.c.l.b16 %v2108
    %v2202 = vunpack.c.l.b16 %v2109
    %v2203 = vunpack.c.l.b16 %v2110
    %v2204 = vunpack.c.l.b16 %v2111
    %v2205 = vunpack.c.l.b16 %v2112
    %v2206 = vunpack.c.l.b16 %v2113
    %v2207 = vunpack.c.l.b16 %v2114
    %v2208 = vunpack.c.l.b16 %v2115
    %v2209 = vunpack.c.l.b16 %v2116
    %v2210 = vunpack.c.l.b16 %v2117
    %v2211 = vunpack.c.l.b16 %v2118
    %v2212 = vunpack.c.l.b16 %v2119
    %v2213 = vunpack.c.l.b16 %v2120
    %v2214 = vpack.c.b16 %v2175, %v2174
    %v2215 = vpack.c.b16 %v2177, %v2176
    %v2216 = vpack.c.b16 %v2179, %v2178
    %v2217 = vpack.c.b16 %v2181, %v2180
    %v2218 = vpack.c.b16 %v2183, %v2182
    %v2219 = vpack.c.b16 %v2185, %v2184
    %v2220 = vpack.c.b16 %v2187, %v2186
    %v2221 = vpack.c.b16 %v2189, %v2188
    %v2222 = vpack.c.b16 %v2191, %v2190
    %v2223 = vpack.c.b16 %v2193, %v2192
    %v2224 = vpack.c.b16 %v2195, %v2194
    %v2225 = vpack.c.b16 %v2197, %v2196
    %v2226 = vpack.c.b16 %v2199, %v2198
    %v2227 = vpack.c.b16 %v2201, %v2200
    %v2228 = vpack.c.b16 %v2203, %v2202
    %v2229 = vpack.c.b16 %v2205, %v2204
    %v2230 = vpack.c.b16 %v2207, %v2206
    %v2231 = vpack.c.b16 %v2209, %v2208
    %v2232 = vpack.c.b16 %v2211, %v2210
    %v2233 = vpack.c.b16 %v2213, %v2212
    %v2255 = vsel %vm1786, %v2131, 0
    %2257 = vmatprep.subr.bf16.mxu0 0
    %2258 = vmatpush1.bf16.msra.mxu0 %v2221
    %2259 = vmatprep.subr.bf16.mxu0 0
    %2260 = vmatpush1.bf16.msra.mxu0 %v2220
    %2261 = vmatprep.subr.bf16.mxu0 0
    %2262 = vmatpush1.bf16.msra.mxu0 %v2219
    %2263 = vmatprep.subr.bf16.mxu0 0
    %2264 = vmatpush1.bf16.msra.mxu0 %v2218
    %2265 = vmatprep.subr.bf16.mxu0 0
    %2266 = vmatpush1.bf16.msra.mxu0 %v2217
    %2267 = vmatprep.subr.bf16.mxu0 0
    %2268 = vmatpush1.bf16.msra.mxu0 %v2216
    %2269 = vmatprep.subr.bf16.mxu0 0
    %2270 = vmatpush1.bf16.msra.mxu0 %v2215
    %2271 = vmatprep.subr.bf16.mxu0 0
    %2272 = vmatpush1.bf16.msra.mxu0 %v2214
    %2273 = vmatprep.subr.bf16.mxu0 0
    %2274 = vmatpush2.bf16.msra.mxu0 %v2229
    %2275 = vmatprep.subr.bf16.mxu0 0
    %2276 = vmatpush2.bf16.msra.mxu0 %v2228
    %2277 = vmatprep.subr.bf16.mxu0 0
    %2278 = vmatpush2.bf16.msra.mxu0 %v2227
    %2279 = vmatprep.subr.bf16.mxu0 0
    %2280 = vmatpush2.bf16.msra.mxu0 %v2226
    %2281 = vmatprep.subr.bf16.mxu0 0
    %2282 = vmatpush2.bf16.msra.mxu0 %v2225
    %2283 = vmatprep.subr.bf16.mxu0 0
    %2284 = vmatpush2.bf16.msra.mxu0 %v2224
    %2285 = vmatprep.subr.bf16.mxu0 0
    %2286 = vmatpush2.bf16.msra.mxu0 %v2223
    %2287 = vmatprep.subr.bf16.mxu0 0
    %2288 = vmatpush2.bf16.msra.mxu0 %v2222
    %2289 = vmatprep.mubr.bf16.mxu0 %v2130
    %2290 = vmatmul.mubr.bf16.gmra.mxu0 %v2129
    %v2291 = vpop.f32.mrf.mxu0
    %v2292 = vadd.f32 0.0, %v2291
    %v2293 = vpop.f32.mrf.mxu0
    %v2294 = vpop.f32.mrf.mxu0
    %v2295 = vpop.f32.mrf.mxu0
    %2296 = vdwg.mxu0
    %2297 = vmatprep.subr.bf16.mxu0 0
    %2298 = vmatpush1.bf16.msra.mxu0 0
    %2299 = vmatprep.subr.bf16.mxu0 0
    %2300 = vmatpush1.bf16.msra.mxu0 0
    %2301 = vmatprep.subr.bf16.mxu0 0
    %2302 = vmatpush1.bf16.msra.mxu0 0
    %2303 = vmatprep.subr.bf16.mxu0 0
    %2304 = vmatpush1.bf16.msra.mxu0 0
    %2305 = vmatprep.subr.bf16.mxu0 0
    %2306 = vmatpush1.bf16.msra.mxu0 %v2233
    %2307 = vmatprep.subr.bf16.mxu0 0
    %2308 = vmatpush1.bf16.msra.mxu0 %v2232
    %2309 = vmatprep.subr.bf16.mxu0 0
    %2310 = vmatpush1.bf16.msra.mxu0 %v2231
    %2311 = vmatprep.subr.bf16.mxu0 0
    %2312 = vmatpush1.bf16.msra.mxu0 %v2230
    %2313 = vmatprep.subr.bf16.mxu0 0
    %2314 = vmatpush2.bf16.msra.mxu0 0
    %2315 = vmatprep.subr.bf16.mxu0 0
    %2316 = vmatpush2.bf16.msra.mxu0 0
    %2317 = vmatprep.subr.bf16.mxu0 0
    %2318 = vmatpush2.bf16.msra.mxu0 0
    %2319 = vmatprep.subr.bf16.mxu0 0
    %2320 = vmatpush2.bf16.msra.mxu0 0
    %2321 = vmatprep.subr.bf16.mxu0 0
    %2322 = vmatpush2.bf16.msra.mxu0 0
    %2323 = vmatprep.subr.bf16.mxu0 0
    %2324 = vmatpush2.bf16.msra.mxu0 0
    %2325 = vmatprep.subr.bf16.mxu0 0
    %2326 = vmatpush2.bf16.msra.mxu0 0
    %2327 = vmatprep.subr.bf16.mxu0 0
    %2328 = vmatpush2.bf16.msra.mxu0 0
    %2329 = vmatprep.mubr.bf16.mxu0 0
    %2330 = vmatmul.mubr.bf16.gmra.mxu0 %v2255
    %v2331 = vpop.f32.mrf.mxu0
    %v2332 = vadd.f32 %v2292, %v2331
    %v2333 = vpop.f32.mrf.mxu0
    %v2334 = vpop.f32.mrf.mxu0
    %v2335 = vpop.f32.mrf.mxu0
    %2336 = vdwg.mxu0
    %v2337 = vadd.f32 %v2073, %v2332
    %v2338 = vld [vmem:[%s10] sm:$0x1]
    %v2340 = vlaneseq
    %v2341 = vshrl.u32 %v2340, 7
    %v2342 = vsub.s32 0, %v2341
    %v2343 = vrot.slane %v2338, %v2342
    %v2345 = vadd.f32 %v2337, %v2343
    %v2346 = vmax.f32 %v2345, 0.0
    %2347 = vst.msk [vmem:[#allocation6] sm:$0xff] %vm1107, %v2346
    %s2348 = scalar_lea.vmem %s0, 16
    %v2349 = vld [vmem:[%s2348] sm:$0xff]
    %v2350 = vld [vmem:[%s1] sm:$0xf]
    %v2351 = vld [vmem:[%s1 + $0x4] sm:$0xf]
    %v2352 = vld [vmem:[%s1 + $0x8] sm:$0xf]
    %v2353 = vld [vmem:[%s1 + $0xc] sm:$0xf]
    %v2354 = vld [vmem:[%s1 + $0x10] sm:$0xf]
    %v2355 = vld [vmem:[%s1 + $0x14] sm:$0xf]
    %v2356 = vld [vmem:[%s1 + $0x18] sm:$0xf]
    %v2357 = vld [vmem:[%s1 + $0x1c] sm:$0xf]
    %v2358 = vld [vmem:[%s1 + $0x20] sm:$0xf]
    %v2359 = vld [vmem:[%s1 + $0x24] sm:$0xf]
    %v2360 = vld [vmem:[%s1 + $0x28] sm:$0xf]
    %v2361 = vld [vmem:[%s1 + $0x2c] sm:$0xf]
    %v2362 = vld [vmem:[%s1 + $0x30] sm:$0xf]
    %v2363 = vld [vmem:[%s1 + $0x34] sm:$0xf]
    %v2364 = vld [vmem:[%s1 + $0x38] sm:$0xf]
    %v2365 = vld [vmem:[%s1 + $0x3c] sm:$0xf]
    %v2366 = vld [vmem:[%s1 + $0x40] sm:$0xf]
    %v2367 = vld [vmem:[%s1 + $0x44] sm:$0xf]
    %v2368 = vld [vmem:[%s2348 + $0x8] sm:$0x11]
    %v2369 = vld [vmem:[%s82] sm:$0xf]
    %v2370 = vld [vmem:[%s82 + $0x4] sm:$0xf]
    %v2371 = vld [vmem:[%s82 + $0x8] sm:$0xf]
    %v2372 = vld [vmem:[%s82 + $0xc] sm:$0xf]
    %v2373 = vld [vmem:[%s82 + $0x10] sm:$0xf]
    %v2374 = vld [vmem:[%s82 + $0x14] sm:$0xf]
    %v2375 = vld [vmem:[%s82 + $0x18] sm:$0xf]
    %v2376 = vld [vmem:[%s82 + $0x1c] sm:$0xf]
    %v2377 = vld [vmem:[%s82 + $0x20] sm:$0xf]
    %v2378 = vld [vmem:[%s82 + $0x24] sm:$0xf]
    %v2379 = vld [vmem:[%s82 + $0x28] sm:$0xf]
    %v2380 = vld [vmem:[%s82 + $0x2c] sm:$0xf]
    %v2381 = vld [vmem:[%s82 + $0x30] sm:$0xf]
    %v2382 = vld [vmem:[%s82 + $0x34] sm:$0xf]
    %v2383 = vld [vmem:[%s82 + $0x38] sm:$0xf]
    %v2384 = vld [vmem:[%s82 + $0x3c] sm:$0xf]
    %v2385 = vld [vmem:[%s82 + $0x40] sm:$0xf]
    %v2386 = vld [vmem:[%s82 + $0x44] sm:$0xf]
    %v2389 = vunpack.c.l.b16 %v2349
    %v2390 = vunpack.c.h.b16 %v2349
    %v2391 = vunpack.c.l.b16 %v2368
    %v2392 = vunpack.c.h.b16 %v2368
    %v2393 = vpack.c.b16 %v2391, %v2389
    %v2394 = vpack.c.b16 %v2392, %v2390
    %v2396 = vshrl.u32 %v2393, 16
    %v2398 = vshll.u32 %v2393, 16
    %v2400 = vrot.slane %v2398, 1
    %v2401 = vor.u32 %v2396, %v2400
    %v2403 = vshrl.u32 %v2394, 16
    %v2405 = vshll.u32 %v2394, 16
    %v2407 = vrot.slane %v2405, 1
    %v2408 = vor.u32 %v2403, %v2407
    %v2428 = vunpack.c.l.b16 %v2369
    %v2429 = vunpack.c.l.b16 %v2370
    %v2430 = vunpack.c.l.b16 %v2371
    %v2431 = vunpack.c.l.b16 %v2372
    %v2432 = vunpack.c.l.b16 %v2373
    %v2433 = vunpack.c.l.b16 %v2374
    %v2434 = vunpack.c.l.b16 %v2375
    %v2435 = vunpack.c.l.b16 %v2376
    %v2436 = vunpack.c.l.b16 %v2377
    %v2437 = vunpack.c.l.b16 %v2378
    %v2438 = vunpack.c.l.b16 %v2379
    %v2439 = vunpack.c.l.b16 %v2380
    %v2440 = vunpack.c.l.b16 %v2381
    %v2441 = vunpack.c.l.b16 %v2382
    %v2442 = vunpack.c.l.b16 %v2383
    %v2443 = vunpack.c.l.b16 %v2384
    %v2444 = vunpack.c.l.b16 %v2385
    %v2445 = vunpack.c.l.b16 %v2386
    %v2446 = vpack.c.b16 %v2429, %v2428
    %v2447 = vpack.c.b16 %v2431, %v2430
    %v2448 = vpack.c.b16 %v2433, %v2432
    %v2449 = vpack.c.b16 %v2435, %v2434
    %v2450 = vpack.c.b16 %v2437, %v2436
    %v2451 = vpack.c.b16 %v2439, %v2438
    %v2452 = vpack.c.b16 %v2441, %v2440
    %v2453 = vpack.c.b16 %v2443, %v2442
    %v2454 = vpack.c.b16 %v2445, %v2444
    %v2465 = vsel %vm178, %v2408, 0
    %2467 = vmatprep.subr.bf16.mxu0 0
    %2468 = vmatpush1.bf16.msra.mxu0 %v2453
    %2469 = vmatprep.subr.bf16.mxu0 0
    %2470 = vmatpush1.bf16.msra.mxu0 %v2452
    %2471 = vmatprep.subr.bf16.mxu0 0
    %2472 = vmatpush1.bf16.msra.mxu0 %v2451
    %2473 = vmatprep.subr.bf16.mxu0 0
    %2474 = vmatpush1.bf16.msra.mxu0 %v2450
    %2475 = vmatprep.subr.bf16.mxu0 0
    %2476 = vmatpush1.bf16.msra.mxu0 %v2449
    %2477 = vmatprep.subr.bf16.mxu0 0
    %2478 = vmatpush1.bf16.msra.mxu0 %v2448
    %2479 = vmatprep.subr.bf16.mxu0 0
    %2480 = vmatpush1.bf16.msra.mxu0 %v2447
    %2481 = vmatprep.subr.bf16.mxu0 0
    %2482 = vmatpush1.bf16.msra.mxu0 %v2446
    %2483 = vmatprep.subr.bf16.mxu0 0
    %2484 = vmatpush2.bf16.msra.mxu0 0
    %2485 = vmatprep.subr.bf16.mxu0 0
    %2486 = vmatpush2.bf16.msra.mxu0 0
    %2487 = vmatprep.subr.bf16.mxu0 0
    %2488 = vmatpush2.bf16.msra.mxu0 0
    %2489 = vmatprep.subr.bf16.mxu0 0
    %2490 = vmatpush2.bf16.msra.mxu0 0
    %2491 = vmatprep.subr.bf16.mxu0 0
    %2492 = vmatpush2.bf16.msra.mxu0 0
    %2493 = vmatprep.subr.bf16.mxu0 0
    %2494 = vmatpush2.bf16.msra.mxu0 0
    %2495 = vmatprep.subr.bf16.mxu0 0
    %2496 = vmatpush2.bf16.msra.mxu0 0
    %2497 = vmatprep.subr.bf16.mxu0 0
    %2498 = vmatpush2.bf16.msra.mxu0 %v2454
    %2499 = vmatprep.mubr.bf16.mxu0 %v2465
    %2500 = vmatmul.mubr.bf16.gmra.mxu0 %v2401
    %v2501 = vpop.f32.mrf.mxu0
    %v2502 = vadd.f32 0.0, %v2501
    %v2503 = vpop.f32.mrf.mxu0
    %v2504 = vpop.f32.mrf.mxu0
    %v2505 = vpop.f32.mrf.mxu0
    %2506 = vdwg.mxu0
    %v2507 = vpack.c.b16 %v2389, %v2389
    %v2508 = vpack.c.b16 %v2390, %v2390
    %v2528 = vunpack.c.l.b16 %v2350
    %v2529 = vunpack.c.l.b16 %v2351
    %v2530 = vunpack.c.l.b16 %v2352
    %v2531 = vunpack.c.l.b16 %v2353
    %v2532 = vunpack.c.l.b16 %v2354
    %v2533 = vunpack.c.l.b16 %v2355
    %v2534 = vunpack.c.l.b16 %v2356
    %v2535 = vunpack.c.l.b16 %v2357
    %v2536 = vunpack.c.l.b16 %v2358
    %v2537 = vunpack.c.l.b16 %v2359
    %v2538 = vunpack.c.l.b16 %v2360
    %v2539 = vunpack.c.l.b16 %v2361
    %v2540 = vunpack.c.l.b16 %v2362
    %v2541 = vunpack.c.l.b16 %v2363
    %v2542 = vunpack.c.l.b16 %v2364
    %v2543 = vunpack.c.l.b16 %v2365
    %v2544 = vunpack.c.l.b16 %v2366
    %v2545 = vunpack.c.l.b16 %v2367
    %v2546 = vpack.c.b16 %v2529, %v2528
    %v2547 = vpack.c.b16 %v2531, %v2530
    %v2548 = vpack.c.b16 %v2533, %v2532
    %v2549 = vpack.c.b16 %v2535, %v2534
    %v2550 = vpack.c.b16 %v2537, %v2536
    %v2551 = vpack.c.b16 %v2539, %v2538
    %v2552 = vpack.c.b16 %v2541, %v2540
    %v2553 = vpack.c.b16 %v2543, %v2542
    %v2554 = vpack.c.b16 %v2545, %v2544
    %v2565 = vsel %vm178, %v2508, 0
    %2567 = vmatprep.subr.bf16.mxu0 0
    %2568 = vmatpush1.bf16.msra.mxu0 %v2553
    %2569 = vmatprep.subr.bf16.mxu0 0
    %2570 = vmatpush1.bf16.msra.mxu0 %v2552
    %2571 = vmatprep.subr.bf16.mxu0 0
    %2572 = vmatpush1.bf16.msra.mxu0 %v2551
    %2573 = vmatprep.subr.bf16.mxu0 0
    %2574 = vmatpush1.bf16.msra.mxu0 %v2550
    %2575 = vmatprep.subr.bf16.mxu0 0
    %2576 = vmatpush1.bf16.msra.mxu0 %v2549
    %2577 = vmatprep.subr.bf16.mxu0 0
    %2578 = vmatpush1.bf16.msra.mxu0 %v2548
    %2579 = vmatprep.subr.bf16.mxu0 0
    %2580 = vmatpush1.bf16.msra.mxu0 %v2547
    %2581 = vmatprep.subr.bf16.mxu0 0
    %2582 = vmatpush1.bf16.msra.mxu0 %v2546
    %2583 = vmatprep.subr.bf16.mxu0 0
    %2584 = vmatpush2.bf16.msra.mxu0 0
    %2585 = vmatprep.subr.bf16.mxu0 0
    %2586 = vmatpush2.bf16.msra.mxu0 0
    %2587 = vmatprep.subr.bf16.mxu0 0
    %2588 = vmatpush2.bf16.msra.mxu0 0
    %2589 = vmatprep.subr.bf16.mxu0 0
    %2590 = vmatpush2.bf16.msra.mxu0 0
    %2591 = vmatprep.subr.bf16.mxu0 0
    %2592 = vmatpush2.bf16.msra.mxu0 0
    %2593 = vmatprep.subr.bf16.mxu0 0
    %2594 = vmatpush2.bf16.msra.mxu0 0
    %2595 = vmatprep.subr.bf16.mxu0 0
    %2596 = vmatpush2.bf16.msra.mxu0 0
    %2597 = vmatprep.subr.bf16.mxu0 0
    %2598 = vmatpush2.bf16.msra.mxu0 %v2554
    %2599 = vmatprep.mubr.bf16.mxu0 %v2565
    %2600 = vmatmul.mubr.bf16.gmra.mxu0 %v2507
    %v2601 = vpop.f32.mrf.mxu0
    %v2602 = vadd.f32 %v2502, %v2601
    %v2603 = vpop.f32.mrf.mxu0
    %v2604 = vpop.f32.mrf.mxu0
    %v2605 = vpop.f32.mrf.mxu0
    %2606 = vdwg.mxu0
    %v2607 = vld [vmem:[%s2] sm:$0x1]
    %v2609 = vlaneseq
    %v2610 = vshrl.u32 %v2609, 7
    %v2611 = vsub.s32 0, %v2610
    %v2612 = vrot.slane %v2607, %v2611
    %v2614 = vadd.f32 %v2602, %v2612
    %v2615 = vmax.f32 %v2614, 0.0
    %v2616 = vpack.c.bf16 %v2615, %v2615
    %v2618 = vunpack.c.l.b16 %v2616
    %v2619 = vpack.c.b16 %v2618, %v2618
    %v2621 = vshrl.u32 %v2619, 16
    %v2623 = vrot.slane %v2621, 7
    %v2624 = vshll.u32 %v2619, 16
    %v2626 = vor.u32 %v2623, %v2624
    %v2627 = vrot.slane %v2623, 4
    %2628 = vrot.lane.b32.xlu0 %v2626, 4
    %v2629 = vpop.permute.xlu0 %2628
    %2630 = vrot.lane.b32.xlu0 %v2627, 4
    %v2631 = vpop.permute.xlu0 %2630
    %v2634 = vld [vmem:[#allocation2] sm:$0xf]
    %v2635 = vsel %vm351, %v2629, %v2634
    %2636 = vst [vmem:[#allocation2] sm:$0xf] %v2635
    %v2637 = vld [vmem:[#allocation2 + $0x4] sm:$0x1]
    %v2638 = vsel %vm357, %v2631, %v2637
    %2639 = vst [vmem:[#allocation2 + $0x4] sm:$0x1] %v2638
    %v2640 = vld [vmem:[#allocation2] sm:$0xf]
    %v2641 = vld [vmem:[%s3] sm:$0xf]
    %v2642 = vld [vmem:[%s3 + $0x4] sm:$0xf]
    %v2643 = vld [vmem:[%s3 + $0x8] sm:$0xf]
    %v2644 = vld [vmem:[%s3 + $0xc] sm:$0xf]
    %v2645 = vld [vmem:[%s3 + $0x10] sm:$0xf]
    %v2646 = vld [vmem:[#allocation2 + $0x4] sm:$0x1]
    %v2647 = vld [vmem:[%s368] sm:$0xf]
    %v2648 = vld [vmem:[%s368 + $0x4] sm:$0xf]
    %v2649 = vld [vmem:[%s368 + $0x8] sm:$0xf]
    %v2650 = vld [vmem:[%s368 + $0xc] sm:$0xf]
    %v2651 = vld [vmem:[%s368 + $0x10] sm:$0xf]
    %v2654 = vunpack.c.l.b16 %v2640
    %v2655 = vunpack.c.l.b16 %v2646
    %v2656 = vpack.c.b16 %v2655, %v2654
    %v2658 = vshrl.u32 %v2656, 16
    %v2660 = vshll.u32 %v2656, 16
    %v2662 = vrot.slane %v2660, 1
    %v2663 = vor.u32 %v2658, %v2662
    %v2669 = vunpack.c.l.b16 %v2647
    %v2670 = vunpack.c.l.b16 %v2648
    %v2671 = vunpack.c.l.b16 %v2649
    %v2672 = vunpack.c.l.b16 %v2650
    %v2673 = vunpack.c.l.b16 %v2651
    %v2674 = vpack.c.b16 %v2670, %v2669
    %v2675 = vpack.c.b16 %v2672, %v2671
    %v2676 = vpack.c.b16 %v2673, %v2673
    %v2680 = vsel %vm401, %v2663, 0
    %v2683 = vsel %vm48, %v2676, 0
    %2685 = vmatprep.subr.bf16.mxu0 0
    %2686 = vmatpush1.bf16.msra.mxu0 0
    %2687 = vmatprep.subr.bf16.mxu0 0
    %2688 = vmatpush1.bf16.msra.mxu0 0
    %2689 = vmatprep.subr.bf16.mxu0 0
    %2690 = vmatpush1.bf16.msra.mxu0 0
    %2691 = vmatprep.subr.bf16.mxu0 0
    %2692 = vmatpush1.bf16.msra.mxu0 0
    %2693 = vmatprep.subr.bf16.mxu0 0
    %2694 = vmatpush1.bf16.msra.mxu0 0
    %2695 = vmatprep.subr.bf16.mxu0 0
    %2696 = vmatpush1.bf16.msra.mxu0 %v2683
    %2697 = vmatprep.subr.bf16.mxu0 0
    %2698 = vmatpush1.bf16.msra.mxu0 %v2675
    %2699 = vmatprep.subr.bf16.mxu0 0
    %2700 = vmatpush1.bf16.msra.mxu0 %v2674
    %2701 = vmatprep.subr.bf16.mxu0 0
    %2702 = vmatpush2.bf16.msra.mxu0 0
    %2703 = vmatprep.subr.bf16.mxu0 0
    %2704 = vmatpush2.bf16.msra.mxu0 0
    %2705 = vmatprep.subr.bf16.mxu0 0
    %2706 = vmatpush2.bf16.msra.mxu0 0
    %2707 = vmatprep.subr.bf16.mxu0 0
    %2708 = vmatpush2.bf16.msra.mxu0 0
    %2709 = vmatprep.subr.bf16.mxu0 0
    %2710 = vmatpush2.bf16.msra.mxu0 0
    %2711 = vmatprep.subr.bf16.mxu0 0
    %2712 = vmatpush2.bf16.msra.mxu0 0
    %2713 = vmatprep.subr.bf16.mxu0 0
    %2714 = vmatpush2.bf16.msra.mxu0 0
    %2715 = vmatprep.subr.bf16.mxu0 0
    %2716 = vmatpush2.bf16.msra.mxu0 0
    %2717 = vmatprep.mubr.bf16.mxu0 0
    %2718 = vmatmul.mubr.bf16.gmra.mxu0 %v2680
    %v2719 = vpop.f32.mrf.mxu0
    %v2720 = vadd.f32 0.0, %v2719
    %v2721 = vpop.f32.mrf.mxu0
    %v2722 = vpop.f32.mrf.mxu0
    %v2723 = vpop.f32.mrf.mxu0
    %2724 = vdwg.mxu0
    %v2730 = vunpack.c.l.b16 %v2641
    %v2731 = vunpack.c.l.b16 %v2642
    %v2732 = vunpack.c.l.b16 %v2643
    %v2733 = vunpack.c.l.b16 %v2644
    %v2734 = vunpack.c.l.b16 %v2645
    %v2735 = vpack.c.b16 %v2731, %v2730
    %v2736 = vpack.c.b16 %v2733, %v2732
    %v2737 = vpack.c.b16 %v2734, %v2734
    %v2741 = vsel %vm401, %v2640, 0
    %v2744 = vsel %vm48, %v2737, 0
    %2746 = vmatprep.subr.bf16.mxu0 0
    %2747 = vmatpush1.bf16.msra.mxu0 0
    %2748 = vmatprep.subr.bf16.mxu0 0
    %2749 = vmatpush1.bf16.msra.mxu0 0
    %2750 = vmatprep.subr.bf16.mxu0 0
    %2751 = vmatpush1.bf16.msra.mxu0 0
    %2752 = vmatprep.subr.bf16.mxu0 0
    %2753 = vmatpush1.bf16.msra.mxu0 0
    %2754 = vmatprep.subr.bf16.mxu0 0
    %2755 = vmatpush1.bf16.msra.mxu0 0
    %2756 = vmatprep.subr.bf16.mxu0 0
    %2757 = vmatpush1.bf16.msra.mxu0 %v2744
    %2758 = vmatprep.subr.bf16.mxu0 0
    %2759 = vmatpush1.bf16.msra.mxu0 %v2736
    %2760 = vmatprep.subr.bf16.mxu0 0
    %2761 = vmatpush1.bf16.msra.mxu0 %v2735
    %2762 = vmatprep.subr.bf16.mxu0 0
    %2763 = vmatpush2.bf16.msra.mxu0 0
    %2764 = vmatprep.subr.bf16.mxu0 0
    %2765 = vmatpush2.bf16.msra.mxu0 0
    %2766 = vmatprep.subr.bf16.mxu0 0
    %2767 = vmatpush2.bf16.msra.mxu0 0
    %2768 = vmatprep.subr.bf16.mxu0 0
    %2769 = vmatpush2.bf16.msra.mxu0 0
    %2770 = vmatprep.subr.bf16.mxu0 0
    %2771 = vmatpush2.bf16.msra.mxu0 0
    %2772 = vmatprep.subr.bf16.mxu0 0
    %2773 = vmatpush2.bf16.msra.mxu0 0
    %2774 = vmatprep.subr.bf16.mxu0 0
    %2775 = vmatpush2.bf16.msra.mxu0 0
    %2776 = vmatprep.subr.bf16.mxu0 0
    %2777 = vmatpush2.bf16.msra.mxu0 0
    %2778 = vmatprep.mubr.bf16.mxu0 0
    %2779 = vmatmul.mubr.bf16.gmra.mxu0 %v2741
    %v2780 = vpop.f32.mrf.mxu0
    %v2781 = vadd.f32 %v2720, %v2780
    %v2782 = vpop.f32.mrf.mxu0
    %v2783 = vpop.f32.mrf.mxu0
    %v2784 = vpop.f32.mrf.mxu0
    %2785 = vdwg.mxu0
    %v2786 = vld [vmem:[#allocation2] sm:$0xe]
    %v2787 = vld [vmem:[%s510] sm:$0xf]
    %v2788 = vld [vmem:[%s510 + $0x4] sm:$0xf]
    %v2789 = vld [vmem:[%s510 + $0x8] sm:$0xf]
    %v2790 = vld [vmem:[%s510 + $0xc] sm:$0xf]
    %v2791 = vld [vmem:[%s510 + $0x10] sm:$0xf]
    %v2793 = vunpack.c.l.b16 %v2786
    %v2794 = vpack.c.b16 %v2655, %v2793
    %v2795 = vrot.slane %v2794, 1
    %v2801 = vunpack.c.l.b16 %v2787
    %v2802 = vunpack.c.l.b16 %v2788
    %v2803 = vunpack.c.l.b16 %v2789
    %v2804 = vunpack.c.l.b16 %v2790
    %v2805 = vunpack.c.l.b16 %v2791
    %v2806 = vpack.c.b16 %v2802, %v2801
    %v2807 = vpack.c.b16 %v2804, %v2803
    %v2808 = vpack.c.b16 %v2805, %v2805
    %v2812 = vsel %vm401, %v2795, 0
    %v2815 = vsel %vm48, %v2808, 0
    %2817 = vmatprep.subr.bf16.mxu0 0
    %2818 = vmatpush1.bf16.msra.mxu0 0
    %2819 = vmatprep.subr.bf16.mxu0 0
    %2820 = vmatpush1.bf16.msra.mxu0 0
    %2821 = vmatprep.subr.bf16.mxu0 0
    %2822 = vmatpush1.bf16.msra.mxu0 0
    %2823 = vmatprep.subr.bf16.mxu0 0
    %2824 = vmatpush1.bf16.msra.mxu0 0
    %2825 = vmatprep.subr.bf16.mxu0 0
    %2826 = vmatpush1.bf16.msra.mxu0 0
    %2827 = vmatprep.subr.bf16.mxu0 0
    %2828 = vmatpush1.bf16.msra.mxu0 %v2815
    %2829 = vmatprep.subr.bf16.mxu0 0
    %2830 = vmatpush1.bf16.msra.mxu0 %v2807
    %2831 = vmatprep.subr.bf16.mxu0 0
    %2832 = vmatpush1.bf16.msra.mxu0 %v2806
    %2833 = vmatprep.subr.bf16.mxu0 0
    %2834 = vmatpush2.bf16.msra.mxu0 0
    %2835 = vmatprep.subr.bf16.mxu0 0
    %2836 = vmatpush2.bf16.msra.mxu0 0
    %2837 = vmatprep.subr.bf16.mxu0 0
    %2838 = vmatpush2.bf16.msra.mxu0 0
    %2839 = vmatprep.subr.bf16.mxu0 0
    %2840 = vmatpush2.bf16.msra.mxu0 0
    %2841 = vmatprep.subr.bf16.mxu0 0
    %2842 = vmatpush2.bf16.msra.mxu0 0
    %2843 = vmatprep.subr.bf16.mxu0 0
    %2844 = vmatpush2.bf16.msra.mxu0 0
    %2845 = vmatprep.subr.bf16.mxu0 0
    %2846 = vmatpush2.bf16.msra.mxu0 0
    %2847 = vmatprep.subr.bf16.mxu0 0
    %2848 = vmatpush2.bf16.msra.mxu0 0
    %2849 = vmatprep.mubr.bf16.mxu0 0
    %2850 = vmatmul.mubr.bf16.gmra.mxu0 %v2812
    %v2851 = vpop.f32.mrf.mxu0
    %v2852 = vadd.f32 0.0, %v2851
    %v2853 = vpop.f32.mrf.mxu0
    %v2854 = vpop.f32.mrf.mxu0
    %v2855 = vpop.f32.mrf.mxu0
    %2856 = vdwg.mxu0
    %v2857 = vadd.f32 %v2781, %v2852
    %v2858 = vld [vmem:[%s4] sm:$0x1]
    %v2860 = vlaneseq
    %v2861 = vshrl.u32 %v2860, 7
    %v2862 = vsub.s32 0, %v2861
    %v2863 = vrot.slane %v2858, %v2862
    %v2865 = vadd.f32 %v2857, %v2863
    %v2866 = vmax.f32 %v2865, 0.0
    %v2867 = vpack.c.bf16 %v2866, %v2866
    %v2869 = vunpack.c.l.b16 %v2867
    %v2870 = vpack.c.b16 %v2869, %v2869
    %v2872 = vshrl.u32 %v2870, 16
    %v2874 = vrot.slane %v2872, 7
    %v2875 = vshll.u32 %v2870, 16
    %v2877 = vor.u32 %v2874, %v2875
    %v2878 = vrot.slane %v2874, 4
    %2879 = vrot.lane.b32.xlu0 %v2877, 8
    %v2880 = vpop.permute.xlu0 %2879
    %2881 = vrot.lane.b32.xlu0 %v2878, 8
    %v2882 = vpop.permute.xlu0 %2881
    %v2885 = vld [vmem:[#allocation3] sm:$0xf]
    %v2886 = vsel %vm610, %v2880, %v2885
    %2887 = vst [vmem:[#allocation3] sm:$0xf] %v2886
    %v2888 = vld [vmem:[#allocation3 + $0x4] sm:$0x1]
    %v2889 = vsel %vm615, %v2882, %v2888
    %2890 = vst [vmem:[#allocation3 + $0x4] sm:$0x1] %v2889
    %v2891 = vld [vmem:[#allocation3] sm:$0xf]
    %v2892 = vld [vmem:[%s5] sm:$0xf]
    %v2893 = vld [vmem:[%s5 + $0x4] sm:$0xf]
    %v2894 = vld [vmem:[%s5 + $0x8] sm:$0xf]
    %v2895 = vld [vmem:[%s5 + $0xc] sm:$0xf]
    %v2896 = vld [vmem:[%s5 + $0x10] sm:$0xf]
    %v2897 = vld [vmem:[%s5 + $0x14] sm:$0xf]
    %v2898 = vld [vmem:[%s5 + $0x18] sm:$0xf]
    %v2899 = vld [vmem:[%s5 + $0x1c] sm:$0xf]
    %v2900 = vld [vmem:[%s5 + $0x20] sm:$0xf]
    %v2901 = vld [vmem:[%s5 + $0x24] sm:$0xf]
    %v2902 = vld [vmem:[#allocation3 + $0x4] sm:$0x1]
    %v2903 = vld [vmem:[%s631] sm:$0xf]
    %v2904 = vld [vmem:[%s631 + $0x4] sm:$0xf]
    %v2905 = vld [vmem:[%s631 + $0x8] sm:$0xf]
    %v2906 = vld [vmem:[%s631 + $0xc] sm:$0xf]
    %v2907 = vld [vmem:[%s631 + $0x10] sm:$0xf]
    %v2908 = vld [vmem:[%s631 + $0x14] sm:$0xf]
    %v2909 = vld [vmem:[%s631 + $0x18] sm:$0xf]
    %v2910 = vld [vmem:[%s631 + $0x1c] sm:$0xf]
    %v2911 = vld [vmem:[%s631 + $0x20] sm:$0xf]
    %v2912 = vld [vmem:[%s631 + $0x24] sm:$0xf]
    %v2915 = vunpack.c.l.b16 %v2891
    %v2916 = vunpack.c.l.b16 %v2902
    %v2917 = vpack.c.b16 %v2916, %v2915
    %v2919 = vshrl.u32 %v2917, 16
    %v2921 = vshll.u32 %v2917, 16
    %v2923 = vrot.slane %v2921, 1
    %v2924 = vor.u32 %v2919, %v2923
    %v2935 = vunpack.c.l.b16 %v2903
    %v2936 = vunpack.c.l.b16 %v2904
    %v2937 = vunpack.c.l.b16 %v2905
    %v2938 = vunpack.c.l.b16 %v2906
    %v2939 = vunpack.c.l.b16 %v2907
    %v2940 = vunpack.c.l.b16 %v2908
    %v2941 = vunpack.c.l.b16 %v2909
    %v2942 = vunpack.c.l.b16 %v2910
    %v2943 = vunpack.c.l.b16 %v2911
    %v2944 = vunpack.c.l.b16 %v2912
    %v2945 = vpack.c.b16 %v2936, %v2935
    %v2946 = vpack.c.b16 %v2938, %v2937
    %v2947 = vpack.c.b16 %v2940, %v2939
    %v2948 = vpack.c.b16 %v2942, %v2941
    %v2949 = vpack.c.b16 %v2944, %v2943
    %v2956 = vsel %vm684, %v2924, 0
    %2958 = vmatprep.subr.bf16.mxu0 0
    %2959 = vmatpush1.bf16.msra.mxu0 0
    %2960 = vmatprep.subr.bf16.mxu0 0
    %2961 = vmatpush1.bf16.msra.mxu0 0
    %2962 = vmatprep.subr.bf16.mxu0 0
    %2963 = vmatpush1.bf16.msra.mxu0 0
    %2964 = vmatprep.subr.bf16.mxu0 0
    %2965 = vmatpush1.bf16.msra.mxu0 %v2949
    %2966 = vmatprep.subr.bf16.mxu0 0
    %2967 = vmatpush1.bf16.msra.mxu0 %v2948
    %2968 = vmatprep.subr.bf16.mxu0 0
    %2969 = vmatpush1.bf16.msra.mxu0 %v2947
    %2970 = vmatprep.subr.bf16.mxu0 0
    %2971 = vmatpush1.bf16.msra.mxu0 %v2946
    %2972 = vmatprep.subr.bf16.mxu0 0
    %2973 = vmatpush1.bf16.msra.mxu0 %v2945
    %2974 = vmatprep.subr.bf16.mxu0 0
    %2975 = vmatpush2.bf16.msra.mxu0 0
    %2976 = vmatprep.subr.bf16.mxu0 0
    %2977 = vmatpush2.bf16.msra.mxu0 0
    %2978 = vmatprep.subr.bf16.mxu0 0
    %2979 = vmatpush2.bf16.msra.mxu0 0
    %2980 = vmatprep.subr.bf16.mxu0 0
    %2981 = vmatpush2.bf16.msra.mxu0 0
    %2982 = vmatprep.subr.bf16.mxu0 0
    %2983 = vmatpush2.bf16.msra.mxu0 0
    %2984 = vmatprep.subr.bf16.mxu0 0
    %2985 = vmatpush2.bf16.msra.mxu0 0
    %2986 = vmatprep.subr.bf16.mxu0 0
    %2987 = vmatpush2.bf16.msra.mxu0 0
    %2988 = vmatprep.subr.bf16.mxu0 0
    %2989 = vmatpush2.bf16.msra.mxu0 0
    %2990 = vmatprep.mubr.bf16.mxu0 0
    %2991 = vmatmul.mubr.bf16.gmra.mxu0 %v2956
    %v2992 = vpop.f32.mrf.mxu0
    %v2993 = vadd.f32 0.0, %v2992
    %v2994 = vpop.f32.mrf.mxu0
    %v2995 = vpop.f32.mrf.mxu0
    %v2996 = vpop.f32.mrf.mxu0
    %2997 = vdwg.mxu0
    %v3008 = vunpack.c.l.b16 %v2892
    %v3009 = vunpack.c.l.b16 %v2893
    %v3010 = vunpack.c.l.b16 %v2894
    %v3011 = vunpack.c.l.b16 %v2895
    %v3012 = vunpack.c.l.b16 %v2896
    %v3013 = vunpack.c.l.b16 %v2897
    %v3014 = vunpack.c.l.b16 %v2898
    %v3015 = vunpack.c.l.b16 %v2899
    %v3016 = vunpack.c.l.b16 %v2900
    %v3017 = vunpack.c.l.b16 %v2901
    %v3018 = vpack.c.b16 %v3009, %v3008
    %v3019 = vpack.c.b16 %v3011, %v3010
    %v3020 = vpack.c.b16 %v3013, %v3012
    %v3021 = vpack.c.b16 %v3015, %v3014
    %v3022 = vpack.c.b16 %v3017, %v3016
    %v3029 = vsel %vm684, %v2891, 0
    %3031 = vmatprep.subr.bf16.mxu0 0
    %3032 = vmatpush1.bf16.msra.mxu0 0
    %3033 = vmatprep.subr.bf16.mxu0 0
    %3034 = vmatpush1.bf16.msra.mxu0 0
    %3035 = vmatprep.subr.bf16.mxu0 0
    %3036 = vmatpush1.bf16.msra.mxu0 0
    %3037 = vmatprep.subr.bf16.mxu0 0
    %3038 = vmatpush1.bf16.msra.mxu0 %v3022
    %3039 = vmatprep.subr.bf16.mxu0 0
    %3040 = vmatpush1.bf16.msra.mxu0 %v3021
    %3041 = vmatprep.subr.bf16.mxu0 0
    %3042 = vmatpush1.bf16.msra.mxu0 %v3020
    %3043 = vmatprep.subr.bf16.mxu0 0
    %3044 = vmatpush1.bf16.msra.mxu0 %v3019
    %3045 = vmatprep.subr.bf16.mxu0 0
    %3046 = vmatpush1.bf16.msra.mxu0 %v3018
    %3047 = vmatprep.subr.bf16.mxu0 0
    %3048 = vmatpush2.bf16.msra.mxu0 0
    %3049 = vmatprep.subr.bf16.mxu0 0
    %3050 = vmatpush2.bf16.msra.mxu0 0
    %3051 = vmatprep.subr.bf16.mxu0 0
    %3052 = vmatpush2.bf16.msra.mxu0 0
    %3053 = vmatprep.subr.bf16.mxu0 0
    %3054 = vmatpush2.bf16.msra.mxu0 0
    %3055 = vmatprep.subr.bf16.mxu0 0
    %3056 = vmatpush2.bf16.msra.mxu0 0
    %3057 = vmatprep.subr.bf16.mxu0 0
    %3058 = vmatpush2.bf16.msra.mxu0 0
    %3059 = vmatprep.subr.bf16.mxu0 0
    %3060 = vmatpush2.bf16.msra.mxu0 0
    %3061 = vmatprep.subr.bf16.mxu0 0
    %3062 = vmatpush2.bf16.msra.mxu0 0
    %3063 = vmatprep.mubr.bf16.mxu0 0
    %3064 = vmatmul.mubr.bf16.gmra.mxu0 %v3029
    %v3065 = vpop.f32.mrf.mxu0
    %v3066 = vadd.f32 %v2993, %v3065
    %v3067 = vpop.f32.mrf.mxu0
    %v3068 = vpop.f32.mrf.mxu0
    %v3069 = vpop.f32.mrf.mxu0
    %3070 = vdwg.mxu0
    %v3071 = vld [vmem:[#allocation3] sm:$0xe]
    %v3072 = vld [vmem:[%s802] sm:$0xf]
    %v3073 = vld [vmem:[%s802 + $0x4] sm:$0xf]
    %v3074 = vld [vmem:[%s802 + $0x8] sm:$0xf]
    %v3075 = vld [vmem:[%s802 + $0xc] sm:$0xf]
    %v3076 = vld [vmem:[%s802 + $0x10] sm:$0xf]
    %v3077 = vld [vmem:[%s802 + $0x14] sm:$0xf]
    %v3078 = vld [vmem:[%s802 + $0x18] sm:$0xf]
    %v3079 = vld [vmem:[%s802 + $0x1c] sm:$0xf]
    %v3080 = vld [vmem:[%s802 + $0x20] sm:$0xf]
    %v3081 = vld [vmem:[%s802 + $0x24] sm:$0xf]
    %v3083 = vunpack.c.l.b16 %v3071
    %v3084 = vpack.c.b16 %v2916, %v3083
    %v3085 = vrot.slane %v3084, 1
    %v3096 = vunpack.c.l.b16 %v3072
    %v3097 = vunpack.c.l.b16 %v3073
    %v3098 = vunpack.c.l.b16 %v3074
    %v3099 = vunpack.c.l.b16 %v3075
    %v3100 = vunpack.c.l.b16 %v3076
    %v3101 = vunpack.c.l.b16 %v3077
    %v3102 = vunpack.c.l.b16 %v3078
    %v3103 = vunpack.c.l.b16 %v3079
    %v3104 = vunpack.c.l.b16 %v3080
    %v3105 = vunpack.c.l.b16 %v3081
    %v3106 = vpack.c.b16 %v3097, %v3096
    %v3107 = vpack.c.b16 %v3099, %v3098
    %v3108 = vpack.c.b16 %v3101, %v3100
    %v3109 = vpack.c.b16 %v3103, %v3102
    %v3110 = vpack.c.b16 %v3105, %v3104
    %v3117 = vsel %vm684, %v3085, 0
    %3119 = vmatprep.subr.bf16.mxu0 0
    %3120 = vmatpush1.bf16.msra.mxu0 0
    %3121 = vmatprep.subr.bf16.mxu0 0
    %3122 = vmatpush1.bf16.msra.mxu0 0
    %3123 = vmatprep.subr.bf16.mxu0 0
    %3124 = vmatpush1.bf16.msra.mxu0 0
    %3125 = vmatprep.subr.bf16.mxu0 0
    %3126 = vmatpush1.bf16.msra.mxu0 %v3110
    %3127 = vmatprep.subr.bf16.mxu0 0
    %3128 = vmatpush1.bf16.msra.mxu0 %v3109
    %3129 = vmatprep.subr.bf16.mxu0 0
    %3130 = vmatpush1.bf16.msra.mxu0 %v3108
    %3131 = vmatprep.subr.bf16.mxu0 0
    %3132 = vmatpush1.bf16.msra.mxu0 %v3107
    %3133 = vmatprep.subr.bf16.mxu0 0
    %3134 = vmatpush1.bf16.msra.mxu0 %v3106
    %3135 = vmatprep.subr.bf16.mxu0 0
    %3136 = vmatpush2.bf16.msra.mxu0 0
    %3137 = vmatprep.subr.bf16.mxu0 0
    %3138 = vmatpush2.bf16.msra.mxu0 0
    %3139 = vmatprep.subr.bf16.mxu0 0
    %3140 = vmatpush2.bf16.msra.mxu0 0
    %3141 = vmatprep.subr.bf16.mxu0 0
    %3142 = vmatpush2.bf16.msra.mxu0 0
    %3143 = vmatprep.subr.bf16.mxu0 0
    %3144 = vmatpush2.bf16.msra.mxu0 0
    %3145 = vmatprep.subr.bf16.mxu0 0
    %3146 = vmatpush2.bf16.msra.mxu0 0
    %3147 = vmatprep.subr.bf16.mxu0 0
    %3148 = vmatpush2.bf16.msra.mxu0 0
    %3149 = vmatprep.subr.bf16.mxu0 0
    %3150 = vmatpush2.bf16.msra.mxu0 0
    %3151 = vmatprep.mubr.bf16.mxu0 0
    %3152 = vmatmul.mubr.bf16.gmra.mxu0 %v3117
    %v3153 = vpop.f32.mrf.mxu0
    %v3154 = vadd.f32 0.0, %v3153
    %v3155 = vpop.f32.mrf.mxu0
    %v3156 = vpop.f32.mrf.mxu0
    %v3157 = vpop.f32.mrf.mxu0
    %3158 = vdwg.mxu0
    %v3159 = vadd.f32 %v3066, %v3154
    %v3160 = vld [vmem:[%s6] sm:$0x1]
    %v3162 = vlaneseq
    %v3163 = vshrl.u32 %v3162, 7
    %v3164 = vsub.s32 0, %v3163
    %v3165 = vrot.slane %v3160, %v3164
    %v3167 = vadd.f32 %v3159, %v3165
    %v3168 = vmax.f32 %v3167, 0.0
    %v3169 = vpack.c.bf16 %v3168, %v3168
    %v3171 = vunpack.c.l.b16 %v3169
    %v3172 = vpack.c.b16 %v3171, %v3171
    %v3174 = vshrl.u32 %v3172, 16
    %v3176 = vrot.slane %v3174, 7
    %v3177 = vshll.u32 %v3172, 16
    %v3179 = vor.u32 %v3176, %v3177
    %v3180 = vrot.slane %v3176, 4
    %3181 = vrot.lane.b32.xlu0 %v3179, 16
    %v3182 = vpop.permute.xlu0 %3181
    %3183 = vrot.lane.b32.xlu0 %v3180, 16
    %v3184 = vpop.permute.xlu0 %3183
    %v3185 = vrot.slane %v3182, 4
    %v3186 = vrot.slane %v3184, 4
    %v3187 = vsel %vm918, %v3185, %v3182
    %v3188 = vsel %vm918, %v3186, %v3184
    %v3191 = vld [vmem:[#allocation4] sm:$0xff]
    %v3192 = vsel %vm928, %v3187, %v3191
    %3193 = vst [vmem:[#allocation4] sm:$0xff] %v3192
    %v3194 = vld [vmem:[#allocation4 + $0x8] sm:$0x11]
    %v3195 = vsel %vm937, %v3188, %v3194
    %3196 = vst [vmem:[#allocation4 + $0x8] sm:$0x11] %v3195
    %v3197 = vld [vmem:[#allocation4] sm:$0xff]
    %v3198 = vld [vmem:[%s7] sm:$0xff]
    %v3199 = vld [vmem:[%s7 + $0x8] sm:$0xff]
    %v3200 = vld [vmem:[%s7 + $0x10] sm:$0xff]
    %v3201 = vld [vmem:[%s7 + $0x18] sm:$0xff]
    %v3202 = vld [vmem:[%s7 + $0x20] sm:$0xff]
    %v3203 = vld [vmem:[%s7 + $0x28] sm:$0xff]
    %v3204 = vld [vmem:[%s7 + $0x30] sm:$0xff]
    %v3205 = vld [vmem:[%s7 + $0x38] sm:$0xff]
    %v3206 = vld [vmem:[%s7 + $0x40] sm:$0xff]
    %v3207 = vld [vmem:[%s7 + $0x48] sm:$0xff]
    %v3208 = vld [vmem:[%s7 + $0x50] sm:$0xff]
    %v3209 = vld [vmem:[%s7 + $0x58] sm:$0xff]
    %v3210 = vld [vmem:[%s7 + $0x60] sm:$0xff]
    %v3211 = vld [vmem:[%s7 + $0x68] sm:$0xff]
    %v3212 = vld [vmem:[%s7 + $0x70] sm:$0xff]
    %v3213 = vld [vmem:[%s7 + $0x78] sm:$0xff]
    %v3214 = vld [vmem:[%s7 + $0x80] sm:$0xff]
    %v3215 = vld [vmem:[%s7 + $0x88] sm:$0xff]
    %v3216 = vld [vmem:[%s7 + $0x90] sm:$0xff]
    %v3217 = vld [vmem:[%s7 + $0x98] sm:$0xff]
    %v3218 = vld [vmem:[#allocation4 + $0x8] sm:$0x11]
    %v3219 = vld [vmem:[%s963] sm:$0xff]
    %v3220 = vld [vmem:[%s963 + $0x8] sm:$0xff]
    %v3221 = vld [vmem:[%s963 + $0x10] sm:$0xff]
    %v3222 = vld [vmem:[%s963 + $0x18] sm:$0xff]
    %v3223 = vld [vmem:[%s963 + $0x20] sm:$0xff]
    %v3224 = vld [vmem:[%s963 + $0x28] sm:$0xff]
    %v3225 = vld [vmem:[%s963 + $0x30] sm:$0xff]
    %v3226 = vld [vmem:[%s963 + $0x38] sm:$0xff]
    %v3227 = vld [vmem:[%s963 + $0x40] sm:$0xff]
    %v3228 = vld [vmem:[%s963 + $0x48] sm:$0xff]
    %v3229 = vld [vmem:[%s963 + $0x50] sm:$0xff]
    %v3230 = vld [vmem:[%s963 + $0x58] sm:$0xff]
    %v3231 = vld [vmem:[%s963 + $0x60] sm:$0xff]
    %v3232 = vld [vmem:[%s963 + $0x68] sm:$0xff]
    %v3233 = vld [vmem:[%s963 + $0x70] sm:$0xff]
    %v3234 = vld [vmem:[%s963 + $0x78] sm:$0xff]
    %v3235 = vld [vmem:[%s963 + $0x80] sm:$0xff]
    %v3236 = vld [vmem:[%s963 + $0x88] sm:$0xff]
    %v3237 = vld [vmem:[%s963 + $0x90] sm:$0xff]
    %v3238 = vld [vmem:[%s963 + $0x98] sm:$0xff]
    %v3241 = vunpack.c.l.b16 %v3197
    %v3242 = vunpack.c.h.b16 %v3197
    %v3243 = vunpack.c.l.b16 %v3218
    %v3244 = vunpack.c.h.b16 %v3218
    %v3245 = vpack.c.b16 %v3243, %v3241
    %v3246 = vpack.c.b16 %v3244, %v3242
    %v3248 = vshrl.u32 %v3245, 16
    %v3250 = vshll.u32 %v3245, 16
    %v3252 = vrot.slane %v3250, 1
    %v3253 = vor.u32 %v3248, %v3252
    %v3255 = vshrl.u32 %v3246, 16
    %v3257 = vshll.u32 %v3246, 16
    %v3259 = vrot.slane %v3257, 1
    %v3260 = vor.u32 %v3255, %v3259
    %v3282 = vunpack.c.l.b16 %v3219
    %v3283 = vunpack.c.h.b16 %v3219
    %v3284 = vunpack.c.l.b16 %v3220
    %v3285 = vunpack.c.h.b16 %v3220
    %v3286 = vunpack.c.l.b16 %v3221
    %v3287 = vunpack.c.h.b16 %v3221
    %v3288 = vunpack.c.l.b16 %v3222
    %v3289 = vunpack.c.h.b16 %v3222
    %v3290 = vunpack.c.l.b16 %v3223
    %v3291 = vunpack.c.h.b16 %v3223
    %v3292 = vunpack.c.l.b16 %v3224
    %v3293 = vunpack.c.h.b16 %v3224
    %v3294 = vunpack.c.l.b16 %v3225
    %v3295 = vunpack.c.h.b16 %v3225
    %v3296 = vunpack.c.l.b16 %v3226
    %v3297 = vunpack.c.h.b16 %v3226
    %v3298 = vunpack.c.l.b16 %v3227
    %v3299 = vunpack.c.h.b16 %v3227
    %v3300 = vunpack.c.l.b16 %v3228
    %v3301 = vunpack.c.h.b16 %v3228
    %v3302 = vunpack.c.l.b16 %v3229
    %v3303 = vunpack.c.h.b16 %v3229
    %v3304 = vunpack.c.l.b16 %v3230
    %v3305 = vunpack.c.h.b16 %v3230
    %v3306 = vunpack.c.l.b16 %v3231
    %v3307 = vunpack.c.h.b16 %v3231
    %v3308 = vunpack.c.l.b16 %v3232
    %v3309 = vunpack.c.h.b16 %v3232
    %v3310 = vunpack.c.l.b16 %v3233
    %v3311 = vunpack.c.h.b16 %v3233
    %v3312 = vunpack.c.l.b16 %v3234
    %v3313 = vunpack.c.h.b16 %v3234
    %v3314 = vunpack.c.l.b16 %v3235
    %v3315 = vunpack.c.h.b16 %v3235
    %v3316 = vunpack.c.l.b16 %v3236
    %v3317 = vunpack.c.h.b16 %v3236
    %v3318 = vunpack.c.l.b16 %v3237
    %v3319 = vunpack.c.h.b16 %v3237
    %v3320 = vunpack.c.l.b16 %v3238
    %v3321 = vunpack.c.h.b16 %v3238
    %v3322 = vpack.c.b16 %v3284, %v3282
    %v3323 = vpack.c.b16 %v3285, %v3283
    %v3324 = vpack.c.b16 %v3288, %v3286
    %v3325 = vpack.c.b16 %v3289, %v3287
    %v3326 = vpack.c.b16 %v3292, %v3290
    %v3327 = vpack.c.b16 %v3293, %v3291
    %v3328 = vpack.c.b16 %v3296, %v3294
    %v3329 = vpack.c.b16 %v3297, %v3295
    %v3330 = vpack.c.b16 %v3300, %v3298
    %v3331 = vpack.c.b16 %v3301, %v3299
    %v3332 = vpack.c.b16 %v3304, %v3302
    %v3333 = vpack.c.b16 %v3305, %v3303
    %v3334 = vpack.c.b16 %v3308, %v3306
    %v3335 = vpack.c.b16 %v3309, %v3307
    %v3336 = vpack.c.b16 %v3312, %v3310
    %v3337 = vpack.c.b16 %v3313, %v3311
    %v3338 = vpack.c.b16 %v3316, %v3314
    %v3339 = vpack.c.b16 %v3317, %v3315
    %v3340 = vpack.c.b16 %v3320, %v3318
    %v3341 = vpack.c.b16 %v3321, %v3319
    %v3363 = vsel %vm1107, %v3260, 0
    %3365 = vmatprep.subr.bf16.mxu0 %v3337
    %3366 = vmatpush1.bf16.msra.mxu0 %v3336
    %3367 = vmatprep.subr.bf16.mxu0 %v3335
    %3368 = vmatpush1.bf16.msra.mxu0 %v3334
    %3369 = vmatprep.subr.bf16.mxu0 %v3333
    %3370 = vmatpush1.bf16.msra.mxu0 %v3332
    %3371 = vmatprep.subr.bf16.mxu0 %v3331
    %3372 = vmatpush1.bf16.msra.mxu0 %v3330
    %3373 = vmatprep.subr.bf16.mxu0 %v3329
    %3374 = vmatpush1.bf16.msra.mxu0 %v3328
    %3375 = vmatprep.subr.bf16.mxu0 %v3327
    %3376 = vmatpush1.bf16.msra.mxu0 %v3326
    %3377 = vmatprep.subr.bf16.mxu0 %v3325
    %3378 = vmatpush1.bf16.msra.mxu0 %v3324
    %3379 = vmatprep.subr.bf16.mxu0 %v3323
    %3380 = vmatpush1.bf16.msra.mxu0 %v3322
    %3381 = vmatprep.subr.bf16.mxu0 0
    %3382 = vmatpush2.bf16.msra.mxu0 0
    %3383 = vmatprep.subr.bf16.mxu0 0
    %3384 = vmatpush2.bf16.msra.mxu0 0
    %3385 = vmatprep.subr.bf16.mxu0 0
    %3386 = vmatpush2.bf16.msra.mxu0 0
    %3387 = vmatprep.subr.bf16.mxu0 0
    %3388 = vmatpush2.bf16.msra.mxu0 0
    %3389 = vmatprep.subr.bf16.mxu0 0
    %3390 = vmatpush2.bf16.msra.mxu0 0
    %3391 = vmatprep.subr.bf16.mxu0 0
    %3392 = vmatpush2.bf16.msra.mxu0 0
    %3393 = vmatprep.subr.bf16.mxu0 %v3341
    %3394 = vmatpush2.bf16.msra.mxu0 %v3340
    %3395 = vmatprep.subr.bf16.mxu0 %v3339
    %3396 = vmatpush2.bf16.msra.mxu0 %v3338
    %3397 = vmatprep.mubr.bf16.mxu0 %v3363
    %3398 = vmatmul.mubr.bf16.gmra.mxu0 %v3253
    %v3399 = vpop.f32.mrf.mxu0
    %v3400 = vadd.f32 0.0, %v3399
    %v3401 = vpop.f32.mrf.mxu0
    %v3402 = vadd.f32 0.0, %v3401
    %v3403 = vpop.f32.mrf.mxu0
    %v3404 = vpop.f32.mrf.mxu0
    %3405 = vdwg.mxu0
    %v3406 = vpack.c.b16 %v3241, %v3241
    %v3407 = vpack.c.b16 %v3242, %v3242
    %v3429 = vunpack.c.l.b16 %v3198
    %v3430 = vunpack.c.h.b16 %v3198
    %v3431 = vunpack.c.l.b16 %v3199
    %v3432 = vunpack.c.h.b16 %v3199
    %v3433 = vunpack.c.l.b16 %v3200
    %v3434 = vunpack.c.h.b16 %v3200
    %v3435 = vunpack.c.l.b16 %v3201
    %v3436 = vunpack.c.h.b16 %v3201
    %v3437 = vunpack.c.l.b16 %v3202
    %v3438 = vunpack.c.h.b16 %v3202
    %v3439 = vunpack.c.l.b16 %v3203
    %v3440 = vunpack.c.h.b16 %v3203
    %v3441 = vunpack.c.l.b16 %v3204
    %v3442 = vunpack.c.h.b16 %v3204
    %v3443 = vunpack.c.l.b16 %v3205
    %v3444 = vunpack.c.h.b16 %v3205
    %v3445 = vunpack.c.l.b16 %v3206
    %v3446 = vunpack.c.h.b16 %v3206
    %v3447 = vunpack.c.l.b16 %v3207
    %v3448 = vunpack.c.h.b16 %v3207
    %v3449 = vunpack.c.l.b16 %v3208
    %v3450 = vunpack.c.h.b16 %v3208
    %v3451 = vunpack.c.l.b16 %v3209
    %v3452 = vunpack.c.h.b16 %v3209
    %v3453 = vunpack.c.l.b16 %v3210
    %v3454 = vunpack.c.h.b16 %v3210
    %v3455 = vunpack.c.l.b16 %v3211
    %v3456 = vunpack.c.h.b16 %v3211
    %v3457 = vunpack.c.l.b16 %v3212
    %v3458 = vunpack.c.h.b16 %v3212
    %v3459 = vunpack.c.l.b16 %v3213
    %v3460 = vunpack.c.h.b16 %v3213
    %v3461 = vunpack.c.l.b16 %v3214
    %v3462 = vunpack.c.h.b16 %v3214
    %v3463 = vunpack.c.l.b16 %v3215
    %v3464 = vunpack.c.h.b16 %v3215
    %v3465 = vunpack.c.l.b16 %v3216
    %v3466 = vunpack.c.h.b16 %v3216
    %v3467 = vunpack.c.l.b16 %v3217
    %v3468 = vunpack.c.h.b16 %v3217
    %v3469 = vpack.c.b16 %v3431, %v3429
    %v3470 = vpack.c.b16 %v3432, %v3430
    %v3471 = vpack.c.b16 %v3435, %v3433
    %v3472 = vpack.c.b16 %v3436, %v3434
    %v3473 = vpack.c.b16 %v3439, %v3437
    %v3474 = vpack.c.b16 %v3440, %v3438
    %v3475 = vpack.c.b16 %v3443, %v3441
    %v3476 = vpack.c.b16 %v3444, %v3442
    %v3477 = vpack.c.b16 %v3447, %v3445
    %v3478 = vpack.c.b16 %v3448, %v3446
    %v3479 = vpack.c.b16 %v3451, %v3449
    %v3480 = vpack.c.b16 %v3452, %v3450
    %v3481 = vpack.c.b16 %v3455, %v3453
    %v3482 = vpack.c.b16 %v3456, %v3454
    %v3483 = vpack.c.b16 %v3459, %v3457
    %v3484 = vpack.c.b16 %v3460, %v3458
    %v3485 = vpack.c.b16 %v3463, %v3461
    %v3486 = vpack.c.b16 %v3464, %v3462
    %v3487 = vpack.c.b16 %v3467, %v3465
    %v3488 = vpack.c.b16 %v3468, %v3466
    %v3510 = vsel %vm1107, %v3407, 0
    %3512 = vmatprep.subr.bf16.mxu0 %v3484
    %3513 = vmatpush1.bf16.msra.mxu0 %v3483
    %3514 = vmatprep.subr.bf16.mxu0 %v3482
    %3515 = vmatpush1.bf16.msra.mxu0 %v3481
    %3516 = vmatprep.subr.bf16.mxu0 %v3480
    %3517 = vmatpush1.bf16.msra.mxu0 %v3479
    %3518 = vmatprep.subr.bf16.mxu0 %v3478
    %3519 = vmatpush1.bf16.msra.mxu0 %v3477
    %3520 = vmatprep.subr.bf16.mxu0 %v3476
    %3521 = vmatpush1.bf16.msra.mxu0 %v3475
    %3522 = vmatprep.subr.bf16.mxu0 %v3474
    %3523 = vmatpush1.bf16.msra.mxu0 %v3473
    %3524 = vmatprep.subr.bf16.mxu0 %v3472
    %3525 = vmatpush1.bf16.msra.mxu0 %v3471
    %3526 = vmatprep.subr.bf16.mxu0 %v3470
    %3527 = vmatpush1.bf16.msra.mxu0 %v3469
    %3528 = vmatprep.subr.bf16.mxu0 0
    %3529 = vmatpush2.bf16.msra.mxu0 0
    %3530 = vmatprep.subr.bf16.mxu0 0
    %3531 = vmatpush2.bf16.msra.mxu0 0
    %3532 = vmatprep.subr.bf16.mxu0 0
    %3533 = vmatpush2.bf16.msra.mxu0 0
    %3534 = vmatprep.subr.bf16.mxu0 0
    %3535 = vmatpush2.bf16.msra.mxu0 0
    %3536 = vmatprep.subr.bf16.mxu0 0
    %3537 = vmatpush2.bf16.msra.mxu0 0
    %3538 = vmatprep.subr.bf16.mxu0 0
    %3539 = vmatpush2.bf16.msra.mxu0 0
    %3540 = vmatprep.subr.bf16.mxu0 %v3488
    %3541 = vmatpush2.bf16.msra.mxu0 %v3487
    %3542 = vmatprep.subr.bf16.mxu0 %v3486
    %3543 = vmatpush2.bf16.msra.mxu0 %v3485
    %3544 = vmatprep.mubr.bf16.mxu0 %v3510
    %3545 = vmatmul.mubr.bf16.gmra.mxu0 %v3406
    %v3546 = vpop.f32.mrf.mxu0
    %v3547 = vadd.f32 %v3400, %v3546
    %v3548 = vpop.f32.mrf.mxu0
    %v3549 = vadd.f32 %v3402, %v3548
    %v3550 = vpop.f32.mrf.mxu0
    %v3551 = vpop.f32.mrf.mxu0
    %3552 = vdwg.mxu0
    %v3553 = vld [vmem:[#allocation4] sm:$0xee]
    %v3554 = vld [vmem:[%s1300] sm:$0xff]
    %v3555 = vld [vmem:[%s1300 + $0x8] sm:$0xff]
    %v3556 = vld [vmem:[%s1300 + $0x10] sm:$0xff]
    %v3557 = vld [vmem:[%s1300 + $0x18] sm:$0xff]
    %v3558 = vld [vmem:[%s1300 + $0x20] sm:$0xff]
    %v3559 = vld [vmem:[%s1300 + $0x28] sm:$0xff]
    %v3560 = vld [vmem:[%s1300 + $0x30] sm:$0xff]
    %v3561 = vld [vmem:[%s1300 + $0x38] sm:$0xff]
    %v3562 = vld [vmem:[%s1300 + $0x40] sm:$0xff]
    %v3563 = vld [vmem:[%s1300 + $0x48] sm:$0xff]
    %v3564 = vld [vmem:[%s1300 + $0x50] sm:$0xff]
    %v3565 = vld [vmem:[%s1300 + $0x58] sm:$0xff]
    %v3566 = vld [vmem:[%s1300 + $0x60] sm:$0xff]
    %v3567 = vld [vmem:[%s1300 + $0x68] sm:$0xff]
    %v3568 = vld [vmem:[%s1300 + $0x70] sm:$0xff]
    %v3569 = vld [vmem:[%s1300 + $0x78] sm:$0xff]
    %v3570 = vld [vmem:[%s1300 + $0x80] sm:$0xff]
    %v3571 = vld [vmem:[%s1300 + $0x88] sm:$0xff]
    %v3572 = vld [vmem:[%s1300 + $0x90] sm:$0xff]
    %v3573 = vld [vmem:[%s1300 + $0x98] sm:$0xff]
    %v3575 = vunpack.c.l.b16 %v3553
    %v3576 = vunpack.c.h.b16 %v3553
    %v3577 = vpack.c.b16 %v3243, %v3575
    %v3578 = vpack.c.b16 %v3244, %v3576
    %v3579 = vrot.slane %v3577, 1
    %v3580 = vrot.slane %v3578, 1
    %v3602 = vunpack.c.l.b16 %v3554
    %v3603 = vunpack.c.h.b16 %v3554
    %v3604 = vunpack.c.l.b16 %v3555
    %v3605 = vunpack.c.h.b16 %v3555
    %v3606 = vunpack.c.l.b16 %v3556
    %v3607 = vunpack.c.h.b16 %v3556
    %v3608 = vunpack.c.l.b16 %v3557
    %v3609 = vunpack.c.h.b16 %v3557
    %v3610 = vunpack.c.l.b16 %v3558
    %v3611 = vunpack.c.h.b16 %v3558
    %v3612 = vunpack.c.l.b16 %v3559
    %v3613 = vunpack.c.h.b16 %v3559
    %v3614 = vunpack.c.l.b16 %v3560
    %v3615 = vunpack.c.h.b16 %v3560
    %v3616 = vunpack.c.l.b16 %v3561
    %v3617 = vunpack.c.h.b16 %v3561
    %v3618 = vunpack.c.l.b16 %v3562
    %v3619 = vunpack.c.h.b16 %v3562
    %v3620 = vunpack.c.l.b16 %v3563
    %v3621 = vunpack.c.h.b16 %v3563
    %v3622 = vunpack.c.l.b16 %v3564
    %v3623 = vunpack.c.h.b16 %v3564
    %v3624 = vunpack.c.l.b16 %v3565
    %v3625 = vunpack.c.h.b16 %v3565
    %v3626 = vunpack.c.l.b16 %v3566
    %v3627 = vunpack.c.h.b16 %v3566
    %v3628 = vunpack.c.l.b16 %v3567
    %v3629 = vunpack.c.h.b16 %v3567
    %v3630 = vunpack.c.l.b16 %v3568
    %v3631 = vunpack.c.h.b16 %v3568
    %v3632 = vunpack.c.l.b16 %v3569
    %v3633 = vunpack.c.h.b16 %v3569
    %v3634 = vunpack.c.l.b16 %v3570
    %v3635 = vunpack.c.h.b16 %v3570
    %v3636 = vunpack.c.l.b16 %v3571
    %v3637 = vunpack.c.h.b16 %v3571
    %v3638 = vunpack.c.l.b16 %v3572
    %v3639 = vunpack.c.h.b16 %v3572
    %v3640 = vunpack.c.l.b16 %v3573
    %v3641 = vunpack.c.h.b16 %v3573
    %v3642 = vpack.c.b16 %v3604, %v3602
    %v3643 = vpack.c.b16 %v3605, %v3603
    %v3644 = vpack.c.b16 %v3608, %v3606
    %v3645 = vpack.c.b16 %v3609, %v3607
    %v3646 = vpack.c.b16 %v3612, %v3610
    %v3647 = vpack.c.b16 %v3613, %v3611
    %v3648 = vpack.c.b16 %v3616, %v3614
    %v3649 = vpack.c.b16 %v3617, %v3615
    %v3650 = vpack.c.b16 %v3620, %v3618
    %v3651 = vpack.c.b16 %v3621, %v3619
    %v3652 = vpack.c.b16 %v3624, %v3622
    %v3653 = vpack.c.b16 %v3625, %v3623
    %v3654 = vpack.c.b16 %v3628, %v3626
    %v3655 = vpack.c.b16 %v3629, %v3627
    %v3656 = vpack.c.b16 %v3632, %v3630
    %v3657 = vpack.c.b16 %v3633, %v3631
    %v3658 = vpack.c.b16 %v3636, %v3634
    %v3659 = vpack.c.b16 %v3637, %v3635
    %v3660 = vpack.c.b16 %v3640, %v3638
    %v3661 = vpack.c.b16 %v3641, %v3639
    %v3683 = vsel %vm1107, %v3580, 0
    %3685 = vmatprep.subr.bf16.mxu0 %v3657
    %3686 = vmatpush1.bf16.msra.mxu0 %v3656
    %3687 = vmatprep.subr.bf16.mxu0 %v3655
    %3688 = vmatpush1.bf16.msra.mxu0 %v3654
    %3689 = vmatprep.subr.bf16.mxu0 %v3653
    %3690 = vmatpush1.bf16.msra.mxu0 %v3652
    %3691 = vmatprep.subr.bf16.mxu0 %v3651
    %3692 = vmatpush1.bf16.msra.mxu0 %v3650
    %3693 = vmatprep.subr.bf16.mxu0 %v3649
    %3694 = vmatpush1.bf16.msra.mxu0 %v3648
    %3695 = vmatprep.subr.bf16.mxu0 %v3647
    %3696 = vmatpush1.bf16.msra.mxu0 %v3646
    %3697 = vmatprep.subr.bf16.mxu0 %v3645
    %3698 = vmatpush1.bf16.msra.mxu0 %v3644
    %3699 = vmatprep.subr.bf16.mxu0 %v3643
    %3700 = vmatpush1.bf16.msra.mxu0 %v3642
    %3701 = vmatprep.subr.bf16.mxu0 0
    %3702 = vmatpush2.bf16.msra.mxu0 0
    %3703 = vmatprep.subr.bf16.mxu0 0
    %3704 = vmatpush2.bf16.msra.mxu0 0
    %3705 = vmatprep.subr.bf16.mxu0 0
    %3706 = vmatpush2.bf16.msra.mxu0 0
    %3707 = vmatprep.subr.bf16.mxu0 0
    %3708 = vmatpush2.bf16.msra.mxu0 0
    %3709 = vmatprep.subr.bf16.mxu0 0
    %3710 = vmatpush2.bf16.msra.mxu0 0
    %3711 = vmatprep.subr.bf16.mxu0 0
    %3712 = vmatpush2.bf16.msra.mxu0 0
    %3713 = vmatprep.subr.bf16.mxu0 %v3661
    %3714 = vmatpush2.bf16.msra.mxu0 %v3660
    %3715 = vmatprep.subr.bf16.mxu0 %v3659
    %3716 = vmatpush2.bf16.msra.mxu0 %v3658
    %3717 = vmatprep.mubr.bf16.mxu0 %v3683
    %3718 = vmatmul.mubr.bf16.gmra.mxu0 %v3579
    %v3719 = vpop.f32.mrf.mxu0
    %v3720 = vadd.f32 0.0, %v3719
    %v3721 = vpop.f32.mrf.mxu0
    %v3722 = vadd.f32 0.0, %v3721
    %v3723 = vpop.f32.mrf.mxu0
    %v3724 = vpop.f32.mrf.mxu0
    %3725 = vdwg.mxu0
    %v3726 = vadd.f32 %v3547, %v3720
    %v3727 = vadd.f32 %v3549, %v3722
    %v3728 = vld [vmem:[%s8] sm:$0x3]
    %v3730 = vlaneseq
    %v3731 = vshrl.u32 %v3730, 7
    %v3732 = vsub.s32 0, %v3731
    %v3733 = vrot.slane %v3728, %v3732
    %v3734 = vlaneseq
    %v3735 = vshrl.u32 %v3734, 7
    %v3736 = vsub.s32 1, %v3735
    %v3737 = vrot.slane %v3728, %v3736
    %v3740 = vadd.f32 %v3726, %v3733
    %v3741 = vadd.f32 %v3727, %v3737
    %v3742 = vmax.f32 %v3740, 0.0
    %v3743 = vmax.f32 %v3741, 0.0
    %v3744 = vpack.c.bf16 %v3742, %v3742
    %v3745 = vpack.c.bf16 %v3743, %v3743
    %v3748 = vunpack.c.l.b16 %v3744
    %v3749 = vunpack.c.l.b16 %v3745
    %v3750 = vpack.c.b16 %v3749, %v3748
    %v3752 = vshrl.u32 %v3750, 16
    %v3754 = vrot.slane %v3752, 7
    %v3755 = vshll.u32 %v3750, 16
    %v3757 = vor.u32 %v3754, %v3755
    %v3758 = vrot.slane %v3754, 4
    %3759 = vrot.lane.b32.xlu0 %v3757, 32
    %v3760 = vpop.permute.xlu0 %3759
    %3761 = vrot.lane.b32.xlu0 %v3758, 32
    %v3762 = vpop.permute.xlu0 %3761
    %v3763 = vrot.slane %v3760, 4
    %v3764 = vrot.slane %v3762, 4
    %v3765 = vsel %vm1512, %v3763, %v3760
    %v3766 = vsel %vm1512, %v3764, %v3762
    %v3771 = vld [vmem:[#allocation5] sm:$0xff]
    %v3772 = vsel %vm1523, %v3765, %v3771
    %3773 = vst [vmem:[#allocation5] sm:$0xff] %v3772
    %v3774 = vld [vmem:[#allocation5 + $0x8] sm:$0xf]
    %v3775 = vsel %vm1528, %v3763, %v3774
    %3776 = vst [vmem:[#allocation5 + $0x8] sm:$0xf] %v3775
    %v3777 = vld [vmem:[#allocation5 + $0xc] sm:$0x11]
    %v3778 = vsel %vm1536, %v3766, %v3777
    %3779 = vst [vmem:[#allocation5 + $0xc] sm:$0x11] %v3778
    %v3780 = vld [vmem:[#allocation5 + $0x14] sm:$0x1]
    %v3781 = vsel %vm1541, %v3764, %v3780
    %3782 = vst [vmem:[#allocation5 + $0x14] sm:$0x1] %v3781
    %v3783 = vld [vmem:[#allocation5] sm:$0xff]
    %v3784 = vld [vmem:[#allocation5 + $0x8] sm:$0xf]
    %v3785 = vld [vmem:[%s9] sm:$0xf]
    %v3786 = vld [vmem:[%s9 + $0x4] sm:$0xf]
    %v3787 = vld [vmem:[%s9 + $0x8] sm:$0xf]
    %v3788 = vld [vmem:[%s9 + $0xc] sm:$0xf]
    %v3789 = vld [vmem:[%s9 + $0x10] sm:$0xf]
    %v3790 = vld [vmem:[%s9 + $0x14] sm:$0xf]
    %v3791 = vld [vmem:[%s9 + $0x18] sm:$0xf]
    %v3792 = vld [vmem:[%s9 + $0x1c] sm:$0xf]
    %v3793 = vld [vmem:[%s9 + $0x20] sm:$0xf]
    %v3794 = vld [vmem:[%s9 + $0x24] sm:$0xf]
    %v3795 = vld [vmem:[%s9 + $0x28] sm:$0xf]
    %v3796 = vld [vmem:[%s9 + $0x2c] sm:$0xf]
    %v3797 = vld [vmem:[%s9 + $0x30] sm:$0xf]
    %v3798 = vld [vmem:[%s9 + $0x34] sm:$0xf]
    %v3799 = vld [vmem:[%s9 + $0x38] sm:$0xf]
    %v3800 = vld [vmem:[%s9 + $0x3c] sm:$0xf]
    %v3801 = vld [vmem:[%s9 + $0x40] sm:$0xf]
    %v3802 = vld [vmem:[%s9 + $0x44] sm:$0xf]
    %v3803 = vld [vmem:[%s9 + $0x48] sm:$0xf]
    %v3804 = vld [vmem:[%s9 + $0x4c] sm:$0xf]
    %v3805 = vld [vmem:[%s9 + $0x50] sm:$0xf]
    %v3806 = vld [vmem:[%s9 + $0x54] sm:$0xf]
    %v3807 = vld [vmem:[%s9 + $0x58] sm:$0xf]
    %v3808 = vld [vmem:[%s9 + $0x5c] sm:$0xf]
    %v3809 = vld [vmem:[%s9 + $0x60] sm:$0xf]
    %v3810 = vld [vmem:[%s9 + $0x64] sm:$0xf]
    %v3811 = vld [vmem:[%s9 + $0x68] sm:$0xf]
    %v3812 = vld [vmem:[%s9 + $0x6c] sm:$0xf]
    %v3813 = vld [vmem:[%s9 + $0x70] sm:$0xf]
    %v3814 = vld [vmem:[%s9 + $0x74] sm:$0xf]
    %v3815 = vld [vmem:[%s9 + $0x78] sm:$0xf]
    %v3816 = vld [vmem:[%s9 + $0x7c] sm:$0xf]
    %v3817 = vld [vmem:[%s9 + $0x80] sm:$0xf]
    %v3818 = vld [vmem:[%s9 + $0x84] sm:$0xf]
    %v3819 = vld [vmem:[%s9 + $0x88] sm:$0xf]
    %v3820 = vld [vmem:[%s9 + $0x8c] sm:$0xf]
    %v3821 = vld [vmem:[%s9 + $0x90] sm:$0xf]
    %v3822 = vld [vmem:[%s9 + $0x94] sm:$0xf]
    %v3823 = vld [vmem:[%s9 + $0x98] sm:$0xf]
    %v3824 = vld [vmem:[%s9 + $0x9c] sm:$0xf]
    %v3825 = vld [vmem:[#allocation5 + $0xc] sm:$0x11]
    %v3826 = vld [vmem:[#allocation5 + $0x14] sm:$0x1]
    %v3827 = vld [vmem:[%s1589] sm:$0xf]
    %v3828 = vld [vmem:[%s1589 + $0x4] sm:$0xf]
    %v3829 = vld [vmem:[%s1589 + $0x8] sm:$0xf]
    %v3830 = vld [vmem:[%s1589 + $0xc] sm:$0xf]
    %v3831 = vld [vmem:[%s1589 + $0x10] sm:$0xf]
    %v3832 = vld [vmem:[%s1589 + $0x14] sm:$0xf]
    %v3833 = vld [vmem:[%s1589 + $0x18] sm:$0xf]
    %v3834 = vld [vmem:[%s1589 + $0x1c] sm:$0xf]
    %v3835 = vld [vmem:[%s1589 + $0x20] sm:$0xf]
    %v3836 = vld [vmem:[%s1589 + $0x24] sm:$0xf]
    %v3837 = vld [vmem:[%s1589 + $0x28] sm:$0xf]
    %v3838 = vld [vmem:[%s1589 + $0x2c] sm:$0xf]
    %v3839 = vld [vmem:[%s1589 + $0x30] sm:$0xf]
    %v3840 = vld [vmem:[%s1589 + $0x34] sm:$0xf]
    %v3841 = vld [vmem:[%s1589 + $0x38] sm:$0xf]
    %v3842 = vld [vmem:[%s1589 + $0x3c] sm:$0xf]
    %v3843 = vld [vmem:[%s1589 + $0x40] sm:$0xf]
    %v3844 = vld [vmem:[%s1589 + $0x44] sm:$0xf]
    %v3845 = vld [vmem:[%s1589 + $0x48] sm:$0xf]
    %v3846 = vld [vmem:[%s1589 + $0x4c] sm:$0xf]
    %v3847 = vld [vmem:[%s1589 + $0x50] sm:$0xf]
    %v3848 = vld [vmem:[%s1589 + $0x54] sm:$0xf]
    %v3849 = vld [vmem:[%s1589 + $0x58] sm:$0xf]
    %v3850 = vld [vmem:[%s1589 + $0x5c] sm:$0xf]
    %v3851 = vld [vmem:[%s1589 + $0x60] sm:$0xf]
    %v3852 = vld [vmem:[%s1589 + $0x64] sm:$0xf]
    %v3853 = vld [vmem:[%s1589 + $0x68] sm:$0xf]
    %v3854 = vld [vmem:[%s1589 + $0x6c] sm:$0xf]
    %v3855 = vld [vmem:[%s1589 + $0x70] sm:$0xf]
    %v3856 = vld [vmem:[%s1589 + $0x74] sm:$0xf]
    %v3857 = vld [vmem:[%s1589 + $0x78] sm:$0xf]
    %v3858 = vld [vmem:[%s1589 + $0x7c] sm:$0xf]
    %v3859 = vld [vmem:[%s1589 + $0x80] sm:$0xf]
    %v3860 = vld [vmem:[%s1589 + $0x84] sm:$0xf]
    %v3861 = vld [vmem:[%s1589 + $0x88] sm:$0xf]
    %v3862 = vld [vmem:[%s1589 + $0x8c] sm:$0xf]
    %v3863 = vld [vmem:[%s1589 + $0x90] sm:$0xf]
    %v3864 = vld [vmem:[%s1589 + $0x94] sm:$0xf]
    %v3865 = vld [vmem:[%s1589 + $0x98] sm:$0xf]
    %v3866 = vld [vmem:[%s1589 + $0x9c] sm:$0xf]
    %v3871 = vunpack.c.l.b16 %v3783
    %v3872 = vunpack.c.h.b16 %v3783
    %v3873 = vunpack.c.l.b16 %v3784
    %v3874 = vunpack.c.l.b16 %v3825
    %v3875 = vunpack.c.h.b16 %v3825
    %v3876 = vunpack.c.l.b16 %v3826
    %v3877 = vpack.c.b16 %v3874, %v3871
    %v3878 = vpack.c.b16 %v3875, %v3872
    %v3879 = vpack.c.b16 %v3876, %v3873
    %v3881 = vshrl.u32 %v3877, 16
    %v3883 = vshll.u32 %v3877, 16
    %v3885 = vrot.slane %v3883, 1
    %v3886 = vor.u32 %v3881, %v3885
    %v3888 = vshrl.u32 %v3878, 16
    %v3890 = vshll.u32 %v3878, 16
    %v3892 = vrot.slane %v3890, 1
    %v3893 = vor.u32 %v3888, %v3892
    %v3895 = vshrl.u32 %v3879, 16
    %v3897 = vshll.u32 %v3879, 16
    %v3899 = vrot.slane %v3897, 1
    %v3900 = vor.u32 %v3895, %v3899
    %v3943 = vunpack.c.l.b16 %v3827
    %v3944 = vunpack.c.l.b16 %v3828
    %v3945 = vunpack.c.l.b16 %v3829
    %v3946 = vunpack.c.l.b16 %v3830
    %v3947 = vunpack.c.l.b16 %v3831
    %v3948 = vunpack.c.l.b16 %v3832
    %v3949 = vunpack.c.l.b16 %v3833
    %v3950 = vunpack.c.l.b16 %v3834
    %v3951 = vunpack.c.l.b16 %v3835
    %v3952 = vunpack.c.l.b16 %v3836
    %v3953 = vunpack.c.l.b16 %v3837
    %v3954 = vunpack.c.l.b16 %v3838
    %v3955 = vunpack.c.l.b16 %v3839
    %v3956 = vunpack.c.l.b16 %v3840
    %v3957 = vunpack.c.l.b16 %v3841
    %v3958 = vunpack.c.l.b16 %v3842
    %v3959 = vunpack.c.l.b16 %v3843
    %v3960 = vunpack.c.l.b16 %v3844
    %v3961 = vunpack.c.l.b16 %v3845
    %v3962 = vunpack.c.l.b16 %v3846
    %v3963 = vunpack.c.l.b16 %v3847
    %v3964 = vunpack.c.l.b16 %v3848
    %v3965 = vunpack.c.l.b16 %v3849
    %v3966 = vunpack.c.l.b16 %v3850
    %v3967 = vunpack.c.l.b16 %v3851
    %v3968 = vunpack.c.l.b16 %v3852
    %v3969 = vunpack.c.l.b16 %v3853
    %v3970 = vunpack.c.l.b16 %v3854
    %v3971 = vunpack.c.l.b16 %v3855
    %v3972 = vunpack.c.l.b16 %v3856
    %v3973 = vunpack.c.l.b16 %v3857
    %v3974 = vunpack.c.l.b16 %v3858
    %v3975 = vunpack.c.l.b16 %v3859
    %v3976 = vunpack.c.l.b16 %v3860
    %v3977 = vunpack.c.l.b16 %v3861
    %v3978 = vunpack.c.l.b16 %v3862
    %v3979 = vunpack.c.l.b16 %v3863
    %v3980 = vunpack.c.l.b16 %v3864
    %v3981 = vunpack.c.l.b16 %v3865
    %v3982 = vunpack.c.l.b16 %v3866
    %v3983 = vpack.c.b16 %v3944, %v3943
    %v3984 = vpack.c.b16 %v3946, %v3945
    %v3985 = vpack.c.b16 %v3948, %v3947
    %v3986 = vpack.c.b16 %v3950, %v3949
    %v3987 = vpack.c.b16 %v3952, %v3951
    %v3988 = vpack.c.b16 %v3954, %v3953
    %v3989 = vpack.c.b16 %v3956, %v3955
    %v3990 = vpack.c.b16 %v3958, %v3957
    %v3991 = vpack.c.b16 %v3960, %v3959
    %v3992 = vpack.c.b16 %v3962, %v3961
    %v3993 = vpack.c.b16 %v3964, %v3963
    %v3994 = vpack.c.b16 %v3966, %v3965
    %v3995 = vpack.c.b16 %v3968, %v3967
    %v3996 = vpack.c.b16 %v3970, %v3969
    %v3997 = vpack.c.b16 %v3972, %v3971
    %v3998 = vpack.c.b16 %v3974, %v3973
    %v3999 = vpack.c.b16 %v3976, %v3975
    %v4000 = vpack.c.b16 %v3978, %v3977
    %v4001 = vpack.c.b16 %v3980, %v3979
    %v4002 = vpack.c.b16 %v3982, %v3981
    %v4024 = vsel %vm1786, %v3900, 0
    %4026 = vmatprep.subr.bf16.mxu0 0
    %4027 = vmatpush1.bf16.msra.mxu0 %v3990
    %4028 = vmatprep.subr.bf16.mxu0 0
    %4029 = vmatpush1.bf16.msra.mxu0 %v3989
    %4030 = vmatprep.subr.bf16.mxu0 0
    %4031 = vmatpush1.bf16.msra.mxu0 %v3988
    %4032 = vmatprep.subr.bf16.mxu0 0
    %4033 = vmatpush1.bf16.msra.mxu0 %v3987
    %4034 = vmatprep.subr.bf16.mxu0 0
    %4035 = vmatpush1.bf16.msra.mxu0 %v3986
    %4036 = vmatprep.subr.bf16.mxu0 0
    %4037 = vmatpush1.bf16.msra.mxu0 %v3985
    %4038 = vmatprep.subr.bf16.mxu0 0
    %4039 = vmatpush1.bf16.msra.mxu0 %v3984
    %4040 = vmatprep.subr.bf16.mxu0 0
    %4041 = vmatpush1.bf16.msra.mxu0 %v3983
    %4042 = vmatprep.subr.bf16.mxu0 0
    %4043 = vmatpush2.bf16.msra.mxu0 %v3998
    %4044 = vmatprep.subr.bf16.mxu0 0
    %4045 = vmatpush2.bf16.msra.mxu0 %v3997
    %4046 = vmatprep.subr.bf16.mxu0 0
    %4047 = vmatpush2.bf16.msra.mxu0 %v3996
    %4048 = vmatprep.subr.bf16.mxu0 0
    %4049 = vmatpush2.bf16.msra.mxu0 %v3995
    %4050 = vmatprep.subr.bf16.mxu0 0
    %4051 = vmatpush2.bf16.msra.mxu0 %v3994
    %4052 = vmatprep.subr.bf16.mxu0 0
    %4053 = vmatpush2.bf16.msra.mxu0 %v3993
    %4054 = vmatprep.subr.bf16.mxu0 0
    %4055 = vmatpush2.bf16.msra.mxu0 %v3992
    %4056 = vmatprep.subr.bf16.mxu0 0
    %4057 = vmatpush2.bf16.msra.mxu0 %v3991
    %4058 = vmatprep.mubr.bf16.mxu0 %v3893
    %4059 = vmatmul.mubr.bf16.gmra.mxu0 %v3886
    %v4060 = vpop.f32.mrf.mxu0
    %v4061 = vadd.f32 0.0, %v4060
    %v4062 = vpop.f32.mrf.mxu0
    %v4063 = vpop.f32.mrf.mxu0
    %v4064 = vpop.f32.mrf.mxu0
    %4065 = vdwg.mxu0
    %4066 = vmatprep.subr.bf16.mxu0 0
    %4067 = vmatpush1.bf16.msra.mxu0 0
    %4068 = vmatprep.subr.bf16.mxu0 0
    %4069 = vmatpush1.bf16.msra.mxu0 0
    %4070 = vmatprep.subr.bf16.mxu0 0
    %4071 = vmatpush1.bf16.msra.mxu0 0
    %4072 = vmatprep.subr.bf16.mxu0 0
    %4073 = vmatpush1.bf16.msra.mxu0 0
    %4074 = vmatprep.subr.bf16.mxu0 0
    %4075 = vmatpush1.bf16.msra.mxu0 %v4002
    %4076 = vmatprep.subr.bf16.mxu0 0
    %4077 = vmatpush1.bf16.msra.mxu0 %v4001
    %4078 = vmatprep.subr.bf16.mxu0 0
    %4079 = vmatpush1.bf16.msra.mxu0 %v4000
    %4080 = vmatprep.subr.bf16.mxu0 0
    %4081 = vmatpush1.bf16.msra.mxu0 %v3999
    %4082 = vmatprep.subr.bf16.mxu0 0
    %4083 = vmatpush2.bf16.msra.mxu0 0
    %4084 = vmatprep.subr.bf16.mxu0 0
    %4085 = vmatpush2.bf16.msra.mxu0 0
    %4086 = vmatprep.subr.bf16.mxu0 0
    %4087 = vmatpush2.bf16.msra.mxu0 0
    %4088 = vmatprep.subr.bf16.mxu0 0
    %4089 = vmatpush2.bf16.msra.mxu0 0
    %4090 = vmatprep.subr.bf16.mxu0 0
    %4091 = vmatpush2.bf16.msra.mxu0 0
    %4092 = vmatprep.subr.bf16.mxu0 0
    %4093 = vmatpush2.bf16.msra.mxu0 0
    %4094 = vmatprep.subr.bf16.mxu0 0
    %4095 = vmatpush2.bf16.msra.mxu0 0
    %4096 = vmatprep.subr.bf16.mxu0 0
    %4097 = vmatpush2.bf16.msra.mxu0 0
    %4098 = vmatprep.mubr.bf16.mxu0 0
    %4099 = vmatmul.mubr.bf16.gmra.mxu0 %v4024
    %v4100 = vpop.f32.mrf.mxu0
    %v4101 = vadd.f32 %v4061, %v4100
    %v4102 = vpop.f32.mrf.mxu0
    %v4103 = vpop.f32.mrf.mxu0
    %v4104 = vpop.f32.mrf.mxu0
    %4105 = vdwg.mxu0
    %v4106 = vpack.c.b16 %v3871, %v3871
    %v4107 = vpack.c.b16 %v3872, %v3872
    %v4108 = vpack.c.b16 %v3873, %v3873
    %v4151 = vunpack.c.l.b16 %v3785
    %v4152 = vunpack.c.l.b16 %v3786
    %v4153 = vunpack.c.l.b16 %v3787
    %v4154 = vunpack.c.l.b16 %v3788
    %v4155 = vunpack.c.l.b16 %v3789
    %v4156 = vunpack.c.l.b16 %v3790
    %v4157 = vunpack.c.l.b16 %v3791
    %v4158 = vunpack.c.l.b16 %v3792
    %v4159 = vunpack.c.l.b16 %v3793
    %v4160 = vunpack.c.l.b16 %v3794
    %v4161 = vunpack.c.l.b16 %v3795
    %v4162 = vunpack.c.l.b16 %v3796
    %v4163 = vunpack.c.l.b16 %v3797
    %v4164 = vunpack.c.l.b16 %v3798
    %v4165 = vunpack.c.l.b16 %v3799
    %v4166 = vunpack.c.l.b16 %v3800
    %v4167 = vunpack.c.l.b16 %v3801
    %v4168 = vunpack.c.l.b16 %v3802
    %v4169 = vunpack.c.l.b16 %v3803
    %v4170 = vunpack.c.l.b16 %v3804
    %v4171 = vunpack.c.l.b16 %v3805
    %v4172 = vunpack.c.l.b16 %v3806
    %v4173 = vunpack.c.l.b16 %v3807
    %v4174 = vunpack.c.l.b16 %v3808
    %v4175 = vunpack.c.l.b16 %v3809
    %v4176 = vunpack.c.l.b16 %v3810
    %v4177 = vunpack.c.l.b16 %v3811
    %v4178 = vunpack.c.l.b16 %v3812
    %v4179 = vunpack.c.l.b16 %v3813
    %v4180 = vunpack.c.l.b16 %v3814
    %v4181 = vunpack.c.l.b16 %v3815
    %v4182 = vunpack.c.l.b16 %v3816
    %v4183 = vunpack.c.l.b16 %v3817
    %v4184 = vunpack.c.l.b16 %v3818
    %v4185 = vunpack.c.l.b16 %v3819
    %v4186 = vunpack.c.l.b16 %v3820
    %v4187 = vunpack.c.l.b16 %v3821
    %v4188 = vunpack.c.l.b16 %v3822
    %v4189 = vunpack.c.l.b16 %v3823
    %v4190 = vunpack.c.l.b16 %v3824
    %v4191 = vpack.c.b16 %v4152, %v4151
    %v4192 = vpack.c.b16 %v4154, %v4153
    %v4193 = vpack.c.b16 %v4156, %v4155
    %v4194 = vpack.c.b16 %v4158, %v4157
    %v4195 = vpack.c.b16 %v4160, %v4159
    %v4196 = vpack.c.b16 %v4162, %v4161
    %v4197 = vpack.c.b16 %v4164, %v4163
    %v4198 = vpack.c.b16 %v4166, %v4165
    %v4199 = vpack.c.b16 %v4168, %v4167
    %v4200 = vpack.c.b16 %v4170, %v4169
    %v4201 = vpack.c.b16 %v4172, %v4171
    %v4202 = vpack.c.b16 %v4174, %v4173
    %v4203 = vpack.c.b16 %v4176, %v4175
    %v4204 = vpack.c.b16 %v4178, %v4177
    %v4205 = vpack.c.b16 %v4180, %v4179
    %v4206 = vpack.c.b16 %v4182, %v4181
    %v4207 = vpack.c.b16 %v4184, %v4183
    %v4208 = vpack.c.b16 %v4186, %v4185
    %v4209 = vpack.c.b16 %v4188, %v4187
    %v4210 = vpack.c.b16 %v4190, %v4189
    %v4232 = vsel %vm1786, %v4108, 0
    %4234 = vmatprep.subr.bf16.mxu0 0
    %4235 = vmatpush1.bf16.msra.mxu0 %v4198
    %4236 = vmatprep.subr.bf16.mxu0 0
    %4237 = vmatpush1.bf16.msra.mxu0 %v4197
    %4238 = vmatprep.subr.bf16.mxu0 0
    %4239 = vmatpush1.bf16.msra.mxu0 %v4196
    %4240 = vmatprep.subr.bf16.mxu0 0
    %4241 = vmatpush1.bf16.msra.mxu0 %v4195
    %4242 = vmatprep.subr.bf16.mxu0 0
    %4243 = vmatpush1.bf16.msra.mxu0 %v4194
    %4244 = vmatprep.subr.bf16.mxu0 0
    %4245 = vmatpush1.bf16.msra.mxu0 %v4193
    %4246 = vmatprep.subr.bf16.mxu0 0
    %4247 = vmatpush1.bf16.msra.mxu0 %v4192
    %4248 = vmatprep.subr.bf16.mxu0 0
    %4249 = vmatpush1.bf16.msra.mxu0 %v4191
    %4250 = vmatprep.subr.bf16.mxu0 0
    %4251 = vmatpush2.bf16.msra.mxu0 %v4206
    %4252 = vmatprep.subr.bf16.mxu0 0
    %4253 = vmatpush2.bf16.msra.mxu0 %v4205
    %4254 = vmatprep.subr.bf16.mxu0 0
    %4255 = vmatpush2.bf16.msra.mxu0 %v4204
    %4256 = vmatprep.subr.bf16.mxu0 0
    %4257 = vmatpush2.bf16.msra.mxu0 %v4203
    %4258 = vmatprep.subr.bf16.mxu0 0
    %4259 = vmatpush2.bf16.msra.mxu0 %v4202
    %4260 = vmatprep.subr.bf16.mxu0 0
    %4261 = vmatpush2.bf16.msra.mxu0 %v4201
    %4262 = vmatprep.subr.bf16.mxu0 0
    %4263 = vmatpush2.bf16.msra.mxu0 %v4200
    %4264 = vmatprep.subr.bf16.mxu0 0
    %4265 = vmatpush2.bf16.msra.mxu0 %v4199
    %4266 = vmatprep.mubr.bf16.mxu0 %v4107
    %4267 = vmatmul.mubr.bf16.gmra.mxu0 %v4106
    %v4268 = vpop.f32.mrf.mxu0
    %v4269 = vadd.f32 %v4101, %v4268
    %v4270 = vpop.f32.mrf.mxu0
    %v4271 = vpop.f32.mrf.mxu0
    %v4272 = vpop.f32.mrf.mxu0
    %4273 = vdwg.mxu0
    %4274 = vmatprep.subr.bf16.mxu0 0
    %4275 = vmatpush1.bf16.msra.mxu0 0
    %4276 = vmatprep.subr.bf16.mxu0 0
    %4277 = vmatpush1.bf16.msra.mxu0 0
    %4278 = vmatprep.subr.bf16.mxu0 0
    %4279 = vmatpush1.bf16.msra.mxu0 0
    %4280 = vmatprep.subr.bf16.mxu0 0
    %4281 = vmatpush1.bf16.msra.mxu0 0
    %4282 = vmatprep.subr.bf16.mxu0 0
    %4283 = vmatpush1.bf16.msra.mxu0 %v4210
    %4284 = vmatprep.subr.bf16.mxu0 0
    %4285 = vmatpush1.bf16.msra.mxu0 %v4209
    %4286 = vmatprep.subr.bf16.mxu0 0
    %4287 = vmatpush1.bf16.msra.mxu0 %v4208
    %4288 = vmatprep.subr.bf16.mxu0 0
    %4289 = vmatpush1.bf16.msra.mxu0 %v4207
    %4290 = vmatprep.subr.bf16.mxu0 0
    %4291 = vmatpush2.bf16.msra.mxu0 0
    %4292 = vmatprep.subr.bf16.mxu0 0
    %4293 = vmatpush2.bf16.msra.mxu0 0
    %4294 = vmatprep.subr.bf16.mxu0 0
    %4295 = vmatpush2.bf16.msra.mxu0 0
    %4296 = vmatprep.subr.bf16.mxu0 0
    %4297 = vmatpush2.bf16.msra.mxu0 0
    %4298 = vmatprep.subr.bf16.mxu0 0
    %4299 = vmatpush2.bf16.msra.mxu0 0
    %4300 = vmatprep.subr.bf16.mxu0 0
    %4301 = vmatpush2.bf16.msra.mxu0 0
    %4302 = vmatprep.subr.bf16.mxu0 0
    %4303 = vmatpush2.bf16.msra.mxu0 0
    %4304 = vmatprep.subr.bf16.mxu0 0
    %4305 = vmatpush2.bf16.msra.mxu0 0
    %4306 = vmatprep.mubr.bf16.mxu0 0
    %4307 = vmatmul.mubr.bf16.gmra.mxu0 %v4232
    %v4308 = vpop.f32.mrf.mxu0
    %v4309 = vadd.f32 %v4269, %v4308
    %v4310 = vpop.f32.mrf.mxu0
    %v4311 = vpop.f32.mrf.mxu0
    %v4312 = vpop.f32.mrf.mxu0
    %4313 = vdwg.mxu0
    %v4314 = vld [vmem:[#allocation5] sm:$0xee]
    %v4315 = vld [vmem:[#allocation5 + $0x8] sm:$0xe]
    %v4316 = vld [vmem:[%s2080] sm:$0xf]
    %v4317 = vld [vmem:[%s2080 + $0x4] sm:$0xf]
    %v4318 = vld [vmem:[%s2080 + $0x8] sm:$0xf]
    %v4319 = vld [vmem:[%s2080 + $0xc] sm:$0xf]
    %v4320 = vld [vmem:[%s2080 + $0x10] sm:$0xf]
    %v4321 = vld [vmem:[%s2080 + $0x14] sm:$0xf]
    %v4322 = vld [vmem:[%s2080 + $0x18] sm:$0xf]
    %v4323 = vld [vmem:[%s2080 + $0x1c] sm:$0xf]
    %v4324 = vld [vmem:[%s2080 + $0x20] sm:$0xf]
    %v4325 = vld [vmem:[%s2080 + $0x24] sm:$0xf]
    %v4326 = vld [vmem:[%s2080 + $0x28] sm:$0xf]
    %v4327 = vld [vmem:[%s2080 + $0x2c] sm:$0xf]
    %v4328 = vld [vmem:[%s2080 + $0x30] sm:$0xf]
    %v4329 = vld [vmem:[%s2080 + $0x34] sm:$0xf]
    %v4330 = vld [vmem:[%s2080 + $0x38] sm:$0xf]
    %v4331 = vld [vmem:[%s2080 + $0x3c] sm:$0xf]
    %v4332 = vld [vmem:[%s2080 + $0x40] sm:$0xf]
    %v4333 = vld [vmem:[%s2080 + $0x44] sm:$0xf]
    %v4334 = vld [vmem:[%s2080 + $0x48] sm:$0xf]
    %v4335 = vld [vmem:[%s2080 + $0x4c] sm:$0xf]
    %v4336 = vld [vmem:[%s2080 + $0x50] sm:$0xf]
    %v4337 = vld [vmem:[%s2080 + $0x54] sm:$0xf]
    %v4338 = vld [vmem:[%s2080 + $0x58] sm:$0xf]
    %v4339 = vld [vmem:[%s2080 + $0x5c] sm:$0xf]
    %v4340 = vld [vmem:[%s2080 + $0x60] sm:$0xf]
    %v4341 = vld [vmem:[%s2080 + $0x64] sm:$0xf]
    %v4342 = vld [vmem:[%s2080 + $0x68] sm:$0xf]
    %v4343 = vld [vmem:[%s2080 + $0x6c] sm:$0xf]
    %v4344 = vld [vmem:[%s2080 + $0x70] sm:$0xf]
    %v4345 = vld [vmem:[%s2080 + $0x74] sm:$0xf]
    %v4346 = vld [vmem:[%s2080 + $0x78] sm:$0xf]
    %v4347 = vld [vmem:[%s2080 + $0x7c] sm:$0xf]
    %v4348 = vld [vmem:[%s2080 + $0x80] sm:$0xf]
    %v4349 = vld [vmem:[%s2080 + $0x84] sm:$0xf]
    %v4350 = vld [vmem:[%s2080 + $0x88] sm:$0xf]
    %v4351 = vld [vmem:[%s2080 + $0x8c] sm:$0xf]
    %v4352 = vld [vmem:[%s2080 + $0x90] sm:$0xf]
    %v4353 = vld [vmem:[%s2080 + $0x94] sm:$0xf]
    %v4354 = vld [vmem:[%s2080 + $0x98] sm:$0xf]
    %v4355 = vld [vmem:[%s2080 + $0x9c] sm:$0xf]
    %v4358 = vunpack.c.l.b16 %v4314
    %v4359 = vunpack.c.h.b16 %v4314
    %v4360 = vunpack.c.l.b16 %v4315
    %v4361 = vpack.c.b16 %v3874, %v4358
    %v4362 = vpack.c.b16 %v3875, %v4359
    %v4363 = vpack.c.b16 %v3876, %v4360
    %v4364 = vrot.slane %v4361, 1
    %v4365 = vrot.slane %v4362, 1
    %v4366 = vrot.slane %v4363, 1
    %v4409 = vunpack.c.l.b16 %v4316
    %v4410 = vunpack.c.l.b16 %v4317
    %v4411 = vunpack.c.l.b16 %v4318
    %v4412 = vunpack.c.l.b16 %v4319
    %v4413 = vunpack.c.l.b16 %v4320
    %v4414 = vunpack.c.l.b16 %v4321
    %v4415 = vunpack.c.l.b16 %v4322
    %v4416 = vunpack.c.l.b16 %v4323
    %v4417 = vunpack.c.l.b16 %v4324
    %v4418 = vunpack.c.l.b16 %v4325
    %v4419 = vunpack.c.l.b16 %v4326
    %v4420 = vunpack.c.l.b16 %v4327
    %v4421 = vunpack.c.l.b16 %v4328
    %v4422 = vunpack.c.l.b16 %v4329
    %v4423 = vunpack.c.l.b16 %v4330
    %v4424 = vunpack.c.l.b16 %v4331
    %v4425 = vunpack.c.l.b16 %v4332
    %v4426 = vunpack.c.l.b16 %v4333
    %v4427 = vunpack.c.l.b16 %v4334
    %v4428 = vunpack.c.l.b16 %v4335
    %v4429 = vunpack.c.l.b16 %v4336
    %v4430 = vunpack.c.l.b16 %v4337
    %v4431 = vunpack.c.l.b16 %v4338
    %v4432 = vunpack.c.l.b16 %v4339
    %v4433 = vunpack.c.l.b16 %v4340
    %v4434 = vunpack.c.l.b16 %v4341
    %v4435 = vunpack.c.l.b16 %v4342
    %v4436 = vunpack.c.l.b16 %v4343
    %v4437 = vunpack.c.l.b16 %v4344
    %v4438 = vunpack.c.l.b16 %v4345
    %v4439 = vunpack.c.l.b16 %v4346
    %v4440 = vunpack.c.l.b16 %v4347
    %v4441 = vunpack.c.l.b16 %v4348
    %v4442 = vunpack.c.l.b16 %v4349
    %v4443 = vunpack.c.l.b16 %v4350
    %v4444 = vunpack.c.l.b16 %v4351
    %v4445 = vunpack.c.l.b16 %v4352
    %v4446 = vunpack.c.l.b16 %v4353
    %v4447 = vunpack.c.l.b16 %v4354
    %v4448 = vunpack.c.l.b16 %v4355
    %v4449 = vpack.c.b16 %v4410, %v4409
    %v4450 = vpack.c.b16 %v4412, %v4411
    %v4451 = vpack.c.b16 %v4414, %v4413
    %v4452 = vpack.c.b16 %v4416, %v4415
    %v4453 = vpack.c.b16 %v4418, %v4417
    %v4454 = vpack.c.b16 %v4420, %v4419
    %v4455 = vpack.c.b16 %v4422, %v4421
    %v4456 = vpack.c.b16 %v4424, %v4423
    %v4457 = vpack.c.b16 %v4426, %v4425
    %v4458 = vpack.c.b16 %v4428, %v4427
    %v4459 = vpack.c.b16 %v4430, %v4429
    %v4460 = vpack.c.b16 %v4432, %v4431
    %v4461 = vpack.c.b16 %v4434, %v4433
    %v4462 = vpack.c.b16 %v4436, %v4435
    %v4463 = vpack.c.b16 %v4438, %v4437
    %v4464 = vpack.c.b16 %v4440, %v4439
    %v4465 = vpack.c.b16 %v4442, %v4441
    %v4466 = vpack.c.b16 %v4444, %v4443
    %v4467 = vpack.c.b16 %v4446, %v4445
    %v4468 = vpack.c.b16 %v4448, %v4447
    %v4490 = vsel %vm1786, %v4366, 0
    %4492 = vmatprep.subr.bf16.mxu0 0
    %4493 = vmatpush1.bf16.msra.mxu0 %v4456
    %4494 = vmatprep.subr.bf16.mxu0 0
    %4495 = vmatpush1.bf16.msra.mxu0 %v4455
    %4496 = vmatprep.subr.bf16.mxu0 0
    %4497 = vmatpush1.bf16.msra.mxu0 %v4454
    %4498 = vmatprep.subr.bf16.mxu0 0
    %4499 = vmatpush1.bf16.msra.mxu0 %v4453
    %4500 = vmatprep.subr.bf16.mxu0 0
    %4501 = vmatpush1.bf16.msra.mxu0 %v4452
    %4502 = vmatprep.subr.bf16.mxu0 0
    %4503 = vmatpush1.bf16.msra.mxu0 %v4451
    %4504 = vmatprep.subr.bf16.mxu0 0
    %4505 = vmatpush1.bf16.msra.mxu0 %v4450
    %4506 = vmatprep.subr.bf16.mxu0 0
    %4507 = vmatpush1.bf16.msra.mxu0 %v4449
    %4508 = vmatprep.subr.bf16.mxu0 0
    %4509 = vmatpush2.bf16.msra.mxu0 %v4464
    %4510 = vmatprep.subr.bf16.mxu0 0
    %4511 = vmatpush2.bf16.msra.mxu0 %v4463
    %4512 = vmatprep.subr.bf16.mxu0 0
    %4513 = vmatpush2.bf16.msra.mxu0 %v4462
    %4514 = vmatprep.subr.bf16.mxu0 0
    %4515 = vmatpush2.bf16.msra.mxu0 %v4461
    %4516 = vmatprep.subr.bf16.mxu0 0
    %4517 = vmatpush2.bf16.msra.mxu0 %v4460
    %4518 = vmatprep.subr.bf16.mxu0 0
    %4519 = vmatpush2.bf16.msra.mxu0 %v4459
    %4520 = vmatprep.subr.bf16.mxu0 0
    %4521 = vmatpush2.bf16.msra.mxu0 %v4458
    %4522 = vmatprep.subr.bf16.mxu0 0
    %4523 = vmatpush2.bf16.msra.mxu0 %v4457
    %4524 = vmatprep.mubr.bf16.mxu0 %v4365
    %4525 = vmatmul.mubr.bf16.gmra.mxu0 %v4364
    %v4526 = vpop.f32.mrf.mxu0
    %v4527 = vadd.f32 0.0, %v4526
    %v4528 = vpop.f32.mrf.mxu0
    %v4529 = vpop.f32.mrf.mxu0
    %v4530 = vpop.f32.mrf.mxu0
    %4531 = vdwg.mxu0
    %4532 = vmatprep.subr.bf16.mxu0 0
    %4533 = vmatpush1.bf16.msra.mxu0 0
    %4534 = vmatprep.subr.bf16.mxu0 0
    %4535 = vmatpush1.bf16.msra.mxu0 0
    %4536 = vmatprep.subr.bf16.mxu0 0
    %4537 = vmatpush1.bf16.msra.mxu0 0
    %4538 = vmatprep.subr.bf16.mxu0 0
    %4539 = vmatpush1.bf16.msra.mxu0 0
    %4540 = vmatprep.subr.bf16.mxu0 0
    %4541 = vmatpush1.bf16.msra.mxu0 %v4468
    %4542 = vmatprep.subr.bf16.mxu0 0
    %4543 = vmatpush1.bf16.msra.mxu0 %v4467
    %4544 = vmatprep.subr.bf16.mxu0 0
    %4545 = vmatpush1.bf16.msra.mxu0 %v4466
    %4546 = vmatprep.subr.bf16.mxu0 0
    %4547 = vmatpush1.bf16.msra.mxu0 %v4465
    %4548 = vmatprep.subr.bf16.mxu0 0
    %4549 = vmatpush2.bf16.msra.mxu0 0
    %4550 = vmatprep.subr.bf16.mxu0 0
    %4551 = vmatpush2.bf16.msra.mxu0 0
    %4552 = vmatprep.subr.bf16.mxu0 0
    %4553 = vmatpush2.bf16.msra.mxu0 0
    %4554 = vmatprep.subr.bf16.mxu0 0
    %4555 = vmatpush2.bf16.msra.mxu0 0
    %4556 = vmatprep.subr.bf16.mxu0 0
    %4557 = vmatpush2.bf16.msra.mxu0 0
    %4558 = vmatprep.subr.bf16.mxu0 0
    %4559 = vmatpush2.bf16.msra.mxu0 0
    %4560 = vmatprep.subr.bf16.mxu0 0
    %4561 = vmatpush2.bf16.msra.mxu0 0
    %4562 = vmatprep.subr.bf16.mxu0 0
    %4563 = vmatpush2.bf16.msra.mxu0 0
    %4564 = vmatprep.mubr.bf16.mxu0 0
    %4565 = vmatmul.mubr.bf16.gmra.mxu0 %v4490
    %v4566 = vpop.f32.mrf.mxu0
    %v4567 = vadd.f32 %v4527, %v4566
    %v4568 = vpop.f32.mrf.mxu0
    %v4569 = vpop.f32.mrf.mxu0
    %v4570 = vpop.f32.mrf.mxu0
    %4571 = vdwg.mxu0
    %v4572 = vadd.f32 %v4309, %v4567
    %v4573 = vld [vmem:[%s10] sm:$0x1]
    %v4575 = vlaneseq
    %v4576 = vshrl.u32 %v4575, 7
    %v4577 = vsub.s32 0, %v4576
    %v4578 = vrot.slane %v4573, %v4577
    %v4580 = vadd.f32 %v4572, %v4578
    %v4581 = vmax.f32 %v4580, 0.0
    %s4582 = scalar_lea.vmem [#allocation6], 8
    %4583 = vst.msk [vmem:[%s4582] sm:$0xff] %vm1107, %v4581
    // Predicated region
    $region46: #{tpu_custom_call.1} parent=1 // pred_check
      _
    $region47: #{tpu_custom_call.1} parent=1 // pred_check_branch
      %4585 = sbr.rel (0) target = $region49
    $region48: #{tpu_custom_call.1} parent=1 // pred_region
      %s4587 = ssub.s32 256, 256
      %4588 = vsyncadd [#allocation7], %s4587
      %s4589 = sshll.u32 [#allocation6], 4
      %s4590 = int_to_ptr.vmem [resolvable:$true] %s4589
      %4595 = dma.vmem_to_hbm [thread:$0]  %s4590, 256, %s11, [#allocation7], 128, 128, 8
    $region49: #{tpu_custom_call.1} parent=1 // pred_fallthru
      _
    // Predicated region
    $region50: #{tpu_custom_call.1} parent=1 // pred_check
      _
    $region51: #{tpu_custom_call.1} parent=1 // pred_check_branch
      %4597 = sbr.rel (0) target = $region53
    $region52: #{tpu_custom_call.1} parent=1 // pred_region
      %4598 = dma.done [#allocation7], 256
    $region53: #{tpu_custom_call.1} parent=1 // pred_fallthru
      _
    %4599 = vsyncpa [#allocation7], 1

</llo_original>
